<compile_context>
chip_gen: v7x
topology: tpu7x:2x2x1
jax: 0.10.0
libtpu: 0.0.40
codegen_flags: <defaults>
</compile_context>

<pallas_src>
import math
import functools

import jax
import jax.numpy as jnp
import numpy as np
from jax.experimental import pallas as pl
from jax.experimental.pallas import tpu as pltpu

NEG = -1e9
EPS = 1e-5  # nn.LayerNorm default


def _softmax_last(x):
    m = jnp.max(x, axis=-1, keepdims=True)
    e = jnp.exp(x - m)
    return e / jnp.sum(e, axis=-1, keepdims=True)


def _layernorm(x, gamma, beta):
    mu = jnp.mean(x, axis=-1, keepdims=True)
    var = jnp.mean(jnp.square(x - mu), axis=-1, keepdims=True)
    return (x - mu) * jax.lax.rsqrt(var + EPS) * gamma + beta


# ---------------------------------------------------------------------------
# fused kernel: depth encoder layers -> mean over seq -> final LayerNorm
# ---------------------------------------------------------------------------
def geo_encoder_kernel(x_ref, rmat_ref, kval_ref,
                       wq_ref, wk_ref, wv_ref, wfc_ref,
                       g1_ref, b1_ref, g2_ref, b2_ref,
                       w1_ref, bb1_ref, w2_ref, bb2_ref,
                       gf_ref, bf_ref,
                       o_ref, *, depth, n_heads, causal):
    Bb, S, F = x_ref.shape
    d = F // n_heads

    x2 = x_ref[...].reshape(Bb * S, F)                        # (Bb*S, F) f32 residual stream

    # ---- masks + relation-matrix softmax: layer-invariant, computed once ----
    invalid = jnp.broadcast_to(kval_ref[...] == 0.0, (Bb, S, S))   # key-padding
    if causal:
        row = jax.lax.broadcasted_iota(jnp.int32, (S, S), 0)
        col = jax.lax.broadcasted_iota(jnp.int32, (S, S), 1)
        invalid = jnp.logical_or(invalid, (col > row)[None])
    r_soft = _softmax_last(jnp.where(invalid, NEG, rmat_ref[...]))  # (Bb, S, S) f32

    for l in range(depth):                                    # static unroll (depth small)
        # ---- sublayer 0: pre-LN multi-head attention with relation matrix ----
        wq_l = wq_ref[l]                                      # (H, F, d) bf16, scale folded
        wk_l = wk_ref[l]
        wv_l = wv_ref[l]
        wfc_l = wfc_ref[l]                                    # (H, d, F) bf16
        xn = _layernorm(x2, g1_ref[l], b1_ref[l]).astype(jnp.bfloat16)
        attn = jnp.zeros((Bb * S, F), jnp.float32)
        for h in range(n_heads):                              # static unroll over heads
            q = jnp.dot(xn, wq_l[h], preferred_element_type=jnp.float32)   # (Bb*S, d)
            k = jnp.dot(xn, wk_l[h], preferred_element_type=jnp.float32)
            v = jnp.dot(xn, wv_l[h], preferred_element_type=jnp.float32)
            q3 = q.reshape(Bb, S, d).astype(jnp.bfloat16)
            k3 = k.reshape(Bb, S, d).astype(jnp.bfloat16)
            v3 = v.reshape(Bb, S, d).astype(jnp.bfloat16)
            s = jnp.einsum('bqd,bkd->bqk', q3, k3,
                           preferred_element_type=jnp.float32)              # (Bb, S, S)
            s = jnp.where(invalid, NEG, s + r_soft)           # hard mask = reference
            p = _softmax_last(s).astype(jnp.bfloat16)
            ctx = jnp.einsum('bqk,bkd->bqd', p, v3,
                             preferred_element_type=jnp.float32)            # (Bb, S, d)
            attn = attn + jnp.dot(ctx.reshape(Bb * S, d).astype(jnp.bfloat16),
                                  wfc_l[h], preferred_element_type=jnp.float32)
        x2 = x2 + attn                                        # fc has no bias

        # ---- sublayer 1: pre-LN FFN ----
        xn2 = _layernorm(x2, g2_ref[l], b2_ref[l]).astype(jnp.bfloat16)
        hid = jnp.dot(xn2, w1_ref[l], preferred_element_type=jnp.float32) + bb1_ref[l]
        hid = jnp.maximum(hid, 0.0).astype(jnp.bfloat16)
        ffn = jnp.dot(hid, w2_ref[l], preferred_element_type=jnp.float32) + bb2_ref[l]
        x2 = x2 + ffn

    # ---- epilogue: mean over the sequence dim + final LayerNorm (no extra call) ----
    pooled = jnp.mean(x2.reshape(Bb, S, F), axis=1)           # (Bb, F)  == mean(dim=-2)
    out = _layernorm(pooled, gf_ref[...], bf_ref[...])
    o_ref[...] = out.reshape(Bb, 1, F)


def geo_encoder(x, r_mat, key_valid, stacked, norm_gamma, norm_beta,
                *, n_heads, causal=True, block_b=None):
    """GeoEncoder forward: depth encoder layers -> mean over seq -> LayerNorm."""
    B, S, F = x.shape
    depth = stacked["wq"].shape[0]
    H = n_heads
    d = F // H
    EF = stacked["bb1"].shape[-1]
    if block_b is None:
        block_b = B   # single-TC v5e/v6e: one grid step.  On v7x use block_b=1 (2 TCs).
    assert B % block_b == 0
    kval3 = key_valid.reshape(B, 1, S)

    kernel = functools.partial(geo_encoder_kernel,
                               depth=depth, n_heads=n_heads, causal=causal)
    per_b = lambda b: (b, 0, 0)
    c2 = lambda b: (0, 0)
    c3 = lambda b: (0, 0, 0)
    c4 = lambda b: (0, 0, 0, 0)

    out = pl.pallas_call(
        kernel,
        out_shape=jax.ShapeDtypeStruct((B, 1, F), jnp.float32),
        grid=(B // block_b,),
        in_specs=[
            pl.BlockSpec((block_b, S, F), per_b),     # x
            pl.BlockSpec((block_b, S, S), per_b),     # relation matrix
            pl.BlockSpec((block_b, 1, S), per_b),     # key-validity vector
            pl.BlockSpec((depth, H, F, d), c4),       # wq (bf16, 1/sqrt(F) folded)
            pl.BlockSpec((depth, H, F, d), c4),       # wk (bf16)
            pl.BlockSpec((depth, H, F, d), c4),       # wv (bf16)
            pl.BlockSpec((depth, H, d, F), c4),       # per-head output-proj rows (bf16)
            pl.BlockSpec((depth, 1, F), c3),          # ln1 gamma
            pl.BlockSpec((depth, 1, F), c3),          # ln1 beta
            pl.BlockSpec((depth, 1, F), c3),          # ln2 gamma
            pl.BlockSpec((depth, 1, F), c3),          # ln2 beta
            pl.BlockSpec((depth, F, EF), c3),         # ffn w1 (bf16)
            pl.BlockSpec((depth, 1, EF), c3),         # ffn b1
            pl.BlockSpec((depth, EF, F), c3),         # ffn w2 (bf16)
            pl.BlockSpec((depth, 1, F), c3),          # ffn b2
            pl.BlockSpec((1, F), c2),                 # final norm gamma
            pl.BlockSpec((1, F), c2),                 # final norm beta
        ],
        out_specs=pl.BlockSpec((block_b, 1, F), per_b),
        compiler_params=pltpu.CompilerParams(
            dimension_semantics=("parallel",),
        ),
    )(x, r_mat, kval3,
      stacked["wq"], stacked["wk"], stacked["wv"], stacked["wfc"],
      stacked["g1"], stacked["b1"], stacked["g2"], stacked["b2"],
      stacked["w1"], stacked["bb1"], stacked["w2"], stacked["bb2"],
      norm_gamma, norm_beta)
    return out.reshape(B, F)


# ---------------------------------------------------------------------------
# parameters (f32 masters for the reference) + kernel-layout stacking
# ---------------------------------------------------------------------------
def make_layer_params(key, F, n_heads, exp_factor):
    d = F // n_heads
    EF = exp_factor * F
    ks = jax.random.split(key, 12)
    scale = 0.05
    return dict(
        wq=jax.random.normal(ks[0], (n_heads, F, d), jnp.float32) * scale,
        wk=jax.random.normal(ks[1], (n_heads, F, d), jnp.float32) * scale,
        wv=jax.random.normal(ks[2], (n_heads, F, d), jnp.float32) * scale,
        wfc_full=jax.random.normal(ks[3], (n_heads * d, F), jnp.float32) * scale,  # rows j*H+h
        w1=jax.random.normal(ks[4], (F, EF), jnp.float32) * scale,
        bb1=jax.random.normal(ks[5], (1, EF), jnp.float32) * scale,
        w2=jax.random.normal(ks[6], (EF, F), jnp.float32) * scale,
        bb2=jax.random.normal(ks[7], (1, F), jnp.float32) * scale,
        g1=1.0 + 0.1 * jax.random.normal(ks[8], (1, F), jnp.float32),
        b1=0.1 * jax.random.normal(ks[9], (1, F), jnp.float32),
        g2=1.0 + 0.1 * jax.random.normal(ks[10], (1, F), jnp.float32),
        b2=0.1 * jax.random.normal(ks[11], (1, F), jnp.float32),
    )


def stack_layer_params(layer_params, *, n_heads):
    """Stack per-layer params along a leading depth axis in the kernel layout."""
    F = layer_params[0]["wq"].shape[1]
    d = F // n_heads
    inv_scale = 1.0 / math.sqrt(F)                          # scale_term = sqrt(features)
    stk = lambda name: jnp.stack([p[name] for p in layer_params], axis=0)
    # torch: stack(heads, dim=-1).flatten(2) -> activation column j*H + h; re-slice the
    # fc weight rows per head so a per-head (d, F) contraction hits the same rows.
    wfc = jnp.stack([p["wfc_full"].reshape(d, n_heads, F).transpose(1, 0, 2)
                     for p in layer_params], axis=0)        # (D, H, d, F)
    return dict(
        wq=(stk("wq") * inv_scale).astype(jnp.bfloat16),    # (D, H, F, d)
        wk=stk("wk").astype(jnp.bfloat16),
        wv=stk("wv").astype(jnp.bfloat16),
        wfc=wfc.astype(jnp.bfloat16),
        g1=stk("g1"), b1=stk("b1"), g2=stk("g2"), b2=stk("b2"),   # (D, 1, F) f32
        w1=stk("w1").astype(jnp.bfloat16), bb1=stk("bb1"),
        w2=stk("w2").astype(jnp.bfloat16), bb2=stk("bb2"),
    )


# ---------------------------------------------------------------------------
# pure-JAX reference (faithful PyTorch transcription, f32, eval mode)
# ---------------------------------------------------------------------------
def _ln_ref(v, g, b):
    mu = v.mean(-1, keepdims=True)
    var = ((v - mu) ** 2).mean(-1, keepdims=True)
    return (v - mu) / jnp.sqrt(var + EPS) * g + b


def reference_layer(x, r_mat, attn_mask, pad_mask, p, *, n_heads):
    B, S, F = x.shape
    xn = _ln_ref(x, p["g1"], p["b1"])
    heads = []
    for h in range(n_heads):
        q = xn @ p["wq"][h]
        k = xn @ p["wk"][h]
        v = xn @ p["wv"][h]
        scores = q @ jnp.swapaxes(k, -2, -1) / math.sqrt(F)
        r = jnp.where(pad_mask == 0.0, NEG, r_mat)
        r = jnp.where(attn_mask[None] == 0.0, NEG, r)
        r = jax.nn.softmax(r, axis=-1)
        scores = scores + r
        scores = jnp.where(pad_mask == 0.0, NEG, scores)
        scores = jnp.where(attn_mask[None] == 0.0, NEG, scores)
        prob = jax.nn.softmax(scores, axis=-1)
        heads.append(prob @ v)
    a = jnp.stack(heads, axis=-1).reshape(B, S, -1)     # torch stack(dim=-1).flatten(2)
    x1 = x + a @ p["wfc_full"]                          # fc has no bias
    xn2 = _ln_ref(x1, p["g2"], p["b2"])
    ffn = jax.nn.relu(xn2 @ p["w1"] + p["bb1"]) @ p["w2"] + p["bb2"]
    return x1 + ffn


def reference_geo_encoder(x, r_mat, attn_mask, pad_mask, layer_params, g, b, *, n_heads):
    for p in layer_params:
        x = reference_layer(x, r_mat, attn_mask, pad_mask, p, n_heads=n_heads)
    pooled = x.mean(axis=-2)
    return _ln_ref(pooled, g, b)


if __name__ == "__main__":
    B, S, F, H, EXP, DEPTH = 2, 8, 32, 4, 2, 2

    key = jax.random.PRNGKey(0)
    kx, kr, kp, kn = jax.random.split(key, 4)

    x = jax.random.normal(kx, (B, S, F), jnp.float32)
    r_mat = jax.random.normal(kr, (B, S, S), jnp.float32)

    # key-validity vector (batch 1 pads out the last 2 key positions) + causal masking
    key_valid = jnp.ones((B, S), jnp.float32).at[1, S - 2:].set(0.0)
    attn_mask = jnp.tril(jnp.ones((S, S), jnp.float32))               # reference-only
    pad_mask = jnp.broadcast_to(key_valid[:, None, :], (B, S, S))     # reference-only

    layer_params = [make_layer_params(k, F, H, EXP)
                    for k in jax.random.split(kp, DEPTH)]
    stacked = stack_layer_params(layer_params, n_heads=H)
    kn1, kn2 = jax.random.split(kn)
    norm_gamma = 1.0 + 0.1 * jax.random.normal(kn1, (1, F), jnp.float32)
    norm_beta = 0.1 * jax.random.normal(kn2, (1, F), jnp.float32)

    # block_b=None -> B (one grid step; right for single-TC v5e/v6e).  Use block_b=1 on v7x.
    out = geo_encoder(x, r_mat, key_valid, stacked, norm_gamma, norm_beta,
                      n_heads=H, causal=True, block_b=None)
    out = jax.block_until_ready(out)

    ref = reference_geo_encoder(x, r_mat, attn_mask, pad_mask, layer_params,
                                norm_gamma, norm_beta, n_heads=H)
    # bf16 MXU operands (f32 accumulation) => looser tolerance than pure f32
    np.testing.assert_allclose(np.asarray(out), np.asarray(ref), rtol=2e-2, atol=2e-2)

    print("KERNEL_OK")
</pallas_src>

<mosaic_0001>
module attributes {stable_mosaic.version = 11 : i64} {
  func.func @geo_encoder_kernel(%arg0: i32, %arg1: memref<2x8x32xf32, #tpu.memory_space<vmem>>, %arg2: memref<2x8x8xf32, #tpu.memory_space<vmem>>, %arg3: memref<2x1x8xf32, #tpu.memory_space<vmem>>, %arg4: memref<2x4x32x8xbf16, #tpu.memory_space<vmem>>, %arg5: memref<2x4x32x8xbf16, #tpu.memory_space<vmem>>, %arg6: memref<2x4x32x8xbf16, #tpu.memory_space<vmem>>, %arg7: memref<2x4x8x32xbf16, #tpu.memory_space<vmem>>, %arg8: memref<2x1x32xf32, #tpu.memory_space<vmem>>, %arg9: memref<2x1x32xf32, #tpu.memory_space<vmem>>, %arg10: memref<2x1x32xf32, #tpu.memory_space<vmem>>, %arg11: memref<2x1x32xf32, #tpu.memory_space<vmem>>, %arg12: memref<2x32x64xbf16, #tpu.memory_space<vmem>>, %arg13: memref<2x1x64xf32, #tpu.memory_space<vmem>>, %arg14: memref<2x64x32xbf16, #tpu.memory_space<vmem>>, %arg15: memref<2x1x32xf32, #tpu.memory_space<vmem>>, %arg16: memref<1x32xf32, #tpu.memory_space<vmem>>, %arg17: memref<1x32xf32, #tpu.memory_space<vmem>>, %arg18: memref<2x1x32xf32, #tpu.memory_space<vmem>>) attributes {dimension_semantics = [#tpu.dimension_semantics<parallel>], iteration_bounds = array<i64: 1>, scalar_prefetch = 0 : i64, scratch_operands = 0 : i64, tpu.core_type = #tpu.core_type<tc>, window_params = [{transform_indices = @transform_0, window_bounds = array<i64: 2, 8, 32>}, {transform_indices = @transform_1, window_bounds = array<i64: 2, 8, 8>}, {transform_indices = @transform_2, window_bounds = array<i64: 2, 1, 8>}, {pipeline_mode = #tpu.pipeline_mode<synchronous>, transform_indices = @transform_3, window_bounds = array<i64: 2, 4, 32, 8>}, {pipeline_mode = #tpu.pipeline_mode<synchronous>, transform_indices = @transform_4, window_bounds = array<i64: 2, 4, 32, 8>}, {pipeline_mode = #tpu.pipeline_mode<synchronous>, transform_indices = @transform_5, window_bounds = array<i64: 2, 4, 32, 8>}, {pipeline_mode = #tpu.pipeline_mode<synchronous>, transform_indices = @transform_6, window_bounds = array<i64: 2, 4, 8, 32>}, {pipeline_mode = #tpu.pipeline_mode<synchronous>, transform_indices = @transform_7, window_bounds = array<i64: 2, 1, 32>}, {pipeline_mode = #tpu.pipeline_mode<synchronous>, transform_indices = @transform_8, window_bounds = array<i64: 2, 1, 32>}, {pipeline_mode = #tpu.pipeline_mode<synchronous>, transform_indices = @transform_9, window_bounds = array<i64: 2, 1, 32>}, {pipeline_mode = #tpu.pipeline_mode<synchronous>, transform_indices = @transform_10, window_bounds = array<i64: 2, 1, 32>}, {pipeline_mode = #tpu.pipeline_mode<synchronous>, transform_indices = @transform_11, window_bounds = array<i64: 2, 32, 64>}, {pipeline_mode = #tpu.pipeline_mode<synchronous>, transform_indices = @transform_12, window_bounds = array<i64: 2, 1, 64>}, {pipeline_mode = #tpu.pipeline_mode<synchronous>, transform_indices = @transform_13, window_bounds = array<i64: 2, 64, 32>}, {pipeline_mode = #tpu.pipeline_mode<synchronous>, transform_indices = @transform_14, window_bounds = array<i64: 2, 1, 32>}, {pipeline_mode = #tpu.pipeline_mode<synchronous>, transform_indices = @transform_15, window_bounds = array<i64: 1, 32>}, {pipeline_mode = #tpu.pipeline_mode<synchronous>, transform_indices = @transform_16, window_bounds = array<i64: 1, 32>}, {transform_indices = @transform_17, window_bounds = array<i64: 2, 1, 32>}]} {
    %c0 = arith.constant 0 : index
    %c0_0 = arith.constant 0 : index
    %c0_1 = arith.constant 0 : index
    %0 = vector.load %arg1[%c0, %c0_0, %c0_1] : memref<2x8x32xf32, #tpu.memory_space<vmem>>, vector<2x8x32xf32>
    %1 = vector.shape_cast %0 : vector<2x8x32xf32> to vector<16x32xf32>
    %c0_2 = arith.constant 0 : index
    %c0_3 = arith.constant 0 : index
    %c0_4 = arith.constant 0 : index
    %2 = vector.load %arg3[%c0_2, %c0_3, %c0_4] : memref<2x1x8xf32, #tpu.memory_space<vmem>>, vector<2x1x8xf32>
    %cst = arith.constant 0.000000e+00 : f32
    %3 = vector.broadcast %cst : f32 to vector<2x1x8xf32>
    %4 = arith.cmpf oeq, %2, %3 : vector<2x1x8xf32>
    %5 = vector.shape_cast %4 : vector<2x1x8xi1> to vector<2x1x8xi1>
    %6 = vector.broadcast %5 : vector<2x1x8xi1> to vector<2x8x8xi1>
    %7 = tpu.iota {dimensions = array<i32: 0>} : vector<8x8xi32>
    %8 = tpu.iota {dimensions = array<i32: 1>} : vector<8x8xi32>
    %9 = arith.cmpi sgt, %8, %7 : vector<8x8xi32>
    %10 = vector.shape_cast %9 : vector<8x8xi1> to vector<1x8x8xi1>
    %11 = vector.broadcast %10 : vector<1x8x8xi1> to vector<2x8x8xi1>
    %12 = arith.ori %6, %11 : vector<2x8x8xi1>
    %c0_5 = arith.constant 0 : index
    %c0_6 = arith.constant 0 : index
    %c0_7 = arith.constant 0 : index
    %13 = vector.load %arg2[%c0_5, %c0_6, %c0_7] : memref<2x8x8xf32, #tpu.memory_space<vmem>>, vector<2x8x8xf32>
    %cst_8 = arith.constant -1.000000e+09 : f32
    %14 = vector.broadcast %cst_8 : f32 to vector<2x8x8xf32>
    %15 = arith.select %12, %14, %13 : vector<2x8x8xi1>, vector<2x8x8xf32>
    %cst_9 = arith.constant dense<0xFF800000> : vector<2x8xf32>
    %16 = vector.multi_reduction <maximumf>, %15, %cst_9 [2] : vector<2x8x8xf32> to vector<2x8xf32>
    %17 = vector.shape_cast %16 : vector<2x8xf32> to vector<2x8x1xf32>
    %18 = vector.broadcast %17 : vector<2x8x1xf32> to vector<2x8x8xf32>
    %19 = arith.subf %15, %18 : vector<2x8x8xf32>
    %20 = math.exp %19 : vector<2x8x8xf32>
    %cst_10 = arith.constant dense<0.000000e+00> : vector<2x8xf32>
    %21 = vector.multi_reduction <add>, %20, %cst_10 [2] : vector<2x8x8xf32> to vector<2x8xf32>
    %22 = vector.shape_cast %21 : vector<2x8xf32> to vector<2x8x1xf32>
    %23 = vector.broadcast %22 : vector<2x8x1xf32> to vector<2x8x8xf32>
    %24 = arith.divf %20, %23 : vector<2x8x8xf32>
    %c0_11 = arith.constant 0 : index
    %c0_12 = arith.constant 0 : index
    %c0_13 = arith.constant 0 : index
    %c0_14 = arith.constant 0 : index
    %25 = vector.load %arg4[%c0_11, %c0_12, %c0_13, %c0_14] : memref<2x4x32x8xbf16, #tpu.memory_space<vmem>>, vector<1x4x32x8xbf16>
    %26 = vector.shape_cast %25 : vector<1x4x32x8xbf16> to vector<4x32x8xbf16>
    %c0_15 = arith.constant 0 : index
    %c0_16 = arith.constant 0 : index
    %c0_17 = arith.constant 0 : index
    %c0_18 = arith.constant 0 : index
    %27 = vector.load %arg5[%c0_15, %c0_16, %c0_17, %c0_18] : memref<2x4x32x8xbf16, #tpu.memory_space<vmem>>, vector<1x4x32x8xbf16>
    %28 = vector.shape_cast %27 : vector<1x4x32x8xbf16> to vector<4x32x8xbf16>
    %c0_19 = arith.constant 0 : index
    %c0_20 = arith.constant 0 : index
    %c0_21 = arith.constant 0 : index
    %c0_22 = arith.constant 0 : index
    %29 = vector.load %arg6[%c0_19, %c0_20, %c0_21, %c0_22] : memref<2x4x32x8xbf16, #tpu.memory_space<vmem>>, vector<1x4x32x8xbf16>
    %30 = vector.shape_cast %29 : vector<1x4x32x8xbf16> to vector<4x32x8xbf16>
    %c0_23 = arith.constant 0 : index
    %c0_24 = arith.constant 0 : index
    %c0_25 = arith.constant 0 : index
    %c0_26 = arith.constant 0 : index
    %31 = vector.load %arg7[%c0_23, %c0_24, %c0_25, %c0_26] : memref<2x4x8x32xbf16, #tpu.memory_space<vmem>>, vector<1x4x8x32xbf16>
    %32 = vector.shape_cast %31 : vector<1x4x8x32xbf16> to vector<4x8x32xbf16>
    %c0_27 = arith.constant 0 : index
    %c0_28 = arith.constant 0 : index
    %c0_29 = arith.constant 0 : index
    %33 = vector.load %arg8[%c0_27, %c0_28, %c0_29] : memref<2x1x32xf32, #tpu.memory_space<vmem>>, vector<1x1x32xf32>
    %34 = vector.shape_cast %33 : vector<1x1x32xf32> to vector<1x32xf32>
    %c0_30 = arith.constant 0 : index
    %c0_31 = arith.constant 0 : index
    %c0_32 = arith.constant 0 : index
    %35 = vector.load %arg9[%c0_30, %c0_31, %c0_32] : memref<2x1x32xf32, #tpu.memory_space<vmem>>, vector<1x1x32xf32>
    %36 = vector.shape_cast %35 : vector<1x1x32xf32> to vector<1x32xf32>
    %cst_33 = arith.constant dense<0.000000e+00> : vector<16xf32>
    %37 = vector.multi_reduction <add>, %1, %cst_33 [1] : vector<16x32xf32> to vector<16xf32>
    %38 = vector.shape_cast %37 : vector<16xf32> to vector<16x1xf32>
    %cst_34 = arith.constant 3.200000e+01 : f32
    %39 = vector.broadcast %cst_34 : f32 to vector<16x1xf32>
    %40 = arith.divf %38, %39 : vector<16x1xf32>
    %41 = vector.broadcast %40 : vector<16x1xf32> to vector<16x32xf32>
    %42 = arith.subf %1, %41 : vector<16x32xf32>
    %43 = arith.mulf %42, %42 : vector<16x32xf32>
    %cst_35 = arith.constant dense<0.000000e+00> : vector<16xf32>
    %44 = vector.multi_reduction <add>, %43, %cst_35 [1] : vector<16x32xf32> to vector<16xf32>
    %45 = vector.shape_cast %44 : vector<16xf32> to vector<16x1xf32>
    %cst_36 = arith.constant 3.200000e+01 : f32
    %46 = vector.broadcast %cst_36 : f32 to vector<16x1xf32>
    %47 = arith.divf %45, %46 : vector<16x1xf32>
    %48 = vector.broadcast %40 : vector<16x1xf32> to vector<16x32xf32>
    %49 = arith.subf %1, %48 : vector<16x32xf32>
    %cst_37 = arith.constant 9.99999974E-6 : f32
    %50 = vector.broadcast %cst_37 : f32 to vector<16x1xf32>
    %51 = arith.addf %47, %50 : vector<16x1xf32>
    %52 = math.rsqrt %51 : vector<16x1xf32>
    %53 = vector.broadcast %52 : vector<16x1xf32> to vector<16x32xf32>
    %54 = arith.mulf %49, %53 : vector<16x32xf32>
    %55 = vector.broadcast %34 : vector<1x32xf32> to vector<16x32xf32>
    %56 = arith.mulf %54, %55 : vector<16x32xf32>
    %57 = vector.broadcast %36 : vector<1x32xf32> to vector<16x32xf32>
    %58 = arith.addf %56, %57 : vector<16x32xf32>
    %59 = arith.truncf %58 : vector<16x32xf32> to vector<16x32xbf16>
    %cst_38 = arith.constant 0.000000e+00 : f32
    %60 = vector.broadcast %cst_38 : f32 to vector<16x32xf32>
    %61 = vector.extract_strided_slice %26 {offsets = [0, 0, 0], sizes = [1, 32, 8], strides = [1, 1, 1]} : vector<4x32x8xbf16> to vector<1x32x8xbf16>
    %62 = vector.shape_cast %61 : vector<1x32x8xbf16> to vector<32x8xbf16>
    %cst_39 = arith.constant dense<0.000000e+00> : vector<16x8xf32>
    %63 = tpu.matmul %59, %62, %cst_39 {dimension_numbers = #tpu.dot_dimension_numbers<[1], [0], [0], [1], [0, 0, 1, 1], [], []>} : vector<16x32xbf16>, vector<32x8xbf16>, vector<16x8xf32> -> vector<16x8xf32>
    %64 = vector.extract_strided_slice %28 {offsets = [0, 0, 0], sizes = [1, 32, 8], strides = [1, 1, 1]} : vector<4x32x8xbf16> to vector<1x32x8xbf16>
    %65 = vector.shape_cast %64 : vector<1x32x8xbf16> to vector<32x8xbf16>
    %cst_40 = arith.constant dense<0.000000e+00> : vector<16x8xf32>
    %66 = tpu.matmul %59, %65, %cst_40 {dimension_numbers = #tpu.dot_dimension_numbers<[1], [0], [0], [1], [0, 0, 1, 1], [], []>} : vector<16x32xbf16>, vector<32x8xbf16>, vector<16x8xf32> -> vector<16x8xf32>
    %67 = vector.extract_strided_slice %30 {offsets = [0, 0, 0], sizes = [1, 32, 8], strides = [1, 1, 1]} : vector<4x32x8xbf16> to vector<1x32x8xbf16>
    %68 = vector.shape_cast %67 : vector<1x32x8xbf16> to vector<32x8xbf16>
    %cst_41 = arith.constant dense<0.000000e+00> : vector<16x8xf32>
    %69 = tpu.matmul %59, %68, %cst_41 {dimension_numbers = #tpu.dot_dimension_numbers<[1], [0], [0], [1], [0, 0, 1, 1], [], []>} : vector<16x32xbf16>, vector<32x8xbf16>, vector<16x8xf32> -> vector<16x8xf32>
    %70 = vector.shape_cast %63 : vector<16x8xf32> to vector<2x8x8xf32>
    %71 = arith.truncf %70 : vector<2x8x8xf32> to vector<2x8x8xbf16>
    %72 = vector.shape_cast %66 : vector<16x8xf32> to vector<2x8x8xf32>
    %73 = arith.truncf %72 : vector<2x8x8xf32> to vector<2x8x8xbf16>
    %74 = vector.shape_cast %69 : vector<16x8xf32> to vector<2x8x8xf32>
    %75 = arith.truncf %74 : vector<2x8x8xf32> to vector<2x8x8xbf16>
    "tpu.trace_start"() <{level = 10 : i32, message = "bqd,bkd->bqk"}> : () -> ()
    %cst_42 = arith.constant dense<0.000000e+00> : vector<2x8x8xf32>
    %76 = tpu.matmul %71, %73, %cst_42 {dimension_numbers = #tpu.dot_dimension_numbers<[2], [2], [1], [1], [0, 0, 0, 1, 1, 1], [0], [0]>} : vector<2x8x8xbf16>, vector<2x8x8xbf16>, vector<2x8x8xf32> -> vector<2x8x8xf32>
    "tpu.trace_stop"() : () -> ()
    %77 = arith.addf %76, %24 : vector<2x8x8xf32>
    %cst_43 = arith.constant -1.000000e+09 : f32
    %78 = vector.broadcast %cst_43 : f32 to vector<2x8x8xf32>
    %79 = arith.select %12, %78, %77 : vector<2x8x8xi1>, vector<2x8x8xf32>
    %cst_44 = arith.constant dense<0xFF800000> : vector<2x8xf32>
    %80 = vector.multi_reduction <maximumf>, %79, %cst_44 [2] : vector<2x8x8xf32> to vector<2x8xf32>
    %81 = vector.shape_cast %80 : vector<2x8xf32> to vector<2x8x1xf32>
    %82 = vector.broadcast %81 : vector<2x8x1xf32> to vector<2x8x8xf32>
    %83 = arith.subf %79, %82 : vector<2x8x8xf32>
    %84 = math.exp %83 : vector<2x8x8xf32>
    %cst_45 = arith.constant dense<0.000000e+00> : vector<2x8xf32>
    %85 = vector.multi_reduction <add>, %84, %cst_45 [2] : vector<2x8x8xf32> to vector<2x8xf32>
    %86 = vector.shape_cast %85 : vector<2x8xf32> to vector<2x8x1xf32>
    %87 = vector.broadcast %86 : vector<2x8x1xf32> to vector<2x8x8xf32>
    %88 = arith.divf %84, %87 : vector<2x8x8xf32>
    %89 = arith.truncf %88 : vector<2x8x8xf32> to vector<2x8x8xbf16>
    "tpu.trace_start"() <{level = 10 : i32, message = "bqk,bkd->bqd"}> : () -> ()
    %cst_46 = arith.constant dense<0.000000e+00> : vector<2x8x8xf32>
    %90 = tpu.matmul %89, %75, %cst_46 {dimension_numbers = #tpu.dot_dimension_numbers<[2], [1], [1], [2], [0, 0, 0, 1, 1, 2], [0], [0]>} : vector<2x8x8xbf16>, vector<2x8x8xbf16>, vector<2x8x8xf32> -> vector<2x8x8xf32>
    "tpu.trace_stop"() : () -> ()
    %91 = vector.shape_cast %90 : vector<2x8x8xf32> to vector<16x8xf32>
    %92 = arith.truncf %91 : vector<16x8xf32> to vector<16x8xbf16>
    %93 = vector.extract_strided_slice %32 {offsets = [0, 0, 0], sizes = [1, 8, 32], strides = [1, 1, 1]} : vector<4x8x32xbf16> to vector<1x8x32xbf16>
    %94 = vector.shape_cast %93 : vector<1x8x32xbf16> to vector<8x32xbf16>
    %cst_47 = arith.constant dense<0.000000e+00> : vector<16x32xf32>
    %95 = tpu.matmul %92, %94, %cst_47 {dimension_numbers = #tpu.dot_dimension_numbers<[1], [0], [0], [1], [0, 0, 1, 1], [], []>} : vector<16x8xbf16>, vector<8x32xbf16>, vector<16x32xf32> -> vector<16x32xf32>
    %96 = arith.addf %60, %95 : vector<16x32xf32>
    %97 = vector.extract_strided_slice %26 {offsets = [1, 0, 0], sizes = [1, 32, 8], strides = [1, 1, 1]} : vector<4x32x8xbf16> to vector<1x32x8xbf16>
    %98 = vector.shape_cast %97 : vector<1x32x8xbf16> to vector<32x8xbf16>
    %cst_48 = arith.constant dense<0.000000e+00> : vector<16x8xf32>
    %99 = tpu.matmul %59, %98, %cst_48 {dimension_numbers = #tpu.dot_dimension_numbers<[1], [0], [0], [1], [0, 0, 1, 1], [], []>} : vector<16x32xbf16>, vector<32x8xbf16>, vector<16x8xf32> -> vector<16x8xf32>
    %100 = vector.extract_strided_slice %28 {offsets = [1, 0, 0], sizes = [1, 32, 8], strides = [1, 1, 1]} : vector<4x32x8xbf16> to vector<1x32x8xbf16>
    %101 = vector.shape_cast %100 : vector<1x32x8xbf16> to vector<32x8xbf16>
    %cst_49 = arith.constant dense<0.000000e+00> : vector<16x8xf32>
    %102 = tpu.matmul %59, %101, %cst_49 {dimension_numbers = #tpu.dot_dimension_numbers<[1], [0], [0], [1], [0, 0, 1, 1], [], []>} : vector<16x32xbf16>, vector<32x8xbf16>, vector<16x8xf32> -> vector<16x8xf32>
    %103 = vector.extract_strided_slice %30 {offsets = [1, 0, 0], sizes = [1, 32, 8], strides = [1, 1, 1]} : vector<4x32x8xbf16> to vector<1x32x8xbf16>
    %104 = vector.shape_cast %103 : vector<1x32x8xbf16> to vector<32x8xbf16>
    %cst_50 = arith.constant dense<0.000000e+00> : vector<16x8xf32>
    %105 = tpu.matmul %59, %104, %cst_50 {dimension_numbers = #tpu.dot_dimension_numbers<[1], [0], [0], [1], [0, 0, 1, 1], [], []>} : vector<16x32xbf16>, vector<32x8xbf16>, vector<16x8xf32> -> vector<16x8xf32>
    %106 = vector.shape_cast %99 : vector<16x8xf32> to vector<2x8x8xf32>
    %107 = arith.truncf %106 : vector<2x8x8xf32> to vector<2x8x8xbf16>
    %108 = vector.shape_cast %102 : vector<16x8xf32> to vector<2x8x8xf32>
    %109 = arith.truncf %108 : vector<2x8x8xf32> to vector<2x8x8xbf16>
    %110 = vector.shape_cast %105 : vector<16x8xf32> to vector<2x8x8xf32>
    %111 = arith.truncf %110 : vector<2x8x8xf32> to vector<2x8x8xbf16>
    "tpu.trace_start"() <{level = 10 : i32, message = "bqd,bkd->bqk"}> : () -> ()
    %cst_51 = arith.constant dense<0.000000e+00> : vector<2x8x8xf32>
    %112 = tpu.matmul %107, %109, %cst_51 {dimension_numbers = #tpu.dot_dimension_numbers<[2], [2], [1], [1], [0, 0, 0, 1, 1, 1], [0], [0]>} : vector<2x8x8xbf16>, vector<2x8x8xbf16>, vector<2x8x8xf32> -> vector<2x8x8xf32>
    "tpu.trace_stop"() : () -> ()
    %113 = arith.addf %112, %24 : vector<2x8x8xf32>
    %cst_52 = arith.constant -1.000000e+09 : f32
    %114 = vector.broadcast %cst_52 : f32 to vector<2x8x8xf32>
    %115 = arith.select %12, %114, %113 : vector<2x8x8xi1>, vector<2x8x8xf32>
    %cst_53 = arith.constant dense<0xFF800000> : vector<2x8xf32>
    %116 = vector.multi_reduction <maximumf>, %115, %cst_53 [2] : vector<2x8x8xf32> to vector<2x8xf32>
    %117 = vector.shape_cast %116 : vector<2x8xf32> to vector<2x8x1xf32>
    %118 = vector.broadcast %117 : vector<2x8x1xf32> to vector<2x8x8xf32>
    %119 = arith.subf %115, %118 : vector<2x8x8xf32>
    %120 = math.exp %119 : vector<2x8x8xf32>
    %cst_54 = arith.constant dense<0.000000e+00> : vector<2x8xf32>
    %121 = vector.multi_reduction <add>, %120, %cst_54 [2] : vector<2x8x8xf32> to vector<2x8xf32>
    %122 = vector.shape_cast %121 : vector<2x8xf32> to vector<2x8x1xf32>
    %123 = vector.broadcast %122 : vector<2x8x1xf32> to vector<2x8x8xf32>
    %124 = arith.divf %120, %123 : vector<2x8x8xf32>
    %125 = arith.truncf %124 : vector<2x8x8xf32> to vector<2x8x8xbf16>
    "tpu.trace_start"() <{level = 10 : i32, message = "bqk,bkd->bqd"}> : () -> ()
    %cst_55 = arith.constant dense<0.000000e+00> : vector<2x8x8xf32>
    %126 = tpu.matmul %125, %111, %cst_55 {dimension_numbers = #tpu.dot_dimension_numbers<[2], [1], [1], [2], [0, 0, 0, 1, 1, 2], [0], [0]>} : vector<2x8x8xbf16>, vector<2x8x8xbf16>, vector<2x8x8xf32> -> vector<2x8x8xf32>
    "tpu.trace_stop"() : () -> ()
    %127 = vector.shape_cast %126 : vector<2x8x8xf32> to vector<16x8xf32>
    %128 = arith.truncf %127 : vector<16x8xf32> to vector<16x8xbf16>
    %129 = vector.extract_strided_slice %32 {offsets = [1, 0, 0], sizes = [1, 8, 32], strides = [1, 1, 1]} : vector<4x8x32xbf16> to vector<1x8x32xbf16>
    %130 = vector.shape_cast %129 : vector<1x8x32xbf16> to vector<8x32xbf16>
    %cst_56 = arith.constant dense<0.000000e+00> : vector<16x32xf32>
    %131 = tpu.matmul %128, %130, %cst_56 {dimension_numbers = #tpu.dot_dimension_numbers<[1], [0], [0], [1], [0, 0, 1, 1], [], []>} : vector<16x8xbf16>, vector<8x32xbf16>, vector<16x32xf32> -> vector<16x32xf32>
    %132 = arith.addf %96, %131 : vector<16x32xf32>
    %133 = vector.extract_strided_slice %26 {offsets = [2, 0, 0], sizes = [1, 32, 8], strides = [1, 1, 1]} : vector<4x32x8xbf16> to vector<1x32x8xbf16>
    %134 = vector.shape_cast %133 : vector<1x32x8xbf16> to vector<32x8xbf16>
    %cst_57 = arith.constant dense<0.000000e+00> : vector<16x8xf32>
    %135 = tpu.matmul %59, %134, %cst_57 {dimension_numbers = #tpu.dot_dimension_numbers<[1], [0], [0], [1], [0, 0, 1, 1], [], []>} : vector<16x32xbf16>, vector<32x8xbf16>, vector<16x8xf32> -> vector<16x8xf32>
    %136 = vector.extract_strided_slice %28 {offsets = [2, 0, 0], sizes = [1, 32, 8], strides = [1, 1, 1]} : vector<4x32x8xbf16> to vector<1x32x8xbf16>
    %137 = vector.shape_cast %136 : vector<1x32x8xbf16> to vector<32x8xbf16>
    %cst_58 = arith.constant dense<0.000000e+00> : vector<16x8xf32>
    %138 = tpu.matmul %59, %137, %cst_58 {dimension_numbers = #tpu.dot_dimension_numbers<[1], [0], [0], [1], [0, 0, 1, 1], [], []>} : vector<16x32xbf16>, vector<32x8xbf16>, vector<16x8xf32> -> vector<16x8xf32>
    %139 = vector.extract_strided_slice %30 {offsets = [2, 0, 0], sizes = [1, 32, 8], strides = [1, 1, 1]} : vector<4x32x8xbf16> to vector<1x32x8xbf16>
    %140 = vector.shape_cast %139 : vector<1x32x8xbf16> to vector<32x8xbf16>
    %cst_59 = arith.constant dense<0.000000e+00> : vector<16x8xf32>
    %141 = tpu.matmul %59, %140, %cst_59 {dimension_numbers = #tpu.dot_dimension_numbers<[1], [0], [0], [1], [0, 0, 1, 1], [], []>} : vector<16x32xbf16>, vector<32x8xbf16>, vector<16x8xf32> -> vector<16x8xf32>
    %142 = vector.shape_cast %135 : vector<16x8xf32> to vector<2x8x8xf32>
    %143 = arith.truncf %142 : vector<2x8x8xf32> to vector<2x8x8xbf16>
    %144 = vector.shape_cast %138 : vector<16x8xf32> to vector<2x8x8xf32>
    %145 = arith.truncf %144 : vector<2x8x8xf32> to vector<2x8x8xbf16>
    %146 = vector.shape_cast %141 : vector<16x8xf32> to vector<2x8x8xf32>
    %147 = arith.truncf %146 : vector<2x8x8xf32> to vector<2x8x8xbf16>
    "tpu.trace_start"() <{level = 10 : i32, message = "bqd,bkd->bqk"}> : () -> ()
    %cst_60 = arith.constant dense<0.000000e+00> : vector<2x8x8xf32>
    %148 = tpu.matmul %143, %145, %cst_60 {dimension_numbers = #tpu.dot_dimension_numbers<[2], [2], [1], [1], [0, 0, 0, 1, 1, 1], [0], [0]>} : vector<2x8x8xbf16>, vector<2x8x8xbf16>, vector<2x8x8xf32> -> vector<2x8x8xf32>
    "tpu.trace_stop"() : () -> ()
    %149 = arith.addf %148, %24 : vector<2x8x8xf32>
    %cst_61 = arith.constant -1.000000e+09 : f32
    %150 = vector.broadcast %cst_61 : f32 to vector<2x8x8xf32>
    %151 = arith.select %12, %150, %149 : vector<2x8x8xi1>, vector<2x8x8xf32>
    %cst_62 = arith.constant dense<0xFF800000> : vector<2x8xf32>
    %152 = vector.multi_reduction <maximumf>, %151, %cst_62 [2] : vector<2x8x8xf32> to vector<2x8xf32>
    %153 = vector.shape_cast %152 : vector<2x8xf32> to vector<2x8x1xf32>
    %154 = vector.broadcast %153 : vector<2x8x1xf32> to vector<2x8x8xf32>
    %155 = arith.subf %151, %154 : vector<2x8x8xf32>
    %156 = math.exp %155 : vector<2x8x8xf32>
    %cst_63 = arith.constant dense<0.000000e+00> : vector<2x8xf32>
    %157 = vector.multi_reduction <add>, %156, %cst_63 [2] : vector<2x8x8xf32> to vector<2x8xf32>
    %158 = vector.shape_cast %157 : vector<2x8xf32> to vector<2x8x1xf32>
    %159 = vector.broadcast %158 : vector<2x8x1xf32> to vector<2x8x8xf32>
    %160 = arith.divf %156, %159 : vector<2x8x8xf32>
    %161 = arith.truncf %160 : vector<2x8x8xf32> to vector<2x8x8xbf16>
    "tpu.trace_start"() <{level = 10 : i32, message = "bqk,bkd->bqd"}> : () -> ()
    %cst_64 = arith.constant dense<0.000000e+00> : vector<2x8x8xf32>
    %162 = tpu.matmul %161, %147, %cst_64 {dimension_numbers = #tpu.dot_dimension_numbers<[2], [1], [1], [2], [0, 0, 0, 1, 1, 2], [0], [0]>} : vector<2x8x8xbf16>, vector<2x8x8xbf16>, vector<2x8x8xf32> -> vector<2x8x8xf32>
    "tpu.trace_stop"() : () -> ()
    %163 = vector.shape_cast %162 : vector<2x8x8xf32> to vector<16x8xf32>
    %164 = arith.truncf %163 : vector<16x8xf32> to vector<16x8xbf16>
    %165 = vector.extract_strided_slice %32 {offsets = [2, 0, 0], sizes = [1, 8, 32], strides = [1, 1, 1]} : vector<4x8x32xbf16> to vector<1x8x32xbf16>
    %166 = vector.shape_cast %165 : vector<1x8x32xbf16> to vector<8x32xbf16>
    %cst_65 = arith.constant dense<0.000000e+00> : vector<16x32xf32>
    %167 = tpu.matmul %164, %166, %cst_65 {dimension_numbers = #tpu.dot_dimension_numbers<[1], [0], [0], [1], [0, 0, 1, 1], [], []>} : vector<16x8xbf16>, vector<8x32xbf16>, vector<16x32xf32> -> vector<16x32xf32>
    %168 = arith.addf %132, %167 : vector<16x32xf32>
    %169 = vector.extract_strided_slice %26 {offsets = [3, 0, 0], sizes = [1, 32, 8], strides = [1, 1, 1]} : vector<4x32x8xbf16> to vector<1x32x8xbf16>
    %170 = vector.shape_cast %169 : vector<1x32x8xbf16> to vector<32x8xbf16>
    %cst_66 = arith.constant dense<0.000000e+00> : vector<16x8xf32>
    %171 = tpu.matmul %59, %170, %cst_66 {dimension_numbers = #tpu.dot_dimension_numbers<[1], [0], [0], [1], [0, 0, 1, 1], [], []>} : vector<16x32xbf16>, vector<32x8xbf16>, vector<16x8xf32> -> vector<16x8xf32>
    %172 = vector.extract_strided_slice %28 {offsets = [3, 0, 0], sizes = [1, 32, 8], strides = [1, 1, 1]} : vector<4x32x8xbf16> to vector<1x32x8xbf16>
    %173 = vector.shape_cast %172 : vector<1x32x8xbf16> to vector<32x8xbf16>
    %cst_67 = arith.constant dense<0.000000e+00> : vector<16x8xf32>
    %174 = tpu.matmul %59, %173, %cst_67 {dimension_numbers = #tpu.dot_dimension_numbers<[1], [0], [0], [1], [0, 0, 1, 1], [], []>} : vector<16x32xbf16>, vector<32x8xbf16>, vector<16x8xf32> -> vector<16x8xf32>
    %175 = vector.extract_strided_slice %30 {offsets = [3, 0, 0], sizes = [1, 32, 8], strides = [1, 1, 1]} : vector<4x32x8xbf16> to vector<1x32x8xbf16>
    %176 = vector.shape_cast %175 : vector<1x32x8xbf16> to vector<32x8xbf16>
    %cst_68 = arith.constant dense<0.000000e+00> : vector<16x8xf32>
    %177 = tpu.matmul %59, %176, %cst_68 {dimension_numbers = #tpu.dot_dimension_numbers<[1], [0], [0], [1], [0, 0, 1, 1], [], []>} : vector<16x32xbf16>, vector<32x8xbf16>, vector<16x8xf32> -> vector<16x8xf32>
    %178 = vector.shape_cast %171 : vector<16x8xf32> to vector<2x8x8xf32>
    %179 = arith.truncf %178 : vector<2x8x8xf32> to vector<2x8x8xbf16>
    %180 = vector.shape_cast %174 : vector<16x8xf32> to vector<2x8x8xf32>
    %181 = arith.truncf %180 : vector<2x8x8xf32> to vector<2x8x8xbf16>
    %182 = vector.shape_cast %177 : vector<16x8xf32> to vector<2x8x8xf32>
    %183 = arith.truncf %182 : vector<2x8x8xf32> to vector<2x8x8xbf16>
    "tpu.trace_start"() <{level = 10 : i32, message = "bqd,bkd->bqk"}> : () -> ()
    %cst_69 = arith.constant dense<0.000000e+00> : vector<2x8x8xf32>
    %184 = tpu.matmul %179, %181, %cst_69 {dimension_numbers = #tpu.dot_dimension_numbers<[2], [2], [1], [1], [0, 0, 0, 1, 1, 1], [0], [0]>} : vector<2x8x8xbf16>, vector<2x8x8xbf16>, vector<2x8x8xf32> -> vector<2x8x8xf32>
    "tpu.trace_stop"() : () -> ()
    %185 = arith.addf %184, %24 : vector<2x8x8xf32>
    %cst_70 = arith.constant -1.000000e+09 : f32
    %186 = vector.broadcast %cst_70 : f32 to vector<2x8x8xf32>
    %187 = arith.select %12, %186, %185 : vector<2x8x8xi1>, vector<2x8x8xf32>
    %cst_71 = arith.constant dense<0xFF800000> : vector<2x8xf32>
    %188 = vector.multi_reduction <maximumf>, %187, %cst_71 [2] : vector<2x8x8xf32> to vector<2x8xf32>
    %189 = vector.shape_cast %188 : vector<2x8xf32> to vector<2x8x1xf32>
    %190 = vector.broadcast %189 : vector<2x8x1xf32> to vector<2x8x8xf32>
    %191 = arith.subf %187, %190 : vector<2x8x8xf32>
    %192 = math.exp %191 : vector<2x8x8xf32>
    %cst_72 = arith.constant dense<0.000000e+00> : vector<2x8xf32>
    %193 = vector.multi_reduction <add>, %192, %cst_72 [2] : vector<2x8x8xf32> to vector<2x8xf32>
    %194 = vector.shape_cast %193 : vector<2x8xf32> to vector<2x8x1xf32>
    %195 = vector.broadcast %194 : vector<2x8x1xf32> to vector<2x8x8xf32>
    %196 = arith.divf %192, %195 : vector<2x8x8xf32>
    %197 = arith.truncf %196 : vector<2x8x8xf32> to vector<2x8x8xbf16>
    "tpu.trace_start"() <{level = 10 : i32, message = "bqk,bkd->bqd"}> : () -> ()
    %cst_73 = arith.constant dense<0.000000e+00> : vector<2x8x8xf32>
    %198 = tpu.matmul %197, %183, %cst_73 {dimension_numbers = #tpu.dot_dimension_numbers<[2], [1], [1], [2], [0, 0, 0, 1, 1, 2], [0], [0]>} : vector<2x8x8xbf16>, vector<2x8x8xbf16>, vector<2x8x8xf32> -> vector<2x8x8xf32>
    "tpu.trace_stop"() : () -> ()
    %199 = vector.shape_cast %198 : vector<2x8x8xf32> to vector<16x8xf32>
    %200 = arith.truncf %199 : vector<16x8xf32> to vector<16x8xbf16>
    %201 = vector.extract_strided_slice %32 {offsets = [3, 0, 0], sizes = [1, 8, 32], strides = [1, 1, 1]} : vector<4x8x32xbf16> to vector<1x8x32xbf16>
    %202 = vector.shape_cast %201 : vector<1x8x32xbf16> to vector<8x32xbf16>
    %cst_74 = arith.constant dense<0.000000e+00> : vector<16x32xf32>
    %203 = tpu.matmul %200, %202, %cst_74 {dimension_numbers = #tpu.dot_dimension_numbers<[1], [0], [0], [1], [0, 0, 1, 1], [], []>} : vector<16x8xbf16>, vector<8x32xbf16>, vector<16x32xf32> -> vector<16x32xf32>
    %204 = arith.addf %168, %203 : vector<16x32xf32>
    %205 = arith.addf %1, %204 : vector<16x32xf32>
    %c0_75 = arith.constant 0 : index
    %c0_76 = arith.constant 0 : index
    %c0_77 = arith.constant 0 : index
    %206 = vector.load %arg10[%c0_75, %c0_76, %c0_77] : memref<2x1x32xf32, #tpu.memory_space<vmem>>, vector<1x1x32xf32>
    %207 = vector.shape_cast %206 : vector<1x1x32xf32> to vector<1x32xf32>
    %c0_78 = arith.constant 0 : index
    %c0_79 = arith.constant 0 : index
    %c0_80 = arith.constant 0 : index
    %208 = vector.load %arg11[%c0_78, %c0_79, %c0_80] : memref<2x1x32xf32, #tpu.memory_space<vmem>>, vector<1x1x32xf32>
    %209 = vector.shape_cast %208 : vector<1x1x32xf32> to vector<1x32xf32>
    %cst_81 = arith.constant dense<0.000000e+00> : vector<16xf32>
    %210 = vector.multi_reduction <add>, %205, %cst_81 [1] : vector<16x32xf32> to vector<16xf32>
    %211 = vector.shape_cast %210 : vector<16xf32> to vector<16x1xf32>
    %cst_82 = arith.constant 3.200000e+01 : f32
    %212 = vector.broadcast %cst_82 : f32 to vector<16x1xf32>
    %213 = arith.divf %211, %212 : vector<16x1xf32>
    %214 = vector.broadcast %213 : vector<16x1xf32> to vector<16x32xf32>
    %215 = arith.subf %205, %214 : vector<16x32xf32>
    %216 = arith.mulf %215, %215 : vector<16x32xf32>
    %cst_83 = arith.constant dense<0.000000e+00> : vector<16xf32>
    %217 = vector.multi_reduction <add>, %216, %cst_83 [1] : vector<16x32xf32> to vector<16xf32>
    %218 = vector.shape_cast %217 : vector<16xf32> to vector<16x1xf32>
    %cst_84 = arith.constant 3.200000e+01 : f32
    %219 = vector.broadcast %cst_84 : f32 to vector<16x1xf32>
    %220 = arith.divf %218, %219 : vector<16x1xf32>
    %221 = vector.broadcast %213 : vector<16x1xf32> to vector<16x32xf32>
    %222 = arith.subf %205, %221 : vector<16x32xf32>
    %cst_85 = arith.constant 9.99999974E-6 : f32
    %223 = vector.broadcast %cst_85 : f32 to vector<16x1xf32>
    %224 = arith.addf %220, %223 : vector<16x1xf32>
    %225 = math.rsqrt %224 : vector<16x1xf32>
    %226 = vector.broadcast %225 : vector<16x1xf32> to vector<16x32xf32>
    %227 = arith.mulf %222, %226 : vector<16x32xf32>
    %228 = vector.broadcast %207 : vector<1x32xf32> to vector<16x32xf32>
    %229 = arith.mulf %227, %228 : vector<16x32xf32>
    %230 = vector.broadcast %209 : vector<1x32xf32> to vector<16x32xf32>
    %231 = arith.addf %229, %230 : vector<16x32xf32>
    %232 = arith.truncf %231 : vector<16x32xf32> to vector<16x32xbf16>
    %c0_86 = arith.constant 0 : index
    %c0_87 = arith.constant 0 : index
    %c0_88 = arith.constant 0 : index
    %233 = vector.load %arg12[%c0_86, %c0_87, %c0_88] : memref<2x32x64xbf16, #tpu.memory_space<vmem>>, vector<1x32x64xbf16>
    %234 = vector.shape_cast %233 : vector<1x32x64xbf16> to vector<32x64xbf16>
    %cst_89 = arith.constant dense<0.000000e+00> : vector<16x64xf32>
    %235 = tpu.matmul %232, %234, %cst_89 {dimension_numbers = #tpu.dot_dimension_numbers<[1], [0], [0], [1], [0, 0, 1, 1], [], []>} : vector<16x32xbf16>, vector<32x64xbf16>, vector<16x64xf32> -> vector<16x64xf32>
    %c0_90 = arith.constant 0 : index
    %c0_91 = arith.constant 0 : index
    %c0_92 = arith.constant 0 : index
    %236 = vector.load %arg13[%c0_90, %c0_91, %c0_92] : memref<2x1x64xf32, #tpu.memory_space<vmem>>, vector<1x1x64xf32>
    %237 = vector.shape_cast %236 : vector<1x1x64xf32> to vector<1x64xf32>
    %238 = vector.broadcast %237 : vector<1x64xf32> to vector<16x64xf32>
    %239 = arith.addf %235, %238 : vector<16x64xf32>
    %cst_93 = arith.constant 0.000000e+00 : f32
    %240 = vector.broadcast %cst_93 : f32 to vector<16x64xf32>
    %241 = arith.maximumf %239, %240 : vector<16x64xf32>
    %242 = arith.truncf %241 : vector<16x64xf32> to vector<16x64xbf16>
    %c0_94 = arith.constant 0 : index
    %c0_95 = arith.constant 0 : index
    %c0_96 = arith.constant 0 : index
    %243 = vector.load %arg14[%c0_94, %c0_95, %c0_96] : memref<2x64x32xbf16, #tpu.memory_space<vmem>>, vector<1x64x32xbf16>
    %244 = vector.shape_cast %243 : vector<1x64x32xbf16> to vector<64x32xbf16>
    %cst_97 = arith.constant dense<0.000000e+00> : vector<16x32xf32>
    %245 = tpu.matmul %242, %244, %cst_97 {dimension_numbers = #tpu.dot_dimension_numbers<[1], [0], [0], [1], [0, 0, 1, 1], [], []>} : vector<16x64xbf16>, vector<64x32xbf16>, vector<16x32xf32> -> vector<16x32xf32>
    %c0_98 = arith.constant 0 : index
    %c0_99 = arith.constant 0 : index
    %c0_100 = arith.constant 0 : index
    %246 = vector.load %arg15[%c0_98, %c0_99, %c0_100] : memref<2x1x32xf32, #tpu.memory_space<vmem>>, vector<1x1x32xf32>
    %247 = vector.shape_cast %246 : vector<1x1x32xf32> to vector<1x32xf32>
    %248 = vector.broadcast %247 : vector<1x32xf32> to vector<16x32xf32>
    %249 = arith.addf %245, %248 : vector<16x32xf32>
    %250 = arith.addf %205, %249 : vector<16x32xf32>
    %c1 = arith.constant 1 : index
    %c0_101 = arith.constant 0 : index
    %c0_102 = arith.constant 0 : index
    %c0_103 = arith.constant 0 : index
    %251 = vector.load %arg4[%c1, %c0_101, %c0_102, %c0_103] : memref<2x4x32x8xbf16, #tpu.memory_space<vmem>>, vector<1x4x32x8xbf16>
    %252 = vector.shape_cast %251 : vector<1x4x32x8xbf16> to vector<4x32x8xbf16>
    %c1_104 = arith.constant 1 : index
    %c0_105 = arith.constant 0 : index
    %c0_106 = arith.constant 0 : index
    %c0_107 = arith.constant 0 : index
    %253 = vector.load %arg5[%c1_104, %c0_105, %c0_106, %c0_107] : memref<2x4x32x8xbf16, #tpu.memory_space<vmem>>, vector<1x4x32x8xbf16>
    %254 = vector.shape_cast %253 : vector<1x4x32x8xbf16> to vector<4x32x8xbf16>
    %c1_108 = arith.constant 1 : index
    %c0_109 = arith.constant 0 : index
    %c0_110 = arith.constant 0 : index
    %c0_111 = arith.constant 0 : index
    %255 = vector.load %arg6[%c1_108, %c0_109, %c0_110, %c0_111] : memref<2x4x32x8xbf16, #tpu.memory_space<vmem>>, vector<1x4x32x8xbf16>
    %256 = vector.shape_cast %255 : vector<1x4x32x8xbf16> to vector<4x32x8xbf16>
    %c1_112 = arith.constant 1 : index
    %c0_113 = arith.constant 0 : index
    %c0_114 = arith.constant 0 : index
    %c0_115 = arith.constant 0 : index
    %257 = vector.load %arg7[%c1_112, %c0_113, %c0_114, %c0_115] : memref<2x4x8x32xbf16, #tpu.memory_space<vmem>>, vector<1x4x8x32xbf16>
    %258 = vector.shape_cast %257 : vector<1x4x8x32xbf16> to vector<4x8x32xbf16>
    %c1_116 = arith.constant 1 : index
    %c0_117 = arith.constant 0 : index
    %c0_118 = arith.constant 0 : index
    %259 = vector.load %arg8[%c1_116, %c0_117, %c0_118] : memref<2x1x32xf32, #tpu.memory_space<vmem>>, vector<1x1x32xf32>
    %260 = vector.shape_cast %259 : vector<1x1x32xf32> to vector<1x32xf32>
    %c1_119 = arith.constant 1 : index
    %c0_120 = arith.constant 0 : index
    %c0_121 = arith.constant 0 : index
    %261 = vector.load %arg9[%c1_119, %c0_120, %c0_121] : memref<2x1x32xf32, #tpu.memory_space<vmem>>, vector<1x1x32xf32>
    %262 = vector.shape_cast %261 : vector<1x1x32xf32> to vector<1x32xf32>
    %cst_122 = arith.constant dense<0.000000e+00> : vector<16xf32>
    %263 = vector.multi_reduction <add>, %250, %cst_122 [1] : vector<16x32xf32> to vector<16xf32>
    %264 = vector.shape_cast %263 : vector<16xf32> to vector<16x1xf32>
    %cst_123 = arith.constant 3.200000e+01 : f32
    %265 = vector.broadcast %cst_123 : f32 to vector<16x1xf32>
    %266 = arith.divf %264, %265 : vector<16x1xf32>
    %267 = vector.broadcast %266 : vector<16x1xf32> to vector<16x32xf32>
    %268 = arith.subf %250, %267 : vector<16x32xf32>
    %269 = arith.mulf %268, %268 : vector<16x32xf32>
    %cst_124 = arith.constant dense<0.000000e+00> : vector<16xf32>
    %270 = vector.multi_reduction <add>, %269, %cst_124 [1] : vector<16x32xf32> to vector<16xf32>
    %271 = vector.shape_cast %270 : vector<16xf32> to vector<16x1xf32>
    %cst_125 = arith.constant 3.200000e+01 : f32
    %272 = vector.broadcast %cst_125 : f32 to vector<16x1xf32>
    %273 = arith.divf %271, %272 : vector<16x1xf32>
    %274 = vector.broadcast %266 : vector<16x1xf32> to vector<16x32xf32>
    %275 = arith.subf %250, %274 : vector<16x32xf32>
    %cst_126 = arith.constant 9.99999974E-6 : f32
    %276 = vector.broadcast %cst_126 : f32 to vector<16x1xf32>
    %277 = arith.addf %273, %276 : vector<16x1xf32>
    %278 = math.rsqrt %277 : vector<16x1xf32>
    %279 = vector.broadcast %278 : vector<16x1xf32> to vector<16x32xf32>
    %280 = arith.mulf %275, %279 : vector<16x32xf32>
    %281 = vector.broadcast %260 : vector<1x32xf32> to vector<16x32xf32>
    %282 = arith.mulf %280, %281 : vector<16x32xf32>
    %283 = vector.broadcast %262 : vector<1x32xf32> to vector<16x32xf32>
    %284 = arith.addf %282, %283 : vector<16x32xf32>
    %285 = arith.truncf %284 : vector<16x32xf32> to vector<16x32xbf16>
    %cst_127 = arith.constant 0.000000e+00 : f32
    %286 = vector.broadcast %cst_127 : f32 to vector<16x32xf32>
    %287 = vector.extract_strided_slice %252 {offsets = [0, 0, 0], sizes = [1, 32, 8], strides = [1, 1, 1]} : vector<4x32x8xbf16> to vector<1x32x8xbf16>
    %288 = vector.shape_cast %287 : vector<1x32x8xbf16> to vector<32x8xbf16>
    %cst_128 = arith.constant dense<0.000000e+00> : vector<16x8xf32>
    %289 = tpu.matmul %285, %288, %cst_128 {dimension_numbers = #tpu.dot_dimension_numbers<[1], [0], [0], [1], [0, 0, 1, 1], [], []>} : vector<16x32xbf16>, vector<32x8xbf16>, vector<16x8xf32> -> vector<16x8xf32>
    %290 = vector.extract_strided_slice %254 {offsets = [0, 0, 0], sizes = [1, 32, 8], strides = [1, 1, 1]} : vector<4x32x8xbf16> to vector<1x32x8xbf16>
    %291 = vector.shape_cast %290 : vector<1x32x8xbf16> to vector<32x8xbf16>
    %cst_129 = arith.constant dense<0.000000e+00> : vector<16x8xf32>
    %292 = tpu.matmul %285, %291, %cst_129 {dimension_numbers = #tpu.dot_dimension_numbers<[1], [0], [0], [1], [0, 0, 1, 1], [], []>} : vector<16x32xbf16>, vector<32x8xbf16>, vector<16x8xf32> -> vector<16x8xf32>
    %293 = vector.extract_strided_slice %256 {offsets = [0, 0, 0], sizes = [1, 32, 8], strides = [1, 1, 1]} : vector<4x32x8xbf16> to vector<1x32x8xbf16>
    %294 = vector.shape_cast %293 : vector<1x32x8xbf16> to vector<32x8xbf16>
    %cst_130 = arith.constant dense<0.000000e+00> : vector<16x8xf32>
    %295 = tpu.matmul %285, %294, %cst_130 {dimension_numbers = #tpu.dot_dimension_numbers<[1], [0], [0], [1], [0, 0, 1, 1], [], []>} : vector<16x32xbf16>, vector<32x8xbf16>, vector<16x8xf32> -> vector<16x8xf32>
    %296 = vector.shape_cast %289 : vector<16x8xf32> to vector<2x8x8xf32>
    %297 = arith.truncf %296 : vector<2x8x8xf32> to vector<2x8x8xbf16>
    %298 = vector.shape_cast %292 : vector<16x8xf32> to vector<2x8x8xf32>
    %299 = arith.truncf %298 : vector<2x8x8xf32> to vector<2x8x8xbf16>
    %300 = vector.shape_cast %295 : vector<16x8xf32> to vector<2x8x8xf32>
    %301 = arith.truncf %300 : vector<2x8x8xf32> to vector<2x8x8xbf16>
    "tpu.trace_start"() <{level = 10 : i32, message = "bqd,bkd->bqk"}> : () -> ()
    %cst_131 = arith.constant dense<0.000000e+00> : vector<2x8x8xf32>
    %302 = tpu.matmul %297, %299, %cst_131 {dimension_numbers = #tpu.dot_dimension_numbers<[2], [2], [1], [1], [0, 0, 0, 1, 1, 1], [0], [0]>} : vector<2x8x8xbf16>, vector<2x8x8xbf16>, vector<2x8x8xf32> -> vector<2x8x8xf32>
    "tpu.trace_stop"() : () -> ()
    %303 = arith.addf %302, %24 : vector<2x8x8xf32>
    %cst_132 = arith.constant -1.000000e+09 : f32
    %304 = vector.broadcast %cst_132 : f32 to vector<2x8x8xf32>
    %305 = arith.select %12, %304, %303 : vector<2x8x8xi1>, vector<2x8x8xf32>
    %cst_133 = arith.constant dense<0xFF800000> : vector<2x8xf32>
    %306 = vector.multi_reduction <maximumf>, %305, %cst_133 [2] : vector<2x8x8xf32> to vector<2x8xf32>
    %307 = vector.shape_cast %306 : vector<2x8xf32> to vector<2x8x1xf32>
    %308 = vector.broadcast %307 : vector<2x8x1xf32> to vector<2x8x8xf32>
    %309 = arith.subf %305, %308 : vector<2x8x8xf32>
    %310 = math.exp %309 : vector<2x8x8xf32>
    %cst_134 = arith.constant dense<0.000000e+00> : vector<2x8xf32>
    %311 = vector.multi_reduction <add>, %310, %cst_134 [2] : vector<2x8x8xf32> to vector<2x8xf32>
    %312 = vector.shape_cast %311 : vector<2x8xf32> to vector<2x8x1xf32>
    %313 = vector.broadcast %312 : vector<2x8x1xf32> to vector<2x8x8xf32>
    %314 = arith.divf %310, %313 : vector<2x8x8xf32>
    %315 = arith.truncf %314 : vector<2x8x8xf32> to vector<2x8x8xbf16>
    "tpu.trace_start"() <{level = 10 : i32, message = "bqk,bkd->bqd"}> : () -> ()
    %cst_135 = arith.constant dense<0.000000e+00> : vector<2x8x8xf32>
    %316 = tpu.matmul %315, %301, %cst_135 {dimension_numbers = #tpu.dot_dimension_numbers<[2], [1], [1], [2], [0, 0, 0, 1, 1, 2], [0], [0]>} : vector<2x8x8xbf16>, vector<2x8x8xbf16>, vector<2x8x8xf32> -> vector<2x8x8xf32>
    "tpu.trace_stop"() : () -> ()
    %317 = vector.shape_cast %316 : vector<2x8x8xf32> to vector<16x8xf32>
    %318 = arith.truncf %317 : vector<16x8xf32> to vector<16x8xbf16>
    %319 = vector.extract_strided_slice %258 {offsets = [0, 0, 0], sizes = [1, 8, 32], strides = [1, 1, 1]} : vector<4x8x32xbf16> to vector<1x8x32xbf16>
    %320 = vector.shape_cast %319 : vector<1x8x32xbf16> to vector<8x32xbf16>
    %cst_136 = arith.constant dense<0.000000e+00> : vector<16x32xf32>
    %321 = tpu.matmul %318, %320, %cst_136 {dimension_numbers = #tpu.dot_dimension_numbers<[1], [0], [0], [1], [0, 0, 1, 1], [], []>} : vector<16x8xbf16>, vector<8x32xbf16>, vector<16x32xf32> -> vector<16x32xf32>
    %322 = arith.addf %286, %321 : vector<16x32xf32>
    %323 = vector.extract_strided_slice %252 {offsets = [1, 0, 0], sizes = [1, 32, 8], strides = [1, 1, 1]} : vector<4x32x8xbf16> to vector<1x32x8xbf16>
    %324 = vector.shape_cast %323 : vector<1x32x8xbf16> to vector<32x8xbf16>
    %cst_137 = arith.constant dense<0.000000e+00> : vector<16x8xf32>
    %325 = tpu.matmul %285, %324, %cst_137 {dimension_numbers = #tpu.dot_dimension_numbers<[1], [0], [0], [1], [0, 0, 1, 1], [], []>} : vector<16x32xbf16>, vector<32x8xbf16>, vector<16x8xf32> -> vector<16x8xf32>
    %326 = vector.extract_strided_slice %254 {offsets = [1, 0, 0], sizes = [1, 32, 8], strides = [1, 1, 1]} : vector<4x32x8xbf16> to vector<1x32x8xbf16>
    %327 = vector.shape_cast %326 : vector<1x32x8xbf16> to vector<32x8xbf16>
    %cst_138 = arith.constant dense<0.000000e+00> : vector<16x8xf32>
    %328 = tpu.matmul %285, %327, %cst_138 {dimension_numbers = #tpu.dot_dimension_numbers<[1], [0], [0], [1], [0, 0, 1, 1], [], []>} : vector<16x32xbf16>, vector<32x8xbf16>, vector<16x8xf32> -> vector<16x8xf32>
    %329 = vector.extract_strided_slice %256 {offsets = [1, 0, 0], sizes = [1, 32, 8], strides = [1, 1, 1]} : vector<4x32x8xbf16> to vector<1x32x8xbf16>
    %330 = vector.shape_cast %329 : vector<1x32x8xbf16> to vector<32x8xbf16>
    %cst_139 = arith.constant dense<0.000000e+00> : vector<16x8xf32>
    %331 = tpu.matmul %285, %330, %cst_139 {dimension_numbers = #tpu.dot_dimension_numbers<[1], [0], [0], [1], [0, 0, 1, 1], [], []>} : vector<16x32xbf16>, vector<32x8xbf16>, vector<16x8xf32> -> vector<16x8xf32>
    %332 = vector.shape_cast %325 : vector<16x8xf32> to vector<2x8x8xf32>
    %333 = arith.truncf %332 : vector<2x8x8xf32> to vector<2x8x8xbf16>
    %334 = vector.shape_cast %328 : vector<16x8xf32> to vector<2x8x8xf32>
    %335 = arith.truncf %334 : vector<2x8x8xf32> to vector<2x8x8xbf16>
    %336 = vector.shape_cast %331 : vector<16x8xf32> to vector<2x8x8xf32>
    %337 = arith.truncf %336 : vector<2x8x8xf32> to vector<2x8x8xbf16>
    "tpu.trace_start"() <{level = 10 : i32, message = "bqd,bkd->bqk"}> : () -> ()
    %cst_140 = arith.constant dense<0.000000e+00> : vector<2x8x8xf32>
    %338 = tpu.matmul %333, %335, %cst_140 {dimension_numbers = #tpu.dot_dimension_numbers<[2], [2], [1], [1], [0, 0, 0, 1, 1, 1], [0], [0]>} : vector<2x8x8xbf16>, vector<2x8x8xbf16>, vector<2x8x8xf32> -> vector<2x8x8xf32>
    "tpu.trace_stop"() : () -> ()
    %339 = arith.addf %338, %24 : vector<2x8x8xf32>
    %cst_141 = arith.constant -1.000000e+09 : f32
    %340 = vector.broadcast %cst_141 : f32 to vector<2x8x8xf32>
    %341 = arith.select %12, %340, %339 : vector<2x8x8xi1>, vector<2x8x8xf32>
    %cst_142 = arith.constant dense<0xFF800000> : vector<2x8xf32>
    %342 = vector.multi_reduction <maximumf>, %341, %cst_142 [2] : vector<2x8x8xf32> to vector<2x8xf32>
    %343 = vector.shape_cast %342 : vector<2x8xf32> to vector<2x8x1xf32>
    %344 = vector.broadcast %343 : vector<2x8x1xf32> to vector<2x8x8xf32>
    %345 = arith.subf %341, %344 : vector<2x8x8xf32>
    %346 = math.exp %345 : vector<2x8x8xf32>
    %cst_143 = arith.constant dense<0.000000e+00> : vector<2x8xf32>
    %347 = vector.multi_reduction <add>, %346, %cst_143 [2] : vector<2x8x8xf32> to vector<2x8xf32>
    %348 = vector.shape_cast %347 : vector<2x8xf32> to vector<2x8x1xf32>
    %349 = vector.broadcast %348 : vector<2x8x1xf32> to vector<2x8x8xf32>
    %350 = arith.divf %346, %349 : vector<2x8x8xf32>
    %351 = arith.truncf %350 : vector<2x8x8xf32> to vector<2x8x8xbf16>
    "tpu.trace_start"() <{level = 10 : i32, message = "bqk,bkd->bqd"}> : () -> ()
    %cst_144 = arith.constant dense<0.000000e+00> : vector<2x8x8xf32>
    %352 = tpu.matmul %351, %337, %cst_144 {dimension_numbers = #tpu.dot_dimension_numbers<[2], [1], [1], [2], [0, 0, 0, 1, 1, 2], [0], [0]>} : vector<2x8x8xbf16>, vector<2x8x8xbf16>, vector<2x8x8xf32> -> vector<2x8x8xf32>
    "tpu.trace_stop"() : () -> ()
    %353 = vector.shape_cast %352 : vector<2x8x8xf32> to vector<16x8xf32>
    %354 = arith.truncf %353 : vector<16x8xf32> to vector<16x8xbf16>
    %355 = vector.extract_strided_slice %258 {offsets = [1, 0, 0], sizes = [1, 8, 32], strides = [1, 1, 1]} : vector<4x8x32xbf16> to vector<1x8x32xbf16>
    %356 = vector.shape_cast %355 : vector<1x8x32xbf16> to vector<8x32xbf16>
    %cst_145 = arith.constant dense<0.000000e+00> : vector<16x32xf32>
    %357 = tpu.matmul %354, %356, %cst_145 {dimension_numbers = #tpu.dot_dimension_numbers<[1], [0], [0], [1], [0, 0, 1, 1], [], []>} : vector<16x8xbf16>, vector<8x32xbf16>, vector<16x32xf32> -> vector<16x32xf32>
    %358 = arith.addf %322, %357 : vector<16x32xf32>
    %359 = vector.extract_strided_slice %252 {offsets = [2, 0, 0], sizes = [1, 32, 8], strides = [1, 1, 1]} : vector<4x32x8xbf16> to vector<1x32x8xbf16>
    %360 = vector.shape_cast %359 : vector<1x32x8xbf16> to vector<32x8xbf16>
    %cst_146 = arith.constant dense<0.000000e+00> : vector<16x8xf32>
    %361 = tpu.matmul %285, %360, %cst_146 {dimension_numbers = #tpu.dot_dimension_numbers<[1], [0], [0], [1], [0, 0, 1, 1], [], []>} : vector<16x32xbf16>, vector<32x8xbf16>, vector<16x8xf32> -> vector<16x8xf32>
    %362 = vector.extract_strided_slice %254 {offsets = [2, 0, 0], sizes = [1, 32, 8], strides = [1, 1, 1]} : vector<4x32x8xbf16> to vector<1x32x8xbf16>
    %363 = vector.shape_cast %362 : vector<1x32x8xbf16> to vector<32x8xbf16>
    %cst_147 = arith.constant dense<0.000000e+00> : vector<16x8xf32>
    %364 = tpu.matmul %285, %363, %cst_147 {dimension_numbers = #tpu.dot_dimension_numbers<[1], [0], [0], [1], [0, 0, 1, 1], [], []>} : vector<16x32xbf16>, vector<32x8xbf16>, vector<16x8xf32> -> vector<16x8xf32>
    %365 = vector.extract_strided_slice %256 {offsets = [2, 0, 0], sizes = [1, 32, 8], strides = [1, 1, 1]} : vector<4x32x8xbf16> to vector<1x32x8xbf16>
    %366 = vector.shape_cast %365 : vector<1x32x8xbf16> to vector<32x8xbf16>
    %cst_148 = arith.constant dense<0.000000e+00> : vector<16x8xf32>
    %367 = tpu.matmul %285, %366, %cst_148 {dimension_numbers = #tpu.dot_dimension_numbers<[1], [0], [0], [1], [0, 0, 1, 1], [], []>} : vector<16x32xbf16>, vector<32x8xbf16>, vector<16x8xf32> -> vector<16x8xf32>
    %368 = vector.shape_cast %361 : vector<16x8xf32> to vector<2x8x8xf32>
    %369 = arith.truncf %368 : vector<2x8x8xf32> to vector<2x8x8xbf16>
    %370 = vector.shape_cast %364 : vector<16x8xf32> to vector<2x8x8xf32>
    %371 = arith.truncf %370 : vector<2x8x8xf32> to vector<2x8x8xbf16>
    %372 = vector.shape_cast %367 : vector<16x8xf32> to vector<2x8x8xf32>
    %373 = arith.truncf %372 : vector<2x8x8xf32> to vector<2x8x8xbf16>
    "tpu.trace_start"() <{level = 10 : i32, message = "bqd,bkd->bqk"}> : () -> ()
    %cst_149 = arith.constant dense<0.000000e+00> : vector<2x8x8xf32>
    %374 = tpu.matmul %369, %371, %cst_149 {dimension_numbers = #tpu.dot_dimension_numbers<[2], [2], [1], [1], [0, 0, 0, 1, 1, 1], [0], [0]>} : vector<2x8x8xbf16>, vector<2x8x8xbf16>, vector<2x8x8xf32> -> vector<2x8x8xf32>
    "tpu.trace_stop"() : () -> ()
    %375 = arith.addf %374, %24 : vector<2x8x8xf32>
    %cst_150 = arith.constant -1.000000e+09 : f32
    %376 = vector.broadcast %cst_150 : f32 to vector<2x8x8xf32>
    %377 = arith.select %12, %376, %375 : vector<2x8x8xi1>, vector<2x8x8xf32>
    %cst_151 = arith.constant dense<0xFF800000> : vector<2x8xf32>
    %378 = vector.multi_reduction <maximumf>, %377, %cst_151 [2] : vector<2x8x8xf32> to vector<2x8xf32>
    %379 = vector.shape_cast %378 : vector<2x8xf32> to vector<2x8x1xf32>
    %380 = vector.broadcast %379 : vector<2x8x1xf32> to vector<2x8x8xf32>
    %381 = arith.subf %377, %380 : vector<2x8x8xf32>
    %382 = math.exp %381 : vector<2x8x8xf32>
    %cst_152 = arith.constant dense<0.000000e+00> : vector<2x8xf32>
    %383 = vector.multi_reduction <add>, %382, %cst_152 [2] : vector<2x8x8xf32> to vector<2x8xf32>
    %384 = vector.shape_cast %383 : vector<2x8xf32> to vector<2x8x1xf32>
    %385 = vector.broadcast %384 : vector<2x8x1xf32> to vector<2x8x8xf32>
    %386 = arith.divf %382, %385 : vector<2x8x8xf32>
    %387 = arith.truncf %386 : vector<2x8x8xf32> to vector<2x8x8xbf16>
    "tpu.trace_start"() <{level = 10 : i32, message = "bqk,bkd->bqd"}> : () -> ()
    %cst_153 = arith.constant dense<0.000000e+00> : vector<2x8x8xf32>
    %388 = tpu.matmul %387, %373, %cst_153 {dimension_numbers = #tpu.dot_dimension_numbers<[2], [1], [1], [2], [0, 0, 0, 1, 1, 2], [0], [0]>} : vector<2x8x8xbf16>, vector<2x8x8xbf16>, vector<2x8x8xf32> -> vector<2x8x8xf32>
    "tpu.trace_stop"() : () -> ()
    %389 = vector.shape_cast %388 : vector<2x8x8xf32> to vector<16x8xf32>
    %390 = arith.truncf %389 : vector<16x8xf32> to vector<16x8xbf16>
    %391 = vector.extract_strided_slice %258 {offsets = [2, 0, 0], sizes = [1, 8, 32], strides = [1, 1, 1]} : vector<4x8x32xbf16> to vector<1x8x32xbf16>
    %392 = vector.shape_cast %391 : vector<1x8x32xbf16> to vector<8x32xbf16>
    %cst_154 = arith.constant dense<0.000000e+00> : vector<16x32xf32>
    %393 = tpu.matmul %390, %392, %cst_154 {dimension_numbers = #tpu.dot_dimension_numbers<[1], [0], [0], [1], [0, 0, 1, 1], [], []>} : vector<16x8xbf16>, vector<8x32xbf16>, vector<16x32xf32> -> vector<16x32xf32>
    %394 = arith.addf %358, %393 : vector<16x32xf32>
    %395 = vector.extract_strided_slice %252 {offsets = [3, 0, 0], sizes = [1, 32, 8], strides = [1, 1, 1]} : vector<4x32x8xbf16> to vector<1x32x8xbf16>
    %396 = vector.shape_cast %395 : vector<1x32x8xbf16> to vector<32x8xbf16>
    %cst_155 = arith.constant dense<0.000000e+00> : vector<16x8xf32>
    %397 = tpu.matmul %285, %396, %cst_155 {dimension_numbers = #tpu.dot_dimension_numbers<[1], [0], [0], [1], [0, 0, 1, 1], [], []>} : vector<16x32xbf16>, vector<32x8xbf16>, vector<16x8xf32> -> vector<16x8xf32>
    %398 = vector.extract_strided_slice %254 {offsets = [3, 0, 0], sizes = [1, 32, 8], strides = [1, 1, 1]} : vector<4x32x8xbf16> to vector<1x32x8xbf16>
    %399 = vector.shape_cast %398 : vector<1x32x8xbf16> to vector<32x8xbf16>
    %cst_156 = arith.constant dense<0.000000e+00> : vector<16x8xf32>
    %400 = tpu.matmul %285, %399, %cst_156 {dimension_numbers = #tpu.dot_dimension_numbers<[1], [0], [0], [1], [0, 0, 1, 1], [], []>} : vector<16x32xbf16>, vector<32x8xbf16>, vector<16x8xf32> -> vector<16x8xf32>
    %401 = vector.extract_strided_slice %256 {offsets = [3, 0, 0], sizes = [1, 32, 8], strides = [1, 1, 1]} : vector<4x32x8xbf16> to vector<1x32x8xbf16>
    %402 = vector.shape_cast %401 : vector<1x32x8xbf16> to vector<32x8xbf16>
    %cst_157 = arith.constant dense<0.000000e+00> : vector<16x8xf32>
    %403 = tpu.matmul %285, %402, %cst_157 {dimension_numbers = #tpu.dot_dimension_numbers<[1], [0], [0], [1], [0, 0, 1, 1], [], []>} : vector<16x32xbf16>, vector<32x8xbf16>, vector<16x8xf32> -> vector<16x8xf32>
    %404 = vector.shape_cast %397 : vector<16x8xf32> to vector<2x8x8xf32>
    %405 = arith.truncf %404 : vector<2x8x8xf32> to vector<2x8x8xbf16>
    %406 = vector.shape_cast %400 : vector<16x8xf32> to vector<2x8x8xf32>
    %407 = arith.truncf %406 : vector<2x8x8xf32> to vector<2x8x8xbf16>
    %408 = vector.shape_cast %403 : vector<16x8xf32> to vector<2x8x8xf32>
    %409 = arith.truncf %408 : vector<2x8x8xf32> to vector<2x8x8xbf16>
    "tpu.trace_start"() <{level = 10 : i32, message = "bqd,bkd->bqk"}> : () -> ()
    %cst_158 = arith.constant dense<0.000000e+00> : vector<2x8x8xf32>
    %410 = tpu.matmul %405, %407, %cst_158 {dimension_numbers = #tpu.dot_dimension_numbers<[2], [2], [1], [1], [0, 0, 0, 1, 1, 1], [0], [0]>} : vector<2x8x8xbf16>, vector<2x8x8xbf16>, vector<2x8x8xf32> -> vector<2x8x8xf32>
    "tpu.trace_stop"() : () -> ()
    %411 = arith.addf %410, %24 : vector<2x8x8xf32>
    %cst_159 = arith.constant -1.000000e+09 : f32
    %412 = vector.broadcast %cst_159 : f32 to vector<2x8x8xf32>
    %413 = arith.select %12, %412, %411 : vector<2x8x8xi1>, vector<2x8x8xf32>
    %cst_160 = arith.constant dense<0xFF800000> : vector<2x8xf32>
    %414 = vector.multi_reduction <maximumf>, %413, %cst_160 [2] : vector<2x8x8xf32> to vector<2x8xf32>
    %415 = vector.shape_cast %414 : vector<2x8xf32> to vector<2x8x1xf32>
    %416 = vector.broadcast %415 : vector<2x8x1xf32> to vector<2x8x8xf32>
    %417 = arith.subf %413, %416 : vector<2x8x8xf32>
    %418 = math.exp %417 : vector<2x8x8xf32>
    %cst_161 = arith.constant dense<0.000000e+00> : vector<2x8xf32>
    %419 = vector.multi_reduction <add>, %418, %cst_161 [2] : vector<2x8x8xf32> to vector<2x8xf32>
    %420 = vector.shape_cast %419 : vector<2x8xf32> to vector<2x8x1xf32>
    %421 = vector.broadcast %420 : vector<2x8x1xf32> to vector<2x8x8xf32>
    %422 = arith.divf %418, %421 : vector<2x8x8xf32>
    %423 = arith.truncf %422 : vector<2x8x8xf32> to vector<2x8x8xbf16>
    "tpu.trace_start"() <{level = 10 : i32, message = "bqk,bkd->bqd"}> : () -> ()
    %cst_162 = arith.constant dense<0.000000e+00> : vector<2x8x8xf32>
    %424 = tpu.matmul %423, %409, %cst_162 {dimension_numbers = #tpu.dot_dimension_numbers<[2], [1], [1], [2], [0, 0, 0, 1, 1, 2], [0], [0]>} : vector<2x8x8xbf16>, vector<2x8x8xbf16>, vector<2x8x8xf32> -> vector<2x8x8xf32>
    "tpu.trace_stop"() : () -> ()
    %425 = vector.shape_cast %424 : vector<2x8x8xf32> to vector<16x8xf32>
    %426 = arith.truncf %425 : vector<16x8xf32> to vector<16x8xbf16>
    %427 = vector.extract_strided_slice %258 {offsets = [3, 0, 0], sizes = [1, 8, 32], strides = [1, 1, 1]} : vector<4x8x32xbf16> to vector<1x8x32xbf16>
    %428 = vector.shape_cast %427 : vector<1x8x32xbf16> to vector<8x32xbf16>
    %cst_163 = arith.constant dense<0.000000e+00> : vector<16x32xf32>
    %429 = tpu.matmul %426, %428, %cst_163 {dimension_numbers = #tpu.dot_dimension_numbers<[1], [0], [0], [1], [0, 0, 1, 1], [], []>} : vector<16x8xbf16>, vector<8x32xbf16>, vector<16x32xf32> -> vector<16x32xf32>
    %430 = arith.addf %394, %429 : vector<16x32xf32>
    %431 = arith.addf %250, %430 : vector<16x32xf32>
    %c1_164 = arith.constant 1 : index
    %c0_165 = arith.constant 0 : index
    %c0_166 = arith.constant 0 : index
    %432 = vector.load %arg10[%c1_164, %c0_165, %c0_166] : memref<2x1x32xf32, #tpu.memory_space<vmem>>, vector<1x1x32xf32>
    %433 = vector.shape_cast %432 : vector<1x1x32xf32> to vector<1x32xf32>
    %c1_167 = arith.constant 1 : index
    %c0_168 = arith.constant 0 : index
    %c0_169 = arith.constant 0 : index
    %434 = vector.load %arg11[%c1_167, %c0_168, %c0_169] : memref<2x1x32xf32, #tpu.memory_space<vmem>>, vector<1x1x32xf32>
    %435 = vector.shape_cast %434 : vector<1x1x32xf32> to vector<1x32xf32>
    %cst_170 = arith.constant dense<0.000000e+00> : vector<16xf32>
    %436 = vector.multi_reduction <add>, %431, %cst_170 [1] : vector<16x32xf32> to vector<16xf32>
    %437 = vector.shape_cast %436 : vector<16xf32> to vector<16x1xf32>
    %cst_171 = arith.constant 3.200000e+01 : f32
    %438 = vector.broadcast %cst_171 : f32 to vector<16x1xf32>
    %439 = arith.divf %437, %438 : vector<16x1xf32>
    %440 = vector.broadcast %439 : vector<16x1xf32> to vector<16x32xf32>
    %441 = arith.subf %431, %440 : vector<16x32xf32>
    %442 = arith.mulf %441, %441 : vector<16x32xf32>
    %cst_172 = arith.constant dense<0.000000e+00> : vector<16xf32>
    %443 = vector.multi_reduction <add>, %442, %cst_172 [1] : vector<16x32xf32> to vector<16xf32>
    %444 = vector.shape_cast %443 : vector<16xf32> to vector<16x1xf32>
    %cst_173 = arith.constant 3.200000e+01 : f32
    %445 = vector.broadcast %cst_173 : f32 to vector<16x1xf32>
    %446 = arith.divf %444, %445 : vector<16x1xf32>
    %447 = vector.broadcast %439 : vector<16x1xf32> to vector<16x32xf32>
    %448 = arith.subf %431, %447 : vector<16x32xf32>
    %cst_174 = arith.constant 9.99999974E-6 : f32
    %449 = vector.broadcast %cst_174 : f32 to vector<16x1xf32>
    %450 = arith.addf %446, %449 : vector<16x1xf32>
    %451 = math.rsqrt %450 : vector<16x1xf32>
    %452 = vector.broadcast %451 : vector<16x1xf32> to vector<16x32xf32>
    %453 = arith.mulf %448, %452 : vector<16x32xf32>
    %454 = vector.broadcast %433 : vector<1x32xf32> to vector<16x32xf32>
    %455 = arith.mulf %453, %454 : vector<16x32xf32>
    %456 = vector.broadcast %435 : vector<1x32xf32> to vector<16x32xf32>
    %457 = arith.addf %455, %456 : vector<16x32xf32>
    %458 = arith.truncf %457 : vector<16x32xf32> to vector<16x32xbf16>
    %c1_175 = arith.constant 1 : index
    %c0_176 = arith.constant 0 : index
    %c0_177 = arith.constant 0 : index
    %459 = vector.load %arg12[%c1_175, %c0_176, %c0_177] : memref<2x32x64xbf16, #tpu.memory_space<vmem>>, vector<1x32x64xbf16>
    %460 = vector.shape_cast %459 : vector<1x32x64xbf16> to vector<32x64xbf16>
    %cst_178 = arith.constant dense<0.000000e+00> : vector<16x64xf32>
    %461 = tpu.matmul %458, %460, %cst_178 {dimension_numbers = #tpu.dot_dimension_numbers<[1], [0], [0], [1], [0, 0, 1, 1], [], []>} : vector<16x32xbf16>, vector<32x64xbf16>, vector<16x64xf32> -> vector<16x64xf32>
    %c1_179 = arith.constant 1 : index
    %c0_180 = arith.constant 0 : index
    %c0_181 = arith.constant 0 : index
    %462 = vector.load %arg13[%c1_179, %c0_180, %c0_181] : memref<2x1x64xf32, #tpu.memory_space<vmem>>, vector<1x1x64xf32>
    %463 = vector.shape_cast %462 : vector<1x1x64xf32> to vector<1x64xf32>
    %464 = vector.broadcast %463 : vector<1x64xf32> to vector<16x64xf32>
    %465 = arith.addf %461, %464 : vector<16x64xf32>
    %cst_182 = arith.constant 0.000000e+00 : f32
    %466 = vector.broadcast %cst_182 : f32 to vector<16x64xf32>
    %467 = arith.maximumf %465, %466 : vector<16x64xf32>
    %468 = arith.truncf %467 : vector<16x64xf32> to vector<16x64xbf16>
    %c1_183 = arith.constant 1 : index
    %c0_184 = arith.constant 0 : index
    %c0_185 = arith.constant 0 : index
    %469 = vector.load %arg14[%c1_183, %c0_184, %c0_185] : memref<2x64x32xbf16, #tpu.memory_space<vmem>>, vector<1x64x32xbf16>
    %470 = vector.shape_cast %469 : vector<1x64x32xbf16> to vector<64x32xbf16>
    %cst_186 = arith.constant dense<0.000000e+00> : vector<16x32xf32>
    %471 = tpu.matmul %468, %470, %cst_186 {dimension_numbers = #tpu.dot_dimension_numbers<[1], [0], [0], [1], [0, 0, 1, 1], [], []>} : vector<16x64xbf16>, vector<64x32xbf16>, vector<16x32xf32> -> vector<16x32xf32>
    %c1_187 = arith.constant 1 : index
    %c0_188 = arith.constant 0 : index
    %c0_189 = arith.constant 0 : index
    %472 = vector.load %arg15[%c1_187, %c0_188, %c0_189] : memref<2x1x32xf32, #tpu.memory_space<vmem>>, vector<1x1x32xf32>
    %473 = vector.shape_cast %472 : vector<1x1x32xf32> to vector<1x32xf32>
    %474 = vector.broadcast %473 : vector<1x32xf32> to vector<16x32xf32>
    %475 = arith.addf %471, %474 : vector<16x32xf32>
    %476 = arith.addf %431, %475 : vector<16x32xf32>
    %477 = vector.shape_cast %476 : vector<16x32xf32> to vector<2x8x32xf32>
    %cst_190 = arith.constant dense<0.000000e+00> : vector<2x32xf32>
    %478 = vector.multi_reduction <add>, %477, %cst_190 [1] : vector<2x8x32xf32> to vector<2x32xf32>
    %cst_191 = arith.constant 8.000000e+00 : f32
    %479 = vector.broadcast %cst_191 : f32 to vector<2x32xf32>
    %480 = arith.divf %478, %479 : vector<2x32xf32>
    %c0_192 = arith.constant 0 : index
    %c0_193 = arith.constant 0 : index
    %481 = vector.load %arg16[%c0_192, %c0_193] : memref<1x32xf32, #tpu.memory_space<vmem>>, vector<1x32xf32>
    %c0_194 = arith.constant 0 : index
    %c0_195 = arith.constant 0 : index
    %482 = vector.load %arg17[%c0_194, %c0_195] : memref<1x32xf32, #tpu.memory_space<vmem>>, vector<1x32xf32>
    %cst_196 = arith.constant dense<0.000000e+00> : vector<2xf32>
    %483 = vector.multi_reduction <add>, %480, %cst_196 [1] : vector<2x32xf32> to vector<2xf32>
    %484 = vector.shape_cast %483 : vector<2xf32> to vector<2x1xf32>
    %cst_197 = arith.constant 3.200000e+01 : f32
    %485 = vector.broadcast %cst_197 : f32 to vector<2x1xf32>
    %486 = arith.divf %484, %485 : vector<2x1xf32>
    %487 = vector.broadcast %486 : vector<2x1xf32> to vector<2x32xf32>
    %488 = arith.subf %480, %487 : vector<2x32xf32>
    %489 = arith.mulf %488, %488 : vector<2x32xf32>
    %cst_198 = arith.constant dense<0.000000e+00> : vector<2xf32>
    %490 = vector.multi_reduction <add>, %489, %cst_198 [1] : vector<2x32xf32> to vector<2xf32>
    %491 = vector.shape_cast %490 : vector<2xf32> to vector<2x1xf32>
    %cst_199 = arith.constant 3.200000e+01 : f32
    %492 = vector.broadcast %cst_199 : f32 to vector<2x1xf32>
    %493 = arith.divf %491, %492 : vector<2x1xf32>
    %494 = vector.broadcast %486 : vector<2x1xf32> to vector<2x32xf32>
    %495 = arith.subf %480, %494 : vector<2x32xf32>
    %cst_200 = arith.constant 9.99999974E-6 : f32
    %496 = vector.broadcast %cst_200 : f32 to vector<2x1xf32>
    %497 = arith.addf %493, %496 : vector<2x1xf32>
    %498 = math.rsqrt %497 : vector<2x1xf32>
    %499 = vector.broadcast %498 : vector<2x1xf32> to vector<2x32xf32>
    %500 = arith.mulf %495, %499 : vector<2x32xf32>
    %501 = vector.broadcast %481 : vector<1x32xf32> to vector<2x32xf32>
    %502 = arith.mulf %500, %501 : vector<2x32xf32>
    %503 = vector.broadcast %482 : vector<1x32xf32> to vector<2x32xf32>
    %504 = arith.addf %502, %503 : vector<2x32xf32>
    %505 = vector.shape_cast %504 : vector<2x32xf32> to vector<2x1x32xf32>
    %c0_201 = arith.constant 0 : index
    %c0_202 = arith.constant 0 : index
    %c0_203 = arith.constant 0 : index
    %506 = vector.load %arg18[%c0_201, %c0_202, %c0_203] : memref<2x1x32xf32, #tpu.memory_space<vmem>>, vector<2x1x32xf32>
    tpu.vector_store %arg18[%c0_201, %c0_202, %c0_203], %505 {strides = array<i32>} : memref<2x1x32xf32, #tpu.memory_space<vmem>>, vector<2x1x32xf32>,
    return
  }
  func.func @transform_0(%arg0: i32) -> (i32, i32, i32) {
    %c0_i32 = arith.constant 0 : i32
    %c0_i32_0 = arith.constant 0 : i32
    %c0_i32_1 = arith.constant 0 : i32
    return %arg0, %c0_i32, %c0_i32_0 : i32, i32, i32
  }
  func.func @transform_1(%arg0: i32) -> (i32, i32, i32) {
    %c0_i32 = arith.constant 0 : i32
    %c0_i32_0 = arith.constant 0 : i32
    %c0_i32_1 = arith.constant 0 : i32
    return %arg0, %c0_i32, %c0_i32_0 : i32, i32, i32
  }
  func.func @transform_2(%arg0: i32) -> (i32, i32, i32) {
    %c0_i32 = arith.constant 0 : i32
    %c0_i32_0 = arith.constant 0 : i32
    %c0_i32_1 = arith.constant 0 : i32
    return %arg0, %c0_i32, %c0_i32_0 : i32, i32, i32
  }
  func.func @transform_3(%arg0: i32) -> (i32, i32, i32, i32) {
    %c0_i32 = arith.constant 0 : i32
    %c0_i32_0 = arith.constant 0 : i32
    %c0_i32_1 = arith.constant 0 : i32
    %c0_i32_2 = arith.constant 0 : i32
    %c0_i32_3 = arith.constant 0 : i32
    return %c0_i32, %c0_i32_0, %c0_i32_1, %c0_i32_2 : i32, i32, i32, i32
  }
  func.func @transform_4(%arg0: i32) -> (i32, i32, i32, i32) {
    %c0_i32 = arith.constant 0 : i32
    %c0_i32_0 = arith.constant 0 : i32
    %c0_i32_1 = arith.constant 0 : i32
    %c0_i32_2 = arith.constant 0 : i32
    %c0_i32_3 = arith.constant 0 : i32
    return %c0_i32, %c0_i32_0, %c0_i32_1, %c0_i32_2 : i32, i32, i32, i32
  }
  func.func @transform_5(%arg0: i32) -> (i32, i32, i32, i32) {
    %c0_i32 = arith.constant 0 : i32
    %c0_i32_0 = arith.constant 0 : i32
    %c0_i32_1 = arith.constant 0 : i32
    %c0_i32_2 = arith.constant 0 : i32
    %c0_i32_3 = arith.constant 0 : i32
    return %c0_i32, %c0_i32_0, %c0_i32_1, %c0_i32_2 : i32, i32, i32, i32
  }
  func.func @transform_6(%arg0: i32) -> (i32, i32, i32, i32) {
    %c0_i32 = arith.constant 0 : i32
    %c0_i32_0 = arith.constant 0 : i32
    %c0_i32_1 = arith.constant 0 : i32
    %c0_i32_2 = arith.constant 0 : i32
    %c0_i32_3 = arith.constant 0 : i32
    return %c0_i32, %c0_i32_0, %c0_i32_1, %c0_i32_2 : i32, i32, i32, i32
  }
  func.func @transform_7(%arg0: i32) -> (i32, i32, i32) {
    %c0_i32 = arith.constant 0 : i32
    %c0_i32_0 = arith.constant 0 : i32
    %c0_i32_1 = arith.constant 0 : i32
    %c0_i32_2 = arith.constant 0 : i32
    return %c0_i32, %c0_i32_0, %c0_i32_1 : i32, i32, i32
  }
  func.func @transform_8(%arg0: i32) -> (i32, i32, i32) {
    %c0_i32 = arith.constant 0 : i32
    %c0_i32_0 = arith.constant 0 : i32
    %c0_i32_1 = arith.constant 0 : i32
    %c0_i32_2 = arith.constant 0 : i32
    return %c0_i32, %c0_i32_0, %c0_i32_1 : i32, i32, i32
  }
  func.func @transform_9(%arg0: i32) -> (i32, i32, i32) {
    %c0_i32 = arith.constant 0 : i32
    %c0_i32_0 = arith.constant 0 : i32
    %c0_i32_1 = arith.constant 0 : i32
    %c0_i32_2 = arith.constant 0 : i32
    return %c0_i32, %c0_i32_0, %c0_i32_1 : i32, i32, i32
  }
  func.func @transform_10(%arg0: i32) -> (i32, i32, i32) {
    %c0_i32 = arith.constant 0 : i32
    %c0_i32_0 = arith.constant 0 : i32
    %c0_i32_1 = arith.constant 0 : i32
    %c0_i32_2 = arith.constant 0 : i32
    return %c0_i32, %c0_i32_0, %c0_i32_1 : i32, i32, i32
  }
  func.func @transform_11(%arg0: i32) -> (i32, i32, i32) {
    %c0_i32 = arith.constant 0 : i32
    %c0_i32_0 = arith.constant 0 : i32
    %c0_i32_1 = arith.constant 0 : i32
    %c0_i32_2 = arith.constant 0 : i32
    return %c0_i32, %c0_i32_0, %c0_i32_1 : i32, i32, i32
  }
  func.func @transform_12(%arg0: i32) -> (i32, i32, i32) {
    %c0_i32 = arith.constant 0 : i32
    %c0_i32_0 = arith.constant 0 : i32
    %c0_i32_1 = arith.constant 0 : i32
    %c0_i32_2 = arith.constant 0 : i32
    return %c0_i32, %c0_i32_0, %c0_i32_1 : i32, i32, i32
  }
  func.func @transform_13(%arg0: i32) -> (i32, i32, i32) {
    %c0_i32 = arith.constant 0 : i32
    %c0_i32_0 = arith.constant 0 : i32
    %c0_i32_1 = arith.constant 0 : i32
    %c0_i32_2 = arith.constant 0 : i32
    return %c0_i32, %c0_i32_0, %c0_i32_1 : i32, i32, i32
  }
  func.func @transform_14(%arg0: i32) -> (i32, i32, i32) {
    %c0_i32 = arith.constant 0 : i32
    %c0_i32_0 = arith.constant 0 : i32
    %c0_i32_1 = arith.constant 0 : i32
    %c0_i32_2 = arith.constant 0 : i32
    return %c0_i32, %c0_i32_0, %c0_i32_1 : i32, i32, i32
  }
  func.func @transform_15(%arg0: i32) -> (i32, i32) {
    %c0_i32 = arith.constant 0 : i32
    %c0_i32_0 = arith.constant 0 : i32
    %c0_i32_1 = arith.constant 0 : i32
    return %c0_i32, %c0_i32_0 : i32, i32
  }
  func.func @transform_16(%arg0: i32) -> (i32, i32) {
    %c0_i32 = arith.constant 0 : i32
    %c0_i32_0 = arith.constant 0 : i32
    %c0_i32_1 = arith.constant 0 : i32
    return %c0_i32, %c0_i32_0 : i32, i32
  }
  func.func @transform_17(%arg0: i32) -> (i32, i32, i32) {
    %c0_i32 = arith.constant 0 : i32
    %c0_i32_0 = arith.constant 0 : i32
    %c0_i32_1 = arith.constant 0 : i32
    return %arg0, %c0_i32, %c0_i32_0 : i32, i32, i32
  }
}

</mosaic_0001>

<llo_original>
// kernel: tpu_custom_call.1
$region0: #{tpu_custom_call.1}
  #allocation0 [shape = 'u32[]', space=smem, size = 0x4, offset = 0x4, fixed_abs, tag = 'smem constant byte address 0x4 - core index']
  #allocation1 [shape = 'u32[144,128]{1,0:T(1,128)}', space=vmem, size = 0x12000, scoped, tag = 'internal scratch']
  %s0 = inlined_call_operand.vmem [shape: f32[2,8,32], index: 0, kind: input, shape index: {}]
  %s1 = inlined_call_operand.vmem [shape: f32[2,8,8], index: 1, kind: input, shape index: {}]
  %s2 = inlined_call_operand.vmem [shape: f32[2,1,8], index: 2, kind: input, shape index: {}]
  %s3 = inlined_call_operand.vmem [shape: bf16[2,4,32,8], index: 3, kind: input, shape index: {}]
  %s4 = inlined_call_operand.vmem [shape: bf16[2,4,32,8], index: 4, kind: input, shape index: {}]
  %s5 = inlined_call_operand.vmem [shape: bf16[2,4,32,8], index: 5, kind: input, shape index: {}]
  %s6 = inlined_call_operand.vmem [shape: bf16[2,4,8,32], index: 6, kind: input, shape index: {}]
  %s7 = inlined_call_operand.vmem [shape: f32[2,1,32], index: 7, kind: input, shape index: {}]
  %s8 = inlined_call_operand.vmem [shape: f32[2,1,32], index: 8, kind: input, shape index: {}]
  %s9 = inlined_call_operand.vmem [shape: f32[2,1,32], index: 9, kind: input, shape index: {}]
  %s10 = inlined_call_operand.vmem [shape: f32[2,1,32], index: 10, kind: input, shape index: {}]
  %s11 = inlined_call_operand.vmem [shape: bf16[2,32,64], index: 11, kind: input, shape index: {}]
  %s12 = inlined_call_operand.vmem [shape: f32[2,1,64], index: 12, kind: input, shape index: {}]
  %s13 = inlined_call_operand.vmem [shape: bf16[2,64,32], index: 13, kind: input, shape index: {}]
  %s14 = inlined_call_operand.vmem [shape: f32[2,1,32], index: 14, kind: input, shape index: {}]
  %s15 = inlined_call_operand.vmem [shape: f32[1,32], index: 15, kind: input, shape index: {}]
  %s16 = inlined_call_operand.vmem [shape: f32[1,32], index: 16, kind: input, shape index: {}]
  %s17 = inlined_call_operand.hbm [shape: f32[2,1,32], index: 17, kind: output, shape index: {}]
  %s18 = sld [smem:[#allocation0]]
  $region78: #{tpu_custom_call.1} parent=0
    _
  %s20 = ssub.s32 1, %s18
  %s21 = scalar_select 0, %s20, %s18
  $region1: #{tpu_custom_call.1} parent=0
    #allocation2 [shape = 'u8[1024]{0}', space=vmem, size = 0x400, scoped, tag = 'output window, operand 0, single buffered']
    #allocation3 [shape = 's32[1]{0}', space=sflag, size = 0x4, scoped, tag = 'scoped memory for tpu_custom_call.1']
    %22 = vsyncpa [#allocation3], 0
    // Predicated region
    $region2: #{tpu_custom_call.1} parent=1 // pred_check
      _
    $region3: #{tpu_custom_call.1} parent=1 // pred_check_branch
      %24 = sbr.rel (0) target = $region5
    $region4: #{tpu_custom_call.1} parent=1 // pred_region
      _
    $region5: #{tpu_custom_call.1} parent=1 // pred_fallthru
      _
    // Predicated region
    $region6: #{tpu_custom_call.1} parent=1 // pred_check
      _
    $region7: #{tpu_custom_call.1} parent=1 // pred_check_branch
      %26 = sbr.rel (0) target = $region9
    $region8: #{tpu_custom_call.1} parent=1 // pred_region
      _
    $region9: #{tpu_custom_call.1} parent=1 // pred_fallthru
      _
    // Predicated region
    $region10: #{tpu_custom_call.1} parent=1 // pred_check
      _
    $region11: #{tpu_custom_call.1} parent=1 // pred_check_branch
      %28 = sbr.rel (0) target = $region13
    $region12: #{tpu_custom_call.1} parent=1 // pred_region
      _
    $region13: #{tpu_custom_call.1} parent=1 // pred_fallthru
      _
    // Predicated region
    $region14: #{tpu_custom_call.1} parent=1 // pred_check
      _
    $region15: #{tpu_custom_call.1} parent=1 // pred_check_branch
      %30 = sbr.rel (0) target = $region17
    $region16: #{tpu_custom_call.1} parent=1 // pred_region
      _
    $region17: #{tpu_custom_call.1} parent=1 // pred_fallthru
      _
    // Predicated region
    $region18: #{tpu_custom_call.1} parent=1 // pred_check
      _
    $region19: #{tpu_custom_call.1} parent=1 // pred_check_branch
      %32 = sbr.rel (0) target = $region21
    $region20: #{tpu_custom_call.1} parent=1 // pred_region
      _
    $region21: #{tpu_custom_call.1} parent=1 // pred_fallthru
      _
    // Predicated region
    $region22: #{tpu_custom_call.1} parent=1 // pred_check
      _
    $region23: #{tpu_custom_call.1} parent=1 // pred_check_branch
      %34 = sbr.rel (0) target = $region25
    $region24: #{tpu_custom_call.1} parent=1 // pred_region
      _
    $region25: #{tpu_custom_call.1} parent=1 // pred_fallthru
      _
    // Predicated region
    $region26: #{tpu_custom_call.1} parent=1 // pred_check
      _
    $region27: #{tpu_custom_call.1} parent=1 // pred_check_branch
      %36 = sbr.rel (0) target = $region29
    $region28: #{tpu_custom_call.1} parent=1 // pred_region
      _
    $region29: #{tpu_custom_call.1} parent=1 // pred_fallthru
      _
    // Predicated region
    $region30: #{tpu_custom_call.1} parent=1 // pred_check
      _
    $region31: #{tpu_custom_call.1} parent=1 // pred_check_branch
      %38 = sbr.rel (0) target = $region33
    $region32: #{tpu_custom_call.1} parent=1 // pred_region
      _
    $region33: #{tpu_custom_call.1} parent=1 // pred_fallthru
      _
    // Predicated region
    $region34: #{tpu_custom_call.1} parent=1 // pred_check
      _
    $region35: #{tpu_custom_call.1} parent=1 // pred_check_branch
      %40 = sbr.rel (0) target = $region37
    $region36: #{tpu_custom_call.1} parent=1 // pred_region
      _
    $region37: #{tpu_custom_call.1} parent=1 // pred_fallthru
      _
    // Predicated region
    $region38: #{tpu_custom_call.1} parent=1 // pred_check
      _
    $region39: #{tpu_custom_call.1} parent=1 // pred_check_branch
      %42 = sbr.rel (0) target = $region41
    $region40: #{tpu_custom_call.1} parent=1 // pred_region
      _
    $region41: #{tpu_custom_call.1} parent=1 // pred_fallthru
      _
    // Predicated region
    $region42: #{tpu_custom_call.1} parent=1 // pred_check
      _
    $region43: #{tpu_custom_call.1} parent=1 // pred_check_branch
      %44 = sbr.rel (0) target = $region45
    $region44: #{tpu_custom_call.1} parent=1 // pred_region
      _
    $region45: #{tpu_custom_call.1} parent=1 // pred_fallthru
      _
    // Predicated region
    $region46: #{tpu_custom_call.1} parent=1 // pred_check
      _
    $region47: #{tpu_custom_call.1} parent=1 // pred_check_branch
      %46 = sbr.rel (0) target = $region49
    $region48: #{tpu_custom_call.1} parent=1 // pred_region
      _
    $region49: #{tpu_custom_call.1} parent=1 // pred_fallthru
      _
    // Predicated region
    $region50: #{tpu_custom_call.1} parent=1 // pred_check
      _
    $region51: #{tpu_custom_call.1} parent=1 // pred_check_branch
      %48 = sbr.rel (0) target = $region53
    $region52: #{tpu_custom_call.1} parent=1 // pred_region
      _
    $region53: #{tpu_custom_call.1} parent=1 // pred_fallthru
      _
    // Predicated region
    $region54: #{tpu_custom_call.1} parent=1 // pred_check
      _
    $region55: #{tpu_custom_call.1} parent=1 // pred_check_branch
      %50 = sbr.rel (0) target = $region57
    $region56: #{tpu_custom_call.1} parent=1 // pred_region
      _
    $region57: #{tpu_custom_call.1} parent=1 // pred_fallthru
      _
    // Predicated region
    $region58: #{tpu_custom_call.1} parent=1 // pred_check
      _
    $region59: #{tpu_custom_call.1} parent=1 // pred_check_branch
      %52 = sbr.rel (0) target = $region61
    $region60: #{tpu_custom_call.1} parent=1 // pred_region
      _
    $region61: #{tpu_custom_call.1} parent=1 // pred_fallthru
      _
    // Predicated region
    $region62: #{tpu_custom_call.1} parent=1 // pred_check
      _
    $region63: #{tpu_custom_call.1} parent=1 // pred_check_branch
      %54 = sbr.rel (0) target = $region65
    $region64: #{tpu_custom_call.1} parent=1 // pred_region
      _
    $region65: #{tpu_custom_call.1} parent=1 // pred_fallthru
      _
    // Predicated region
    $region66: #{tpu_custom_call.1} parent=1 // pred_check
      _
    $region67: #{tpu_custom_call.1} parent=1 // pred_check_branch
      %56 = sbr.rel (0) target = $region69
    $region68: #{tpu_custom_call.1} parent=1 // pred_region
      _
    $region69: #{tpu_custom_call.1} parent=1 // pred_fallthru
      _
    %v58 = vld [vmem:[%s0] sm:$0xff]
    %v59 = vld [vmem:[%s0 + $0x8] sm:$0xff]
    %v60 = vld [vmem:[%s2] sm:$0x1]
    %v61 = vld [vmem:[%s2 + $0x1] sm:$0x1]
    %vm62 = vcmp.eq.f32.partialorder %v60, 0.0
    %vm63 = vcmp.eq.f32.partialorder %v61, 0.0
    %v64 = vsel %vm62, 1, 0
    %v65 = vsel %vm63, 1, 0
    %v66 = vlaneseq
    %v67 = vshrl.u32 %v66, 7
    %v68 = vsub.s32 0, %v67
    %v69 = vrot.slane %v64, %v68
    %v70 = vlaneseq
    %v71 = vshrl.u32 %v70, 7
    %v72 = vsub.s32 0, %v71
    %v73 = vrot.slane %v65, %v72
    %vm74 = vcmp.eq.s32.totalorder %v69, 1
    %vm75 = vcmp.eq.s32.totalorder %v73, 1
    %v76 = vlaneseq
    %v77 = vshrl.u32 %v76, 7
    %v78 = vlaneseq
    %v79 = vand.u32 %v78, 127
    %vm80 = vcmp.gt.s32.totalorder %v79, %v77
    %v81 = vsel %vm80, 1, 0
    %vm82 = vcmp.eq.s32.totalorder %v81, 1
    %vm83 = vmor %vm74, %vm82
    %vm84 = vmor %vm75, %vm82
    %v85 = vld [vmem:[%s1] sm:$0xff]
    %v86 = vld [vmem:[%s1 + $0x8] sm:$0xff]
    %v87 = vsel %vm83, -1e+09, %v85
    %v88 = vsel %vm84, -1e+09, %v86
    %vm89 = vcmask 64512
    %v90 = vsel %vm89, %v87, -inf
    %91 = vmax.xlane.f32.xlu0 %v90
    %v92 = vpop.xlane.xlu0 %91
    %v93 = vsel %vm89, %v88, -inf
    %94 = vmax.xlane.f32.xlu0 %v93
    %v95 = vpop.xlane.xlu0 %94
    %v96 = vsub.f32 %v87, %v92
    %v97 = vsub.f32 %v88, %v95
    %v98 = vmul.f32 %v96, 1.442695
    %v99 = vpow.pop %v98
    %v100 = vmul.f32 %v97, 1.442695
    %v101 = vpow.pop %v100
    %v102 = vsel %vm89, %v99, 0.0
    %103 = vadd.xlane.f32.xlu0 %v102
    %v104 = vpop.xlane.xlu0 %103
    %v105 = vsel %vm89, %v101, 0.0
    %106 = vadd.xlane.f32.xlu0 %v105
    %v107 = vpop.xlane.xlu0 %106
    %v108 = vrcp.pop %v104
    %v109 = vmul.f32 %v99, %v108
    %v110 = vrcp.pop %v107
    %v111 = vmul.f32 %v101, %v110
    %v112 = vld [vmem:[%s3] sm:$0xf]
    %v113 = vld [vmem:[%s3 + $0x4] sm:$0xf]
    %v114 = vld [vmem:[%s3 + $0x8] sm:$0xf]
    %v115 = vld [vmem:[%s3 + $0xc] sm:$0xf]
    %v116 = vld [vmem:[%s3 + $0x10] sm:$0xf]
    %v117 = vld [vmem:[%s3 + $0x14] sm:$0xf]
    %v118 = vld [vmem:[%s3 + $0x18] sm:$0xf]
    %v119 = vld [vmem:[%s3 + $0x1c] sm:$0xf]
    %v120 = vld [vmem:[%s3 + $0x20] sm:$0xf]
    %v121 = vld [vmem:[%s3 + $0x24] sm:$0xf]
    %v122 = vld [vmem:[%s3 + $0x28] sm:$0xf]
    %v123 = vld [vmem:[%s3 + $0x2c] sm:$0xf]
    %v124 = vld [vmem:[%s3 + $0x30] sm:$0xf]
    %v125 = vld [vmem:[%s3 + $0x34] sm:$0xf]
    %v126 = vld [vmem:[%s3 + $0x38] sm:$0xf]
    %v127 = vld [vmem:[%s3 + $0x3c] sm:$0xf]
    %v128 = vld [vmem:[%s4] sm:$0xf]
    %v129 = vld [vmem:[%s4 + $0x4] sm:$0xf]
    %v130 = vld [vmem:[%s4 + $0x8] sm:$0xf]
    %v131 = vld [vmem:[%s4 + $0xc] sm:$0xf]
    %v132 = vld [vmem:[%s4 + $0x10] sm:$0xf]
    %v133 = vld [vmem:[%s4 + $0x14] sm:$0xf]
    %v134 = vld [vmem:[%s4 + $0x18] sm:$0xf]
    %v135 = vld [vmem:[%s4 + $0x1c] sm:$0xf]
    %v136 = vld [vmem:[%s4 + $0x20] sm:$0xf]
    %v137 = vld [vmem:[%s4 + $0x24] sm:$0xf]
    %v138 = vld [vmem:[%s4 + $0x28] sm:$0xf]
    %v139 = vld [vmem:[%s4 + $0x2c] sm:$0xf]
    %v140 = vld [vmem:[%s4 + $0x30] sm:$0xf]
    %v141 = vld [vmem:[%s4 + $0x34] sm:$0xf]
    %v142 = vld [vmem:[%s4 + $0x38] sm:$0xf]
    %v143 = vld [vmem:[%s4 + $0x3c] sm:$0xf]
    %v144 = vld [vmem:[%s5] sm:$0xf]
    %v145 = vld [vmem:[%s5 + $0x4] sm:$0xf]
    %v146 = vld [vmem:[%s5 + $0x8] sm:$0xf]
    %v147 = vld [vmem:[%s5 + $0xc] sm:$0xf]
    %v148 = vld [vmem:[%s5 + $0x10] sm:$0xf]
    %v149 = vld [vmem:[%s5 + $0x14] sm:$0xf]
    %v150 = vld [vmem:[%s5 + $0x18] sm:$0xf]
    %v151 = vld [vmem:[%s5 + $0x1c] sm:$0xf]
    %v152 = vld [vmem:[%s5 + $0x20] sm:$0xf]
    %v153 = vld [vmem:[%s5 + $0x24] sm:$0xf]
    %v154 = vld [vmem:[%s5 + $0x28] sm:$0xf]
    %v155 = vld [vmem:[%s5 + $0x2c] sm:$0xf]
    %v156 = vld [vmem:[%s5 + $0x30] sm:$0xf]
    %v157 = vld [vmem:[%s5 + $0x34] sm:$0xf]
    %v158 = vld [vmem:[%s5 + $0x38] sm:$0xf]
    %v159 = vld [vmem:[%s5 + $0x3c] sm:$0xf]
    %v160 = vld [vmem:[%s6] sm:$0xf]
    %v161 = vld [vmem:[%s6 + $0x4] sm:$0xf]
    %v162 = vld [vmem:[%s6 + $0x8] sm:$0xf]
    %v163 = vld [vmem:[%s6 + $0xc] sm:$0xf]
    %v164 = vld [vmem:[%s7] sm:$0x1]
    %v165 = vld [vmem:[%s8] sm:$0x1]
    %vm166 = vcmask 261120
    %v167 = vsel %vm166, %v58, 0.0
    %168 = vadd.xlane.f32.xlu0 %v167
    %v169 = vpop.xlane.xlu0 %168
    %v170 = vsel %vm166, %v59, 0.0
    %171 = vadd.xlane.f32.xlu0 %v170
    %v172 = vpop.xlane.xlu0 %171
    %v173 = vrcp.pop 32.0
    %v174 = vmul.f32 %v169, %v173
    %v175 = vmul.f32 %v172, %v173
    %v176 = vsub.f32 %v58, %v174
    %v177 = vsub.f32 %v59, %v175
    %v178 = vmul.f32 %v176, %v176
    %v179 = vmul.f32 %v177, %v177
    %v180 = vsel %vm166, %v178, 0.0
    %181 = vadd.xlane.f32.xlu0 %v180
    %v182 = vpop.xlane.xlu0 %181
    %v183 = vsel %vm166, %v179, 0.0
    %184 = vadd.xlane.f32.xlu0 %v183
    %v185 = vpop.xlane.xlu0 %184
    %v186 = vmul.f32 %v182, %v173
    %v187 = vmul.f32 %v185, %v173
    %v188 = vadd.f32 %v186, 1e-05
    %v189 = vadd.f32 %v187, 1e-05
    %v190 = vrsqrt.pop %v188
    %v191 = vrsqrt.pop %v189
    %v192 = vmul.f32 %v176, %v190
    %v193 = vmul.f32 %v177, %v191
    %v195 = vlaneseq
    %v196 = vshrl.u32 %v195, 7
    %v197 = vsub.s32 0, %v196
    %v198 = vrot.slane %v164, %v197
    %v200 = vmul.f32 %v192, %v198
    %v201 = vmul.f32 %v193, %v198
    %v203 = vlaneseq
    %v204 = vshrl.u32 %v203, 7
    %v205 = vsub.s32 0, %v204
    %v206 = vrot.slane %v165, %v205
    %v208 = vadd.f32 %v200, %v206
    %v209 = vadd.f32 %v201, %v206
    %v210 = vpack.c.bf16 %v209, %v208
    %v215 = vunpack.c.l.b16 %v112
    %v216 = vunpack.c.l.b16 %v113
    %v217 = vunpack.c.l.b16 %v114
    %v218 = vunpack.c.l.b16 %v115
    %v219 = vpack.c.b16 %v216, %v215
    %v220 = vpack.c.b16 %v218, %v217
    %v224 = vsel %vm166, %v210, 0
    %226 = vmatprep.subr.bf16.mxu0 0
    %227 = vmatpush1.bf16.msra.mxu0 %v219
    %228 = vmatprep.subr.bf16.mxu0 0
    %229 = vmatpush1.bf16.msra.mxu0 %v220
    %230 = vmatprep.subr.bf16.mxu0 0
    %231 = vmatpush1.bf16.msra.mxu0 0
    %232 = vmatprep.subr.bf16.mxu0 0
    %233 = vmatpush1.bf16.msra.mxu0 0
    %234 = vmatprep.subr.bf16.mxu0 0
    %235 = vmatpush1.bf16.msra.mxu0 0
    %236 = vmatprep.subr.bf16.mxu0 0
    %237 = vmatpush1.bf16.msra.mxu0 0
    %238 = vmatprep.subr.bf16.mxu0 0
    %239 = vmatpush1.bf16.msra.mxu0 0
    %240 = vmatprep.subr.bf16.mxu0 0
    %241 = vmatpush1.bf16.msra.mxu0 0
    %242 = vmatprep.subr.bf16.mxu0 0
    %243 = vmatpush1.bf16.msra.mxu0 0
    %244 = vmatprep.subr.bf16.mxu0 0
    %245 = vmatpush1.bf16.msra.mxu0 0
    %246 = vmatprep.subr.bf16.mxu0 0
    %247 = vmatpush1.bf16.msra.mxu0 0
    %248 = vmatprep.subr.bf16.mxu0 0
    %249 = vmatpush1.bf16.msra.mxu0 0
    %250 = vmatprep.subr.bf16.mxu0 0
    %251 = vmatpush1.bf16.msra.mxu0 0
    %252 = vmatprep.subr.bf16.mxu0 0
    %253 = vmatpush1.bf16.msra.mxu0 0
    %254 = vmatprep.subr.bf16.mxu0 0
    %255 = vmatpush1.bf16.msra.mxu0 0
    %256 = vmatprep.subr.bf16.mxu0 0
    %257 = vmatpush1.bf16.msra.mxu0 0
    %258 = vmatprep.mubr.bf16.mxu0 0
    %259 = vmatmul.mubr.bf16.gmra.mrb[0].mxu0 %v224
    %v260 = vpop.f32.mrb[0].mxu0
    %v261 = vadd.f32 0.0, %v260
    %v262 = vpop.f32.mrb[0].mxu0
    %v263 = vpop.f32.mrb[0].mxu0
    %v264 = vadd.f32 0.0, %v263
    %v265 = vpop.f32.mrb[0].mxu0
    %266 = vdwg.mxu0
    %v271 = vunpack.c.l.b16 %v128
    %v272 = vunpack.c.l.b16 %v129
    %v273 = vunpack.c.l.b16 %v130
    %v274 = vunpack.c.l.b16 %v131
    %v275 = vpack.c.b16 %v272, %v271
    %v276 = vpack.c.b16 %v274, %v273
    %279 = vmatprep.subr.bf16.mxu0 0
    %280 = vmatpush1.bf16.msra.mxu0 %v275
    %281 = vmatprep.subr.bf16.mxu0 0
    %282 = vmatpush1.bf16.msra.mxu0 %v276
    %283 = vmatprep.subr.bf16.mxu0 0
    %284 = vmatpush1.bf16.msra.mxu0 0
    %285 = vmatprep.subr.bf16.mxu0 0
    %286 = vmatpush1.bf16.msra.mxu0 0
    %287 = vmatprep.subr.bf16.mxu0 0
    %288 = vmatpush1.bf16.msra.mxu0 0
    %289 = vmatprep.subr.bf16.mxu0 0
    %290 = vmatpush1.bf16.msra.mxu0 0
    %291 = vmatprep.subr.bf16.mxu0 0
    %292 = vmatpush1.bf16.msra.mxu0 0
    %293 = vmatprep.subr.bf16.mxu0 0
    %294 = vmatpush1.bf16.msra.mxu0 0
    %295 = vmatprep.subr.bf16.mxu0 0
    %296 = vmatpush1.bf16.msra.mxu0 0
    %297 = vmatprep.subr.bf16.mxu0 0
    %298 = vmatpush1.bf16.msra.mxu0 0
    %299 = vmatprep.subr.bf16.mxu0 0
    %300 = vmatpush1.bf16.msra.mxu0 0
    %301 = vmatprep.subr.bf16.mxu0 0
    %302 = vmatpush1.bf16.msra.mxu0 0
    %303 = vmatprep.subr.bf16.mxu0 0
    %304 = vmatpush1.bf16.msra.mxu0 0
    %305 = vmatprep.subr.bf16.mxu0 0
    %306 = vmatpush1.bf16.msra.mxu0 0
    %307 = vmatprep.subr.bf16.mxu0 0
    %308 = vmatpush1.bf16.msra.mxu0 0
    %309 = vmatprep.subr.bf16.mxu0 0
    %310 = vmatpush1.bf16.msra.mxu0 0
    %311 = vmatprep.mubr.bf16.mxu0 0
    %312 = vmatmul.mubr.bf16.gmra.mrb[0].mxu0 %v224
    %v313 = vpop.f32.mrb[0].mxu0
    %v314 = vadd.f32 0.0, %v313
    %v315 = vpop.f32.mrb[0].mxu0
    %v316 = vpop.f32.mrb[0].mxu0
    %v317 = vadd.f32 0.0, %v316
    %v318 = vpop.f32.mrb[0].mxu0
    %319 = vdwg.mxu0
    %v324 = vunpack.c.l.b16 %v144
    %v325 = vunpack.c.l.b16 %v145
    %v326 = vunpack.c.l.b16 %v146
    %v327 = vunpack.c.l.b16 %v147
    %v328 = vpack.c.b16 %v325, %v324
    %v329 = vpack.c.b16 %v327, %v326
    %332 = vmatprep.subr.bf16.mxu0 0
    %333 = vmatpush1.bf16.msra.mxu0 %v328
    %334 = vmatprep.subr.bf16.mxu0 0
    %335 = vmatpush1.bf16.msra.mxu0 %v329
    %336 = vmatprep.subr.bf16.mxu0 0
    %337 = vmatpush1.bf16.msra.mxu0 0
    %338 = vmatprep.subr.bf16.mxu0 0
    %339 = vmatpush1.bf16.msra.mxu0 0
    %340 = vmatprep.subr.bf16.mxu0 0
    %341 = vmatpush1.bf16.msra.mxu0 0
    %342 = vmatprep.subr.bf16.mxu0 0
    %343 = vmatpush1.bf16.msra.mxu0 0
    %344 = vmatprep.subr.bf16.mxu0 0
    %345 = vmatpush1.bf16.msra.mxu0 0
    %346 = vmatprep.subr.bf16.mxu0 0
    %347 = vmatpush1.bf16.msra.mxu0 0
    %348 = vmatprep.subr.bf16.mxu0 0
    %349 = vmatpush1.bf16.msra.mxu0 0
    %350 = vmatprep.subr.bf16.mxu0 0
    %351 = vmatpush1.bf16.msra.mxu0 0
    %352 = vmatprep.subr.bf16.mxu0 0
    %353 = vmatpush1.bf16.msra.mxu0 0
    %354 = vmatprep.subr.bf16.mxu0 0
    %355 = vmatpush1.bf16.msra.mxu0 0
    %356 = vmatprep.subr.bf16.mxu0 0
    %357 = vmatpush1.bf16.msra.mxu0 0
    %358 = vmatprep.subr.bf16.mxu0 0
    %359 = vmatpush1.bf16.msra.mxu0 0
    %360 = vmatprep.subr.bf16.mxu0 0
    %361 = vmatpush1.bf16.msra.mxu0 0
    %362 = vmatprep.subr.bf16.mxu0 0
    %363 = vmatpush1.bf16.msra.mxu0 0
    %364 = vmatprep.mubr.bf16.mxu0 0
    %365 = vmatmul.mubr.bf16.gmra.mrb[0].mxu0 %v224
    %v366 = vpop.f32.mrb[0].mxu0
    %v367 = vadd.f32 0.0, %v366
    %v368 = vpop.f32.mrb[0].mxu0
    %v369 = vpop.f32.mrb[0].mxu0
    %v370 = vadd.f32 0.0, %v369
    %v371 = vpop.f32.mrb[0].mxu0
    %372 = vdwg.mxu0
    %v373 = vpack.c.bf16 %v261, %v261
    %v374 = vpack.c.bf16 %v264, %v264
    %v375 = vpack.c.bf16 %v314, %v314
    %v376 = vpack.c.bf16 %v317, %v317
    %v377 = vpack.c.bf16 %v367, %v367
    %v378 = vpack.c.bf16 %v370, %v370
    %v380 = vsel %vm89, %v373, 0
    %v383 = vsel %vm89, %v375, 0
    %385 = vmatprep.subr.bf16.mxu0 0
    %386 = vmatpush1.bf16.xpose.msra.mxu0 %v383
    %387 = vmatprep.subr.bf16.mxu0 0
    %388 = vmatpush1.bf16.xpose.msra.mxu0 0
    %389 = vmatprep.subr.bf16.mxu0 0
    %390 = vmatpush1.bf16.xpose.msra.mxu0 0
    %391 = vmatprep.subr.bf16.mxu0 0
    %392 = vmatpush1.bf16.xpose.msra.mxu0 0
    %393 = vmatprep.subr.bf16.mxu0 0
    %394 = vmatpush1.bf16.xpose.msra.mxu0 0
    %395 = vmatprep.subr.bf16.mxu0 0
    %396 = vmatpush1.bf16.xpose.msra.mxu0 0
    %397 = vmatprep.subr.bf16.mxu0 0
    %398 = vmatpush1.bf16.xpose.msra.mxu0 0
    %399 = vmatprep.subr.bf16.mxu0 0
    %400 = vmatpush1.bf16.xpose.msra.mxu0 0
    %401 = vmatprep.subr.bf16.mxu0 0
    %402 = vmatpush1.bf16.xpose.msra.mxu0 0
    %403 = vmatprep.subr.bf16.mxu0 0
    %404 = vmatpush1.bf16.xpose.msra.mxu0 0
    %405 = vmatprep.subr.bf16.mxu0 0
    %406 = vmatpush1.bf16.xpose.msra.mxu0 0
    %407 = vmatprep.subr.bf16.mxu0 0
    %408 = vmatpush1.bf16.xpose.msra.mxu0 0
    %409 = vmatprep.subr.bf16.mxu0 0
    %410 = vmatpush1.bf16.xpose.msra.mxu0 0
    %411 = vmatprep.subr.bf16.mxu0 0
    %412 = vmatpush1.bf16.xpose.msra.mxu0 0
    %413 = vmatprep.subr.bf16.mxu0 0
    %414 = vmatpush1.bf16.xpose.msra.mxu0 0
    %415 = vmatprep.subr.bf16.mxu0 0
    %416 = vmatpush1.bf16.xpose.msra.mxu0 0
    %417 = vmatprep.mubr.bf16.mxu0 0
    %418 = vmatmul.mubr.bf16.gmra.mrb[0].mxu0 %v380
    %v419 = vpop.f32.mrb[0].mxu0
    %v420 = vadd.f32 %v109, %v419
    %v421 = vpop.f32.mrb[0].mxu0
    %v422 = vpop.f32.mrb[0].mxu0
    %v423 = vpop.f32.mrb[0].mxu0
    %424 = vdwg.mxu0
    %v426 = vsel %vm89, %v374, 0
    %v429 = vsel %vm89, %v376, 0
    %431 = vmatprep.subr.bf16.mxu0 0
    %432 = vmatpush1.bf16.xpose.msra.mxu0 %v429
    %433 = vmatprep.subr.bf16.mxu0 0
    %434 = vmatpush1.bf16.xpose.msra.mxu0 0
    %435 = vmatprep.subr.bf16.mxu0 0
    %436 = vmatpush1.bf16.xpose.msra.mxu0 0
    %437 = vmatprep.subr.bf16.mxu0 0
    %438 = vmatpush1.bf16.xpose.msra.mxu0 0
    %439 = vmatprep.subr.bf16.mxu0 0
    %440 = vmatpush1.bf16.xpose.msra.mxu0 0
    %441 = vmatprep.subr.bf16.mxu0 0
    %442 = vmatpush1.bf16.xpose.msra.mxu0 0
    %443 = vmatprep.subr.bf16.mxu0 0
    %444 = vmatpush1.bf16.xpose.msra.mxu0 0
    %445 = vmatprep.subr.bf16.mxu0 0
    %446 = vmatpush1.bf16.xpose.msra.mxu0 0
    %447 = vmatprep.subr.bf16.mxu0 0
    %448 = vmatpush1.bf16.xpose.msra.mxu0 0
    %449 = vmatprep.subr.bf16.mxu0 0
    %450 = vmatpush1.bf16.xpose.msra.mxu0 0
    %451 = vmatprep.subr.bf16.mxu0 0
    %452 = vmatpush1.bf16.xpose.msra.mxu0 0
    %453 = vmatprep.subr.bf16.mxu0 0
    %454 = vmatpush1.bf16.xpose.msra.mxu0 0
    %455 = vmatprep.subr.bf16.mxu0 0
    %456 = vmatpush1.bf16.xpose.msra.mxu0 0
    %457 = vmatprep.subr.bf16.mxu0 0
    %458 = vmatpush1.bf16.xpose.msra.mxu0 0
    %459 = vmatprep.subr.bf16.mxu0 0
    %460 = vmatpush1.bf16.xpose.msra.mxu0 0
    %461 = vmatprep.subr.bf16.mxu0 0
    %462 = vmatpush1.bf16.xpose.msra.mxu0 0
    %463 = vmatprep.mubr.bf16.mxu0 0
    %464 = vmatmul.mubr.bf16.gmra.mrb[0].mxu0 %v426
    %v465 = vpop.f32.mrb[0].mxu0
    %v466 = vadd.f32 %v111, %v465
    %v467 = vpop.f32.mrb[0].mxu0
    %v468 = vpop.f32.mrb[0].mxu0
    %v469 = vpop.f32.mrb[0].mxu0
    %470 = vdwg.mxu0
    %v471 = vsel %vm83, -1e+09, %v420
    %v472 = vsel %vm84, -1e+09, %v466
    %v473 = vsel %vm89, %v471, -inf
    %474 = vmax.xlane.f32.xlu0 %v473
    %v475 = vpop.xlane.xlu0 %474
    %v476 = vsel %vm89, %v472, -inf
    %477 = vmax.xlane.f32.xlu0 %v476
    %v478 = vpop.xlane.xlu0 %477
    %v479 = vsub.f32 %v471, %v475
    %v480 = vsub.f32 %v472, %v478
    %v481 = vmul.f32 %v479, 1.442695
    %v482 = vpow.pop %v481
    %v483 = vmul.f32 %v480, 1.442695
    %v484 = vpow.pop %v483
    %v485 = vsel %vm89, %v482, 0.0
    %486 = vadd.xlane.f32.xlu0 %v485
    %v487 = vpop.xlane.xlu0 %486
    %v488 = vsel %vm89, %v484, 0.0
    %489 = vadd.xlane.f32.xlu0 %v488
    %v490 = vpop.xlane.xlu0 %489
    %v491 = vrcp.pop %v487
    %v492 = vmul.f32 %v482, %v491
    %v493 = vrcp.pop %v490
    %v494 = vmul.f32 %v484, %v493
    %v495 = vpack.c.bf16 %v492, %v492
    %v496 = vpack.c.bf16 %v494, %v494
    %v498 = vsel %vm89, %v495, 0
    %vm500 = vcmask 1043456
    %v502 = vsel %vm500, %v377, 0
    %504 = vmatprep.subr.bf16.mxu0 0
    %505 = vmatpush1.bf16.msra.mxu0 %v502
    %506 = vmatprep.subr.bf16.mxu0 0
    %507 = vmatpush1.bf16.msra.mxu0 0
    %508 = vmatprep.subr.bf16.mxu0 0
    %509 = vmatpush1.bf16.msra.mxu0 0
    %510 = vmatprep.subr.bf16.mxu0 0
    %511 = vmatpush1.bf16.msra.mxu0 0
    %512 = vmatprep.subr.bf16.mxu0 0
    %513 = vmatpush1.bf16.msra.mxu0 0
    %514 = vmatprep.subr.bf16.mxu0 0
    %515 = vmatpush1.bf16.msra.mxu0 0
    %516 = vmatprep.subr.bf16.mxu0 0
    %517 = vmatpush1.bf16.msra.mxu0 0
    %518 = vmatprep.subr.bf16.mxu0 0
    %519 = vmatpush1.bf16.msra.mxu0 0
    %520 = vmatprep.subr.bf16.mxu0 0
    %521 = vmatpush1.bf16.msra.mxu0 0
    %522 = vmatprep.subr.bf16.mxu0 0
    %523 = vmatpush1.bf16.msra.mxu0 0
    %524 = vmatprep.subr.bf16.mxu0 0
    %525 = vmatpush1.bf16.msra.mxu0 0
    %526 = vmatprep.subr.bf16.mxu0 0
    %527 = vmatpush1.bf16.msra.mxu0 0
    %528 = vmatprep.subr.bf16.mxu0 0
    %529 = vmatpush1.bf16.msra.mxu0 0
    %530 = vmatprep.subr.bf16.mxu0 0
    %531 = vmatpush1.bf16.msra.mxu0 0
    %532 = vmatprep.subr.bf16.mxu0 0
    %533 = vmatpush1.bf16.msra.mxu0 0
    %534 = vmatprep.subr.bf16.mxu0 0
    %535 = vmatpush1.bf16.msra.mxu0 0
    %536 = vmatprep.mubr.bf16.mxu0 0
    %537 = vmatmul.mubr.bf16.gmra.mrb[0].mxu0 %v498
    %v538 = vpop.f32.mrb[0].mxu0
    %v539 = vadd.f32 0.0, %v538
    %v540 = vpop.f32.mrb[0].mxu0
    %v541 = vpop.f32.mrb[0].mxu0
    %v542 = vpop.f32.mrb[0].mxu0
    %543 = vdwg.mxu0
    %v545 = vsel %vm89, %v496, 0
    %v548 = vsel %vm500, %v378, 0
    %550 = vmatprep.subr.bf16.mxu0 0
    %551 = vmatpush1.bf16.msra.mxu0 %v548
    %552 = vmatprep.subr.bf16.mxu0 0
    %553 = vmatpush1.bf16.msra.mxu0 0
    %554 = vmatprep.subr.bf16.mxu0 0
    %555 = vmatpush1.bf16.msra.mxu0 0
    %556 = vmatprep.subr.bf16.mxu0 0
    %557 = vmatpush1.bf16.msra.mxu0 0
    %558 = vmatprep.subr.bf16.mxu0 0
    %559 = vmatpush1.bf16.msra.mxu0 0
    %560 = vmatprep.subr.bf16.mxu0 0
    %561 = vmatpush1.bf16.msra.mxu0 0
    %562 = vmatprep.subr.bf16.mxu0 0
    %563 = vmatpush1.bf16.msra.mxu0 0
    %564 = vmatprep.subr.bf16.mxu0 0
    %565 = vmatpush1.bf16.msra.mxu0 0
    %566 = vmatprep.subr.bf16.mxu0 0
    %567 = vmatpush1.bf16.msra.mxu0 0
    %568 = vmatprep.subr.bf16.mxu0 0
    %569 = vmatpush1.bf16.msra.mxu0 0
    %570 = vmatprep.subr.bf16.mxu0 0
    %571 = vmatpush1.bf16.msra.mxu0 0
    %572 = vmatprep.subr.bf16.mxu0 0
    %573 = vmatpush1.bf16.msra.mxu0 0
    %574 = vmatprep.subr.bf16.mxu0 0
    %575 = vmatpush1.bf16.msra.mxu0 0
    %576 = vmatprep.subr.bf16.mxu0 0
    %577 = vmatpush1.bf16.msra.mxu0 0
    %578 = vmatprep.subr.bf16.mxu0 0
    %579 = vmatpush1.bf16.msra.mxu0 0
    %580 = vmatprep.subr.bf16.mxu0 0
    %581 = vmatpush1.bf16.msra.mxu0 0
    %582 = vmatprep.mubr.bf16.mxu0 0
    %583 = vmatmul.mubr.bf16.gmra.mrb[0].mxu0 %v545
    %v584 = vpop.f32.mrb[0].mxu0
    %v585 = vadd.f32 0.0, %v584
    %v586 = vpop.f32.mrb[0].mxu0
    %v587 = vpop.f32.mrb[0].mxu0
    %v588 = vpop.f32.mrb[0].mxu0
    %589 = vdwg.mxu0
    %v590 = vpack.c.bf16 %v585, %v539
    %v595 = vunpack.c.l.b16 %v116
    %v596 = vunpack.c.l.b16 %v117
    %v597 = vunpack.c.l.b16 %v118
    %v598 = vunpack.c.l.b16 %v119
    %v599 = vpack.c.b16 %v596, %v595
    %v600 = vpack.c.b16 %v598, %v597
    %603 = vmatprep.subr.bf16.mxu0 0
    %604 = vmatpush1.bf16.msra.mxu0 %v599
    %605 = vmatprep.subr.bf16.mxu0 0
    %606 = vmatpush1.bf16.msra.mxu0 %v600
    %607 = vmatprep.subr.bf16.mxu0 0
    %608 = vmatpush1.bf16.msra.mxu0 0
    %609 = vmatprep.subr.bf16.mxu0 0
    %610 = vmatpush1.bf16.msra.mxu0 0
    %611 = vmatprep.subr.bf16.mxu0 0
    %612 = vmatpush1.bf16.msra.mxu0 0
    %613 = vmatprep.subr.bf16.mxu0 0
    %614 = vmatpush1.bf16.msra.mxu0 0
    %615 = vmatprep.subr.bf16.mxu0 0
    %616 = vmatpush1.bf16.msra.mxu0 0
    %617 = vmatprep.subr.bf16.mxu0 0
    %618 = vmatpush1.bf16.msra.mxu0 0
    %619 = vmatprep.subr.bf16.mxu0 0
    %620 = vmatpush1.bf16.msra.mxu0 0
    %621 = vmatprep.subr.bf16.mxu0 0
    %622 = vmatpush1.bf16.msra.mxu0 0
    %623 = vmatprep.subr.bf16.mxu0 0
    %624 = vmatpush1.bf16.msra.mxu0 0
    %625 = vmatprep.subr.bf16.mxu0 0
    %626 = vmatpush1.bf16.msra.mxu0 0
    %627 = vmatprep.subr.bf16.mxu0 0
    %628 = vmatpush1.bf16.msra.mxu0 0
    %629 = vmatprep.subr.bf16.mxu0 0
    %630 = vmatpush1.bf16.msra.mxu0 0
    %631 = vmatprep.subr.bf16.mxu0 0
    %632 = vmatpush1.bf16.msra.mxu0 0
    %633 = vmatprep.subr.bf16.mxu0 0
    %634 = vmatpush1.bf16.msra.mxu0 0
    %635 = vmatprep.mubr.bf16.mxu0 0
    %636 = vmatmul.mubr.bf16.gmra.mrb[0].mxu0 %v224
    %v637 = vpop.f32.mrb[0].mxu0
    %v638 = vadd.f32 0.0, %v637
    %v639 = vpop.f32.mrb[0].mxu0
    %v640 = vpop.f32.mrb[0].mxu0
    %v641 = vadd.f32 0.0, %v640
    %v642 = vpop.f32.mrb[0].mxu0
    %643 = vdwg.mxu0
    %v648 = vunpack.c.l.b16 %v132
    %v649 = vunpack.c.l.b16 %v133
    %v650 = vunpack.c.l.b16 %v134
    %v651 = vunpack.c.l.b16 %v135
    %v652 = vpack.c.b16 %v649, %v648
    %v653 = vpack.c.b16 %v651, %v650
    %656 = vmatprep.subr.bf16.mxu0 0
    %657 = vmatpush1.bf16.msra.mxu0 %v652
    %658 = vmatprep.subr.bf16.mxu0 0
    %659 = vmatpush1.bf16.msra.mxu0 %v653
    %660 = vmatprep.subr.bf16.mxu0 0
    %661 = vmatpush1.bf16.msra.mxu0 0
    %662 = vmatprep.subr.bf16.mxu0 0
    %663 = vmatpush1.bf16.msra.mxu0 0
    %664 = vmatprep.subr.bf16.mxu0 0
    %665 = vmatpush1.bf16.msra.mxu0 0
    %666 = vmatprep.subr.bf16.mxu0 0
    %667 = vmatpush1.bf16.msra.mxu0 0
    %668 = vmatprep.subr.bf16.mxu0 0
    %669 = vmatpush1.bf16.msra.mxu0 0
    %670 = vmatprep.subr.bf16.mxu0 0
    %671 = vmatpush1.bf16.msra.mxu0 0
    %672 = vmatprep.subr.bf16.mxu0 0
    %673 = vmatpush1.bf16.msra.mxu0 0
    %674 = vmatprep.subr.bf16.mxu0 0
    %675 = vmatpush1.bf16.msra.mxu0 0
    %676 = vmatprep.subr.bf16.mxu0 0
    %677 = vmatpush1.bf16.msra.mxu0 0
    %678 = vmatprep.subr.bf16.mxu0 0
    %679 = vmatpush1.bf16.msra.mxu0 0
    %680 = vmatprep.subr.bf16.mxu0 0
    %681 = vmatpush1.bf16.msra.mxu0 0
    %682 = vmatprep.subr.bf16.mxu0 0
    %683 = vmatpush1.bf16.msra.mxu0 0
    %684 = vmatprep.subr.bf16.mxu0 0
    %685 = vmatpush1.bf16.msra.mxu0 0
    %686 = vmatprep.subr.bf16.mxu0 0
    %687 = vmatpush1.bf16.msra.mxu0 0
    %688 = vmatprep.mubr.bf16.mxu0 0
    %689 = vmatmul.mubr.bf16.gmra.mrb[0].mxu0 %v224
    %v690 = vpop.f32.mrb[0].mxu0
    %v691 = vadd.f32 0.0, %v690
    %v692 = vpop.f32.mrb[0].mxu0
    %v693 = vpop.f32.mrb[0].mxu0
    %v694 = vadd.f32 0.0, %v693
    %v695 = vpop.f32.mrb[0].mxu0
    %696 = vdwg.mxu0
    %v701 = vunpack.c.l.b16 %v148
    %v702 = vunpack.c.l.b16 %v149
    %v703 = vunpack.c.l.b16 %v150
    %v704 = vunpack.c.l.b16 %v151
    %v705 = vpack.c.b16 %v702, %v701
    %v706 = vpack.c.b16 %v704, %v703
    %709 = vmatprep.subr.bf16.mxu0 0
    %710 = vmatpush1.bf16.msra.mxu0 %v705
    %711 = vmatprep.subr.bf16.mxu0 0
    %712 = vmatpush1.bf16.msra.mxu0 %v706
    %713 = vmatprep.subr.bf16.mxu0 0
    %714 = vmatpush1.bf16.msra.mxu0 0
    %715 = vmatprep.subr.bf16.mxu0 0
    %716 = vmatpush1.bf16.msra.mxu0 0
    %717 = vmatprep.subr.bf16.mxu0 0
    %718 = vmatpush1.bf16.msra.mxu0 0
    %719 = vmatprep.subr.bf16.mxu0 0
    %720 = vmatpush1.bf16.msra.mxu0 0
    %721 = vmatprep.subr.bf16.mxu0 0
    %722 = vmatpush1.bf16.msra.mxu0 0
    %723 = vmatprep.subr.bf16.mxu0 0
    %724 = vmatpush1.bf16.msra.mxu0 0
    %725 = vmatprep.subr.bf16.mxu0 0
    %726 = vmatpush1.bf16.msra.mxu0 0
    %727 = vmatprep.subr.bf16.mxu0 0
    %728 = vmatpush1.bf16.msra.mxu0 0
    %729 = vmatprep.subr.bf16.mxu0 0
    %730 = vmatpush1.bf16.msra.mxu0 0
    %731 = vmatprep.subr.bf16.mxu0 0
    %732 = vmatpush1.bf16.msra.mxu0 0
    %733 = vmatprep.subr.bf16.mxu0 0
    %734 = vmatpush1.bf16.msra.mxu0 0
    %735 = vmatprep.subr.bf16.mxu0 0
    %736 = vmatpush1.bf16.msra.mxu0 0
    %737 = vmatprep.subr.bf16.mxu0 0
    %738 = vmatpush1.bf16.msra.mxu0 0
    %739 = vmatprep.subr.bf16.mxu0 0
    %740 = vmatpush1.bf16.msra.mxu0 0
    %741 = vmatprep.mubr.bf16.mxu0 0
    %742 = vmatmul.mubr.bf16.gmra.mrb[0].mxu0 %v224
    %v743 = vpop.f32.mrb[0].mxu0
    %v744 = vadd.f32 0.0, %v743
    %v745 = vpop.f32.mrb[0].mxu0
    %v746 = vpop.f32.mrb[0].mxu0
    %v747 = vadd.f32 0.0, %v746
    %v748 = vpop.f32.mrb[0].mxu0
    %749 = vdwg.mxu0
    %v750 = vpack.c.bf16 %v638, %v638
    %v751 = vpack.c.bf16 %v641, %v641
    %v752 = vpack.c.bf16 %v691, %v691
    %v753 = vpack.c.bf16 %v694, %v694
    %v754 = vpack.c.bf16 %v744, %v744
    %v755 = vpack.c.bf16 %v747, %v747
    %v757 = vsel %vm89, %v750, 0
    %v760 = vsel %vm89, %v752, 0
    %762 = vmatprep.subr.bf16.mxu0 0
    %763 = vmatpush1.bf16.xpose.msra.mxu0 %v760
    %764 = vmatprep.subr.bf16.mxu0 0
    %765 = vmatpush1.bf16.xpose.msra.mxu0 0
    %766 = vmatprep.subr.bf16.mxu0 0
    %767 = vmatpush1.bf16.xpose.msra.mxu0 0
    %768 = vmatprep.subr.bf16.mxu0 0
    %769 = vmatpush1.bf16.xpose.msra.mxu0 0
    %770 = vmatprep.subr.bf16.mxu0 0
    %771 = vmatpush1.bf16.xpose.msra.mxu0 0
    %772 = vmatprep.subr.bf16.mxu0 0
    %773 = vmatpush1.bf16.xpose.msra.mxu0 0
    %774 = vmatprep.subr.bf16.mxu0 0
    %775 = vmatpush1.bf16.xpose.msra.mxu0 0
    %776 = vmatprep.subr.bf16.mxu0 0
    %777 = vmatpush1.bf16.xpose.msra.mxu0 0
    %778 = vmatprep.subr.bf16.mxu0 0
    %779 = vmatpush1.bf16.xpose.msra.mxu0 0
    %780 = vmatprep.subr.bf16.mxu0 0
    %781 = vmatpush1.bf16.xpose.msra.mxu0 0
    %782 = vmatprep.subr.bf16.mxu0 0
    %783 = vmatpush1.bf16.xpose.msra.mxu0 0
    %784 = vmatprep.subr.bf16.mxu0 0
    %785 = vmatpush1.bf16.xpose.msra.mxu0 0
    %786 = vmatprep.subr.bf16.mxu0 0
    %787 = vmatpush1.bf16.xpose.msra.mxu0 0
    %788 = vmatprep.subr.bf16.mxu0 0
    %789 = vmatpush1.bf16.xpose.msra.mxu0 0
    %790 = vmatprep.subr.bf16.mxu0 0
    %791 = vmatpush1.bf16.xpose.msra.mxu0 0
    %792 = vmatprep.subr.bf16.mxu0 0
    %793 = vmatpush1.bf16.xpose.msra.mxu0 0
    %794 = vmatprep.mubr.bf16.mxu0 0
    %795 = vmatmul.mubr.bf16.gmra.mrb[0].mxu0 %v757
    %v796 = vpop.f32.mrb[0].mxu0
    %v797 = vadd.f32 %v109, %v796
    %v798 = vpop.f32.mrb[0].mxu0
    %v799 = vpop.f32.mrb[0].mxu0
    %v800 = vpop.f32.mrb[0].mxu0
    %801 = vdwg.mxu0
    %v803 = vsel %vm89, %v751, 0
    %v806 = vsel %vm89, %v753, 0
    %808 = vmatprep.subr.bf16.mxu0 0
    %809 = vmatpush1.bf16.xpose.msra.mxu0 %v806
    %810 = vmatprep.subr.bf16.mxu0 0
    %811 = vmatpush1.bf16.xpose.msra.mxu0 0
    %812 = vmatprep.subr.bf16.mxu0 0
    %813 = vmatpush1.bf16.xpose.msra.mxu0 0
    %814 = vmatprep.subr.bf16.mxu0 0
    %815 = vmatpush1.bf16.xpose.msra.mxu0 0
    %816 = vmatprep.subr.bf16.mxu0 0
    %817 = vmatpush1.bf16.xpose.msra.mxu0 0
    %818 = vmatprep.subr.bf16.mxu0 0
    %819 = vmatpush1.bf16.xpose.msra.mxu0 0
    %820 = vmatprep.subr.bf16.mxu0 0
    %821 = vmatpush1.bf16.xpose.msra.mxu0 0
    %822 = vmatprep.subr.bf16.mxu0 0
    %823 = vmatpush1.bf16.xpose.msra.mxu0 0
    %824 = vmatprep.subr.bf16.mxu0 0
    %825 = vmatpush1.bf16.xpose.msra.mxu0 0
    %826 = vmatprep.subr.bf16.mxu0 0
    %827 = vmatpush1.bf16.xpose.msra.mxu0 0
    %828 = vmatprep.subr.bf16.mxu0 0
    %829 = vmatpush1.bf16.xpose.msra.mxu0 0
    %830 = vmatprep.subr.bf16.mxu0 0
    %831 = vmatpush1.bf16.xpose.msra.mxu0 0
    %832 = vmatprep.subr.bf16.mxu0 0
    %833 = vmatpush1.bf16.xpose.msra.mxu0 0
    %834 = vmatprep.subr.bf16.mxu0 0
    %835 = vmatpush1.bf16.xpose.msra.mxu0 0
    %836 = vmatprep.subr.bf16.mxu0 0
    %837 = vmatpush1.bf16.xpose.msra.mxu0 0
    %838 = vmatprep.subr.bf16.mxu0 0
    %839 = vmatpush1.bf16.xpose.msra.mxu0 0
    %840 = vmatprep.mubr.bf16.mxu0 0
    %841 = vmatmul.mubr.bf16.gmra.mrb[0].mxu0 %v803
    %v842 = vpop.f32.mrb[0].mxu0
    %v843 = vadd.f32 %v111, %v842
    %v844 = vpop.f32.mrb[0].mxu0
    %v845 = vpop.f32.mrb[0].mxu0
    %v846 = vpop.f32.mrb[0].mxu0
    %847 = vdwg.mxu0
    %v848 = vsel %vm83, -1e+09, %v797
    %v849 = vsel %vm84, -1e+09, %v843
    %v850 = vsel %vm89, %v848, -inf
    %851 = vmax.xlane.f32.xlu0 %v850
    %v852 = vpop.xlane.xlu0 %851
    %v853 = vsel %vm89, %v849, -inf
    %854 = vmax.xlane.f32.xlu0 %v853
    %v855 = vpop.xlane.xlu0 %854
    %v856 = vsub.f32 %v848, %v852
    %v857 = vsub.f32 %v849, %v855
    %v858 = vmul.f32 %v856, 1.442695
    %v859 = vpow.pop %v858
    %v860 = vmul.f32 %v857, 1.442695
    %v861 = vpow.pop %v860
    %v862 = vsel %vm89, %v859, 0.0
    %863 = vadd.xlane.f32.xlu0 %v862
    %v864 = vpop.xlane.xlu0 %863
    %v865 = vsel %vm89, %v861, 0.0
    %866 = vadd.xlane.f32.xlu0 %v865
    %v867 = vpop.xlane.xlu0 %866
    %v868 = vrcp.pop %v864
    %v869 = vmul.f32 %v859, %v868
    %v870 = vrcp.pop %v867
    %v871 = vmul.f32 %v861, %v870
    %v872 = vpack.c.bf16 %v869, %v869
    %v873 = vpack.c.bf16 %v871, %v871
    %v875 = vsel %vm89, %v872, 0
    %v878 = vsel %vm500, %v754, 0
    %880 = vmatprep.subr.bf16.mxu0 0
    %881 = vmatpush1.bf16.msra.mxu0 %v878
    %882 = vmatprep.subr.bf16.mxu0 0
    %883 = vmatpush1.bf16.msra.mxu0 0
    %884 = vmatprep.subr.bf16.mxu0 0
    %885 = vmatpush1.bf16.msra.mxu0 0
    %886 = vmatprep.subr.bf16.mxu0 0
    %887 = vmatpush1.bf16.msra.mxu0 0
    %888 = vmatprep.subr.bf16.mxu0 0
    %889 = vmatpush1.bf16.msra.mxu0 0
    %890 = vmatprep.subr.bf16.mxu0 0
    %891 = vmatpush1.bf16.msra.mxu0 0
    %892 = vmatprep.subr.bf16.mxu0 0
    %893 = vmatpush1.bf16.msra.mxu0 0
    %894 = vmatprep.subr.bf16.mxu0 0
    %895 = vmatpush1.bf16.msra.mxu0 0
    %896 = vmatprep.subr.bf16.mxu0 0
    %897 = vmatpush1.bf16.msra.mxu0 0
    %898 = vmatprep.subr.bf16.mxu0 0
    %899 = vmatpush1.bf16.msra.mxu0 0
    %900 = vmatprep.subr.bf16.mxu0 0
    %901 = vmatpush1.bf16.msra.mxu0 0
    %902 = vmatprep.subr.bf16.mxu0 0
    %903 = vmatpush1.bf16.msra.mxu0 0
    %904 = vmatprep.subr.bf16.mxu0 0
    %905 = vmatpush1.bf16.msra.mxu0 0
    %906 = vmatprep.subr.bf16.mxu0 0
    %907 = vmatpush1.bf16.msra.mxu0 0
    %908 = vmatprep.subr.bf16.mxu0 0
    %909 = vmatpush1.bf16.msra.mxu0 0
    %910 = vmatprep.subr.bf16.mxu0 0
    %911 = vmatpush1.bf16.msra.mxu0 0
    %912 = vmatprep.mubr.bf16.mxu0 0
    %913 = vmatmul.mubr.bf16.gmra.mrb[0].mxu0 %v875
    %v914 = vpop.f32.mrb[0].mxu0
    %v915 = vadd.f32 0.0, %v914
    %v916 = vpop.f32.mrb[0].mxu0
    %v917 = vpop.f32.mrb[0].mxu0
    %v918 = vpop.f32.mrb[0].mxu0
    %919 = vdwg.mxu0
    %v921 = vsel %vm89, %v873, 0
    %v924 = vsel %vm500, %v755, 0
    %926 = vmatprep.subr.bf16.mxu0 0
    %927 = vmatpush1.bf16.msra.mxu0 %v924
    %928 = vmatprep.subr.bf16.mxu0 0
    %929 = vmatpush1.bf16.msra.mxu0 0
    %930 = vmatprep.subr.bf16.mxu0 0
    %931 = vmatpush1.bf16.msra.mxu0 0
    %932 = vmatprep.subr.bf16.mxu0 0
    %933 = vmatpush1.bf16.msra.mxu0 0
    %934 = vmatprep.subr.bf16.mxu0 0
    %935 = vmatpush1.bf16.msra.mxu0 0
    %936 = vmatprep.subr.bf16.mxu0 0
    %937 = vmatpush1.bf16.msra.mxu0 0
    %938 = vmatprep.subr.bf16.mxu0 0
    %939 = vmatpush1.bf16.msra.mxu0 0
    %940 = vmatprep.subr.bf16.mxu0 0
    %941 = vmatpush1.bf16.msra.mxu0 0
    %942 = vmatprep.subr.bf16.mxu0 0
    %943 = vmatpush1.bf16.msra.mxu0 0
    %944 = vmatprep.subr.bf16.mxu0 0
    %945 = vmatpush1.bf16.msra.mxu0 0
    %946 = vmatprep.subr.bf16.mxu0 0
    %947 = vmatpush1.bf16.msra.mxu0 0
    %948 = vmatprep.subr.bf16.mxu0 0
    %949 = vmatpush1.bf16.msra.mxu0 0
    %950 = vmatprep.subr.bf16.mxu0 0
    %951 = vmatpush1.bf16.msra.mxu0 0
    %952 = vmatprep.subr.bf16.mxu0 0
    %953 = vmatpush1.bf16.msra.mxu0 0
    %954 = vmatprep.subr.bf16.mxu0 0
    %955 = vmatpush1.bf16.msra.mxu0 0
    %956 = vmatprep.subr.bf16.mxu0 0
    %957 = vmatpush1.bf16.msra.mxu0 0
    %958 = vmatprep.mubr.bf16.mxu0 0
    %959 = vmatmul.mubr.bf16.gmra.mrb[0].mxu0 %v921
    %v960 = vpop.f32.mrb[0].mxu0
    %v961 = vadd.f32 0.0, %v960
    %v962 = vpop.f32.mrb[0].mxu0
    %v963 = vpop.f32.mrb[0].mxu0
    %v964 = vpop.f32.mrb[0].mxu0
    %965 = vdwg.mxu0
    %v966 = vpack.c.bf16 %v961, %v915
    %v968 = vsel %vm89, %v966, 0
    %v971 = vsel %vm500, %v161, 0
    %973 = vmatprep.subr.bf16.mxu0 0
    %974 = vmatpush1.bf16.msra.mxu0 %v971
    %975 = vmatprep.subr.bf16.mxu0 0
    %976 = vmatpush1.bf16.msra.mxu0 0
    %977 = vmatprep.subr.bf16.mxu0 0
    %978 = vmatpush1.bf16.msra.mxu0 0
    %979 = vmatprep.subr.bf16.mxu0 0
    %980 = vmatpush1.bf16.msra.mxu0 0
    %981 = vmatprep.subr.bf16.mxu0 0
    %982 = vmatpush1.bf16.msra.mxu0 0
    %983 = vmatprep.subr.bf16.mxu0 0
    %984 = vmatpush1.bf16.msra.mxu0 0
    %985 = vmatprep.subr.bf16.mxu0 0
    %986 = vmatpush1.bf16.msra.mxu0 0
    %987 = vmatprep.subr.bf16.mxu0 0
    %988 = vmatpush1.bf16.msra.mxu0 0
    %989 = vmatprep.subr.bf16.mxu0 0
    %990 = vmatpush1.bf16.msra.mxu0 0
    %991 = vmatprep.subr.bf16.mxu0 0
    %992 = vmatpush1.bf16.msra.mxu0 0
    %993 = vmatprep.subr.bf16.mxu0 0
    %994 = vmatpush1.bf16.msra.mxu0 0
    %995 = vmatprep.subr.bf16.mxu0 0
    %996 = vmatpush1.bf16.msra.mxu0 0
    %997 = vmatprep.subr.bf16.mxu0 0
    %998 = vmatpush1.bf16.msra.mxu0 0
    %999 = vmatprep.subr.bf16.mxu0 0
    %1000 = vmatpush1.bf16.msra.mxu0 0
    %1001 = vmatprep.subr.bf16.mxu0 0
    %1002 = vmatpush1.bf16.msra.mxu0 0
    %1003 = vmatprep.subr.bf16.mxu0 0
    %1004 = vmatpush1.bf16.msra.mxu0 0
    %1005 = vmatprep.mubr.bf16.mxu0 0
    %1006 = vmatmul.mubr.bf16.gmra.mrb[0].mxu0 %v968
    %v1007 = vpop.f32.mrb[0].mxu0
    %v1008 = vadd.f32 0.0, %v1007
    %v1009 = vpop.f32.mrb[0].mxu0
    %v1010 = vpop.f32.mrb[0].mxu0
    %v1011 = vadd.f32 0.0, %v1010
    %v1012 = vpop.f32.mrb[0].mxu0
    %1013 = vdwg.mxu0
    %v1015 = vsel %vm89, %v590, 0
    %v1018 = vsel %vm500, %v160, 0
    %1020 = vmatprep.subr.bf16.mxu0 0
    %1021 = vmatpush1.bf16.msra.mxu0 %v1018
    %1022 = vmatprep.subr.bf16.mxu0 0
    %1023 = vmatpush1.bf16.msra.mxu0 0
    %1024 = vmatprep.subr.bf16.mxu0 0
    %1025 = vmatpush1.bf16.msra.mxu0 0
    %1026 = vmatprep.subr.bf16.mxu0 0
    %1027 = vmatpush1.bf16.msra.mxu0 0
    %1028 = vmatprep.subr.bf16.mxu0 0
    %1029 = vmatpush1.bf16.msra.mxu0 0
    %1030 = vmatprep.subr.bf16.mxu0 0
    %1031 = vmatpush1.bf16.msra.mxu0 0
    %1032 = vmatprep.subr.bf16.mxu0 0
    %1033 = vmatpush1.bf16.msra.mxu0 0
    %1034 = vmatprep.subr.bf16.mxu0 0
    %1035 = vmatpush1.bf16.msra.mxu0 0
    %1036 = vmatprep.subr.bf16.mxu0 0
    %1037 = vmatpush1.bf16.msra.mxu0 0
    %1038 = vmatprep.subr.bf16.mxu0 0
    %1039 = vmatpush1.bf16.msra.mxu0 0
    %1040 = vmatprep.subr.bf16.mxu0 0
    %1041 = vmatpush1.bf16.msra.mxu0 0
    %1042 = vmatprep.subr.bf16.mxu0 0
    %1043 = vmatpush1.bf16.msra.mxu0 0
    %1044 = vmatprep.subr.bf16.mxu0 0
    %1045 = vmatpush1.bf16.msra.mxu0 0
    %1046 = vmatprep.subr.bf16.mxu0 0
    %1047 = vmatpush1.bf16.msra.mxu0 0
    %1048 = vmatprep.subr.bf16.mxu0 0
    %1049 = vmatpush1.bf16.msra.mxu0 0
    %1050 = vmatprep.subr.bf16.mxu0 0
    %1051 = vmatpush1.bf16.msra.mxu0 0
    %1052 = vmatprep.mubr.bf16.mxu0 0
    %1053 = vmatmul.mubr.bf16.gmra.mrb[0].mxu0 %v1015
    %v1054 = vpop.f32.mrb[0].mxu0
    %v1055 = vadd.f32 %v1008, %v1054
    %v1056 = vpop.f32.mrb[0].mxu0
    %v1057 = vpop.f32.mrb[0].mxu0
    %v1058 = vadd.f32 %v1011, %v1057
    %v1059 = vpop.f32.mrb[0].mxu0
    %1060 = vdwg.mxu0
    %v1065 = vunpack.c.l.b16 %v120
    %v1066 = vunpack.c.l.b16 %v121
    %v1067 = vunpack.c.l.b16 %v122
    %v1068 = vunpack.c.l.b16 %v123
    %v1069 = vpack.c.b16 %v1066, %v1065
    %v1070 = vpack.c.b16 %v1068, %v1067
    %1073 = vmatprep.subr.bf16.mxu0 0
    %1074 = vmatpush1.bf16.msra.mxu0 %v1069
    %1075 = vmatprep.subr.bf16.mxu0 0
    %1076 = vmatpush1.bf16.msra.mxu0 %v1070
    %1077 = vmatprep.subr.bf16.mxu0 0
    %1078 = vmatpush1.bf16.msra.mxu0 0
    %1079 = vmatprep.subr.bf16.mxu0 0
    %1080 = vmatpush1.bf16.msra.mxu0 0
    %1081 = vmatprep.subr.bf16.mxu0 0
    %1082 = vmatpush1.bf16.msra.mxu0 0
    %1083 = vmatprep.subr.bf16.mxu0 0
    %1084 = vmatpush1.bf16.msra.mxu0 0
    %1085 = vmatprep.subr.bf16.mxu0 0
    %1086 = vmatpush1.bf16.msra.mxu0 0
    %1087 = vmatprep.subr.bf16.mxu0 0
    %1088 = vmatpush1.bf16.msra.mxu0 0
    %1089 = vmatprep.subr.bf16.mxu0 0
    %1090 = vmatpush1.bf16.msra.mxu0 0
    %1091 = vmatprep.subr.bf16.mxu0 0
    %1092 = vmatpush1.bf16.msra.mxu0 0
    %1093 = vmatprep.subr.bf16.mxu0 0
    %1094 = vmatpush1.bf16.msra.mxu0 0
    %1095 = vmatprep.subr.bf16.mxu0 0
    %1096 = vmatpush1.bf16.msra.mxu0 0
    %1097 = vmatprep.subr.bf16.mxu0 0
    %1098 = vmatpush1.bf16.msra.mxu0 0
    %1099 = vmatprep.subr.bf16.mxu0 0
    %1100 = vmatpush1.bf16.msra.mxu0 0
    %1101 = vmatprep.subr.bf16.mxu0 0
    %1102 = vmatpush1.bf16.msra.mxu0 0
    %1103 = vmatprep.subr.bf16.mxu0 0
    %1104 = vmatpush1.bf16.msra.mxu0 0
    %1105 = vmatprep.mubr.bf16.mxu0 0
    %1106 = vmatmul.mubr.bf16.gmra.mrb[0].mxu0 %v224
    %v1107 = vpop.f32.mrb[0].mxu0
    %v1108 = vadd.f32 0.0, %v1107
    %v1109 = vpop.f32.mrb[0].mxu0
    %v1110 = vpop.f32.mrb[0].mxu0
    %v1111 = vadd.f32 0.0, %v1110
    %v1112 = vpop.f32.mrb[0].mxu0
    %1113 = vdwg.mxu0
    %v1118 = vunpack.c.l.b16 %v136
    %v1119 = vunpack.c.l.b16 %v137
    %v1120 = vunpack.c.l.b16 %v138
    %v1121 = vunpack.c.l.b16 %v139
    %v1122 = vpack.c.b16 %v1119, %v1118
    %v1123 = vpack.c.b16 %v1121, %v1120
    %1126 = vmatprep.subr.bf16.mxu0 0
    %1127 = vmatpush1.bf16.msra.mxu0 %v1122
    %1128 = vmatprep.subr.bf16.mxu0 0
    %1129 = vmatpush1.bf16.msra.mxu0 %v1123
    %1130 = vmatprep.subr.bf16.mxu0 0
    %1131 = vmatpush1.bf16.msra.mxu0 0
    %1132 = vmatprep.subr.bf16.mxu0 0
    %1133 = vmatpush1.bf16.msra.mxu0 0
    %1134 = vmatprep.subr.bf16.mxu0 0
    %1135 = vmatpush1.bf16.msra.mxu0 0
    %1136 = vmatprep.subr.bf16.mxu0 0
    %1137 = vmatpush1.bf16.msra.mxu0 0
    %1138 = vmatprep.subr.bf16.mxu0 0
    %1139 = vmatpush1.bf16.msra.mxu0 0
    %1140 = vmatprep.subr.bf16.mxu0 0
    %1141 = vmatpush1.bf16.msra.mxu0 0
    %1142 = vmatprep.subr.bf16.mxu0 0
    %1143 = vmatpush1.bf16.msra.mxu0 0
    %1144 = vmatprep.subr.bf16.mxu0 0
    %1145 = vmatpush1.bf16.msra.mxu0 0
    %1146 = vmatprep.subr.bf16.mxu0 0
    %1147 = vmatpush1.bf16.msra.mxu0 0
    %1148 = vmatprep.subr.bf16.mxu0 0
    %1149 = vmatpush1.bf16.msra.mxu0 0
    %1150 = vmatprep.subr.bf16.mxu0 0
    %1151 = vmatpush1.bf16.msra.mxu0 0
    %1152 = vmatprep.subr.bf16.mxu0 0
    %1153 = vmatpush1.bf16.msra.mxu0 0
    %1154 = vmatprep.subr.bf16.mxu0 0
    %1155 = vmatpush1.bf16.msra.mxu0 0
    %1156 = vmatprep.subr.bf16.mxu0 0
    %1157 = vmatpush1.bf16.msra.mxu0 0
    %1158 = vmatprep.mubr.bf16.mxu0 0
    %1159 = vmatmul.mubr.bf16.gmra.mrb[0].mxu0 %v224
    %v1160 = vpop.f32.mrb[0].mxu0
    %v1161 = vadd.f32 0.0, %v1160
    %v1162 = vpop.f32.mrb[0].mxu0
    %v1163 = vpop.f32.mrb[0].mxu0
    %v1164 = vadd.f32 0.0, %v1163
    %v1165 = vpop.f32.mrb[0].mxu0
    %1166 = vdwg.mxu0
    %v1171 = vunpack.c.l.b16 %v152
    %v1172 = vunpack.c.l.b16 %v153
    %v1173 = vunpack.c.l.b16 %v154
    %v1174 = vunpack.c.l.b16 %v155
    %v1175 = vpack.c.b16 %v1172, %v1171
    %v1176 = vpack.c.b16 %v1174, %v1173
    %1179 = vmatprep.subr.bf16.mxu0 0
    %1180 = vmatpush1.bf16.msra.mxu0 %v1175
    %1181 = vmatprep.subr.bf16.mxu0 0
    %1182 = vmatpush1.bf16.msra.mxu0 %v1176
    %1183 = vmatprep.subr.bf16.mxu0 0
    %1184 = vmatpush1.bf16.msra.mxu0 0
    %1185 = vmatprep.subr.bf16.mxu0 0
    %1186 = vmatpush1.bf16.msra.mxu0 0
    %1187 = vmatprep.subr.bf16.mxu0 0
    %1188 = vmatpush1.bf16.msra.mxu0 0
    %1189 = vmatprep.subr.bf16.mxu0 0
    %1190 = vmatpush1.bf16.msra.mxu0 0
    %1191 = vmatprep.subr.bf16.mxu0 0
    %1192 = vmatpush1.bf16.msra.mxu0 0
    %1193 = vmatprep.subr.bf16.mxu0 0
    %1194 = vmatpush1.bf16.msra.mxu0 0
    %1195 = vmatprep.subr.bf16.mxu0 0
    %1196 = vmatpush1.bf16.msra.mxu0 0
    %1197 = vmatprep.subr.bf16.mxu0 0
    %1198 = vmatpush1.bf16.msra.mxu0 0
    %1199 = vmatprep.subr.bf16.mxu0 0
    %1200 = vmatpush1.bf16.msra.mxu0 0
    %1201 = vmatprep.subr.bf16.mxu0 0
    %1202 = vmatpush1.bf16.msra.mxu0 0
    %1203 = vmatprep.subr.bf16.mxu0 0
    %1204 = vmatpush1.bf16.msra.mxu0 0
    %1205 = vmatprep.subr.bf16.mxu0 0
    %1206 = vmatpush1.bf16.msra.mxu0 0
    %1207 = vmatprep.subr.bf16.mxu0 0
    %1208 = vmatpush1.bf16.msra.mxu0 0
    %1209 = vmatprep.subr.bf16.mxu0 0
    %1210 = vmatpush1.bf16.msra.mxu0 0
    %1211 = vmatprep.mubr.bf16.mxu0 0
    %1212 = vmatmul.mubr.bf16.gmra.mrb[0].mxu0 %v224
    %v1213 = vpop.f32.mrb[0].mxu0
    %v1214 = vadd.f32 0.0, %v1213
    %v1215 = vpop.f32.mrb[0].mxu0
    %v1216 = vpop.f32.mrb[0].mxu0
    %v1217 = vadd.f32 0.0, %v1216
    %v1218 = vpop.f32.mrb[0].mxu0
    %1219 = vdwg.mxu0
    %v1220 = vpack.c.bf16 %v1108, %v1108
    %v1221 = vpack.c.bf16 %v1111, %v1111
    %v1222 = vpack.c.bf16 %v1161, %v1161
    %v1223 = vpack.c.bf16 %v1164, %v1164
    %v1224 = vpack.c.bf16 %v1214, %v1214
    %v1225 = vpack.c.bf16 %v1217, %v1217
    %v1227 = vsel %vm89, %v1220, 0
    %v1230 = vsel %vm89, %v1222, 0
    %1232 = vmatprep.subr.bf16.mxu0 0
    %1233 = vmatpush1.bf16.xpose.msra.mxu0 %v1230
    %1234 = vmatprep.subr.bf16.mxu0 0
    %1235 = vmatpush1.bf16.xpose.msra.mxu0 0
    %1236 = vmatprep.subr.bf16.mxu0 0
    %1237 = vmatpush1.bf16.xpose.msra.mxu0 0
    %1238 = vmatprep.subr.bf16.mxu0 0
    %1239 = vmatpush1.bf16.xpose.msra.mxu0 0
    %1240 = vmatprep.subr.bf16.mxu0 0
    %1241 = vmatpush1.bf16.xpose.msra.mxu0 0
    %1242 = vmatprep.subr.bf16.mxu0 0
    %1243 = vmatpush1.bf16.xpose.msra.mxu0 0
    %1244 = vmatprep.subr.bf16.mxu0 0
    %1245 = vmatpush1.bf16.xpose.msra.mxu0 0
    %1246 = vmatprep.subr.bf16.mxu0 0
    %1247 = vmatpush1.bf16.xpose.msra.mxu0 0
    %1248 = vmatprep.subr.bf16.mxu0 0
    %1249 = vmatpush1.bf16.xpose.msra.mxu0 0
    %1250 = vmatprep.subr.bf16.mxu0 0
    %1251 = vmatpush1.bf16.xpose.msra.mxu0 0
    %1252 = vmatprep.subr.bf16.mxu0 0
    %1253 = vmatpush1.bf16.xpose.msra.mxu0 0
    %1254 = vmatprep.subr.bf16.mxu0 0
    %1255 = vmatpush1.bf16.xpose.msra.mxu0 0
    %1256 = vmatprep.subr.bf16.mxu0 0
    %1257 = vmatpush1.bf16.xpose.msra.mxu0 0
    %1258 = vmatprep.subr.bf16.mxu0 0
    %1259 = vmatpush1.bf16.xpose.msra.mxu0 0
    %1260 = vmatprep.subr.bf16.mxu0 0
    %1261 = vmatpush1.bf16.xpose.msra.mxu0 0
    %1262 = vmatprep.subr.bf16.mxu0 0
    %1263 = vmatpush1.bf16.xpose.msra.mxu0 0
    %1264 = vmatprep.mubr.bf16.mxu0 0
    %1265 = vmatmul.mubr.bf16.gmra.mrb[0].mxu0 %v1227
    %v1266 = vpop.f32.mrb[0].mxu0
    %v1267 = vadd.f32 %v109, %v1266
    %v1268 = vpop.f32.mrb[0].mxu0
    %v1269 = vpop.f32.mrb[0].mxu0
    %v1270 = vpop.f32.mrb[0].mxu0
    %1271 = vdwg.mxu0
    %v1273 = vsel %vm89, %v1221, 0
    %v1276 = vsel %vm89, %v1223, 0
    %1278 = vmatprep.subr.bf16.mxu0 0
    %1279 = vmatpush1.bf16.xpose.msra.mxu0 %v1276
    %1280 = vmatprep.subr.bf16.mxu0 0
    %1281 = vmatpush1.bf16.xpose.msra.mxu0 0
    %1282 = vmatprep.subr.bf16.mxu0 0
    %1283 = vmatpush1.bf16.xpose.msra.mxu0 0
    %1284 = vmatprep.subr.bf16.mxu0 0
    %1285 = vmatpush1.bf16.xpose.msra.mxu0 0
    %1286 = vmatprep.subr.bf16.mxu0 0
    %1287 = vmatpush1.bf16.xpose.msra.mxu0 0
    %1288 = vmatprep.subr.bf16.mxu0 0
    %1289 = vmatpush1.bf16.xpose.msra.mxu0 0
    %1290 = vmatprep.subr.bf16.mxu0 0
    %1291 = vmatpush1.bf16.xpose.msra.mxu0 0
    %1292 = vmatprep.subr.bf16.mxu0 0
    %1293 = vmatpush1.bf16.xpose.msra.mxu0 0
    %1294 = vmatprep.subr.bf16.mxu0 0
    %1295 = vmatpush1.bf16.xpose.msra.mxu0 0
    %1296 = vmatprep.subr.bf16.mxu0 0
    %1297 = vmatpush1.bf16.xpose.msra.mxu0 0
    %1298 = vmatprep.subr.bf16.mxu0 0
    %1299 = vmatpush1.bf16.xpose.msra.mxu0 0
    %1300 = vmatprep.subr.bf16.mxu0 0
    %1301 = vmatpush1.bf16.xpose.msra.mxu0 0
    %1302 = vmatprep.subr.bf16.mxu0 0
    %1303 = vmatpush1.bf16.xpose.msra.mxu0 0
    %1304 = vmatprep.subr.bf16.mxu0 0
    %1305 = vmatpush1.bf16.xpose.msra.mxu0 0
    %1306 = vmatprep.subr.bf16.mxu0 0
    %1307 = vmatpush1.bf16.xpose.msra.mxu0 0
    %1308 = vmatprep.subr.bf16.mxu0 0
    %1309 = vmatpush1.bf16.xpose.msra.mxu0 0
    %1310 = vmatprep.mubr.bf16.mxu0 0
    %1311 = vmatmul.mubr.bf16.gmra.mrb[0].mxu0 %v1273
    %v1312 = vpop.f32.mrb[0].mxu0
    %v1313 = vadd.f32 %v111, %v1312
    %v1314 = vpop.f32.mrb[0].mxu0
    %v1315 = vpop.f32.mrb[0].mxu0
    %v1316 = vpop.f32.mrb[0].mxu0
    %1317 = vdwg.mxu0
    %v1318 = vsel %vm83, -1e+09, %v1267
    %v1319 = vsel %vm84, -1e+09, %v1313
    %v1320 = vsel %vm89, %v1318, -inf
    %1321 = vmax.xlane.f32.xlu0 %v1320
    %v1322 = vpop.xlane.xlu0 %1321
    %v1323 = vsel %vm89, %v1319, -inf
    %1324 = vmax.xlane.f32.xlu0 %v1323
    %v1325 = vpop.xlane.xlu0 %1324
    %v1326 = vsub.f32 %v1318, %v1322
    %v1327 = vsub.f32 %v1319, %v1325
    %v1328 = vmul.f32 %v1326, 1.442695
    %v1329 = vpow.pop %v1328
    %v1330 = vmul.f32 %v1327, 1.442695
    %v1331 = vpow.pop %v1330
    %v1332 = vsel %vm89, %v1329, 0.0
    %1333 = vadd.xlane.f32.xlu0 %v1332
    %v1334 = vpop.xlane.xlu0 %1333
    %v1335 = vsel %vm89, %v1331, 0.0
    %1336 = vadd.xlane.f32.xlu0 %v1335
    %v1337 = vpop.xlane.xlu0 %1336
    %v1338 = vrcp.pop %v1334
    %v1339 = vmul.f32 %v1329, %v1338
    %v1340 = vrcp.pop %v1337
    %v1341 = vmul.f32 %v1331, %v1340
    %v1342 = vpack.c.bf16 %v1339, %v1339
    %v1343 = vpack.c.bf16 %v1341, %v1341
    %v1345 = vsel %vm89, %v1342, 0
    %v1348 = vsel %vm500, %v1224, 0
    %1350 = vmatprep.subr.bf16.mxu0 0
    %1351 = vmatpush1.bf16.msra.mxu0 %v1348
    %1352 = vmatprep.subr.bf16.mxu0 0
    %1353 = vmatpush1.bf16.msra.mxu0 0
    %1354 = vmatprep.subr.bf16.mxu0 0
    %1355 = vmatpush1.bf16.msra.mxu0 0
    %1356 = vmatprep.subr.bf16.mxu0 0
    %1357 = vmatpush1.bf16.msra.mxu0 0
    %1358 = vmatprep.subr.bf16.mxu0 0
    %1359 = vmatpush1.bf16.msra.mxu0 0
    %1360 = vmatprep.subr.bf16.mxu0 0
    %1361 = vmatpush1.bf16.msra.mxu0 0
    %1362 = vmatprep.subr.bf16.mxu0 0
    %1363 = vmatpush1.bf16.msra.mxu0 0
    %1364 = vmatprep.subr.bf16.mxu0 0
    %1365 = vmatpush1.bf16.msra.mxu0 0
    %1366 = vmatprep.subr.bf16.mxu0 0
    %1367 = vmatpush1.bf16.msra.mxu0 0
    %1368 = vmatprep.subr.bf16.mxu0 0
    %1369 = vmatpush1.bf16.msra.mxu0 0
    %1370 = vmatprep.subr.bf16.mxu0 0
    %1371 = vmatpush1.bf16.msra.mxu0 0
    %1372 = vmatprep.subr.bf16.mxu0 0
    %1373 = vmatpush1.bf16.msra.mxu0 0
    %1374 = vmatprep.subr.bf16.mxu0 0
    %1375 = vmatpush1.bf16.msra.mxu0 0
    %1376 = vmatprep.subr.bf16.mxu0 0
    %1377 = vmatpush1.bf16.msra.mxu0 0
    %1378 = vmatprep.subr.bf16.mxu0 0
    %1379 = vmatpush1.bf16.msra.mxu0 0
    %1380 = vmatprep.subr.bf16.mxu0 0
    %1381 = vmatpush1.bf16.msra.mxu0 0
    %1382 = vmatprep.mubr.bf16.mxu0 0
    %1383 = vmatmul.mubr.bf16.gmra.mrb[0].mxu0 %v1345
    %v1384 = vpop.f32.mrb[0].mxu0
    %v1385 = vadd.f32 0.0, %v1384
    %v1386 = vpop.f32.mrb[0].mxu0
    %v1387 = vpop.f32.mrb[0].mxu0
    %v1388 = vpop.f32.mrb[0].mxu0
    %1389 = vdwg.mxu0
    %v1391 = vsel %vm89, %v1343, 0
    %v1394 = vsel %vm500, %v1225, 0
    %1396 = vmatprep.subr.bf16.mxu0 0
    %1397 = vmatpush1.bf16.msra.mxu0 %v1394
    %1398 = vmatprep.subr.bf16.mxu0 0
    %1399 = vmatpush1.bf16.msra.mxu0 0
    %1400 = vmatprep.subr.bf16.mxu0 0
    %1401 = vmatpush1.bf16.msra.mxu0 0
    %1402 = vmatprep.subr.bf16.mxu0 0
    %1403 = vmatpush1.bf16.msra.mxu0 0
    %1404 = vmatprep.subr.bf16.mxu0 0
    %1405 = vmatpush1.bf16.msra.mxu0 0
    %1406 = vmatprep.subr.bf16.mxu0 0
    %1407 = vmatpush1.bf16.msra.mxu0 0
    %1408 = vmatprep.subr.bf16.mxu0 0
    %1409 = vmatpush1.bf16.msra.mxu0 0
    %1410 = vmatprep.subr.bf16.mxu0 0
    %1411 = vmatpush1.bf16.msra.mxu0 0
    %1412 = vmatprep.subr.bf16.mxu0 0
    %1413 = vmatpush1.bf16.msra.mxu0 0
    %1414 = vmatprep.subr.bf16.mxu0 0
    %1415 = vmatpush1.bf16.msra.mxu0 0
    %1416 = vmatprep.subr.bf16.mxu0 0
    %1417 = vmatpush1.bf16.msra.mxu0 0
    %1418 = vmatprep.subr.bf16.mxu0 0
    %1419 = vmatpush1.bf16.msra.mxu0 0
    %1420 = vmatprep.subr.bf16.mxu0 0
    %1421 = vmatpush1.bf16.msra.mxu0 0
    %1422 = vmatprep.subr.bf16.mxu0 0
    %1423 = vmatpush1.bf16.msra.mxu0 0
    %1424 = vmatprep.subr.bf16.mxu0 0
    %1425 = vmatpush1.bf16.msra.mxu0 0
    %1426 = vmatprep.subr.bf16.mxu0 0
    %1427 = vmatpush1.bf16.msra.mxu0 0
    %1428 = vmatprep.mubr.bf16.mxu0 0
    %1429 = vmatmul.mubr.bf16.gmra.mrb[0].mxu0 %v1391
    %v1430 = vpop.f32.mrb[0].mxu0
    %v1431 = vadd.f32 0.0, %v1430
    %v1432 = vpop.f32.mrb[0].mxu0
    %v1433 = vpop.f32.mrb[0].mxu0
    %v1434 = vpop.f32.mrb[0].mxu0
    %1435 = vdwg.mxu0
    %v1436 = vpack.c.bf16 %v1431, %v1385
    %v1438 = vsel %vm89, %v1436, 0
    %v1441 = vsel %vm500, %v162, 0
    %1443 = vmatprep.subr.bf16.mxu0 0
    %1444 = vmatpush1.bf16.msra.mxu0 %v1441
    %1445 = vmatprep.subr.bf16.mxu0 0
    %1446 = vmatpush1.bf16.msra.mxu0 0
    %1447 = vmatprep.subr.bf16.mxu0 0
    %1448 = vmatpush1.bf16.msra.mxu0 0
    %1449 = vmatprep.subr.bf16.mxu0 0
    %1450 = vmatpush1.bf16.msra.mxu0 0
    %1451 = vmatprep.subr.bf16.mxu0 0
    %1452 = vmatpush1.bf16.msra.mxu0 0
    %1453 = vmatprep.subr.bf16.mxu0 0
    %1454 = vmatpush1.bf16.msra.mxu0 0
    %1455 = vmatprep.subr.bf16.mxu0 0
    %1456 = vmatpush1.bf16.msra.mxu0 0
    %1457 = vmatprep.subr.bf16.mxu0 0
    %1458 = vmatpush1.bf16.msra.mxu0 0
    %1459 = vmatprep.subr.bf16.mxu0 0
    %1460 = vmatpush1.bf16.msra.mxu0 0
    %1461 = vmatprep.subr.bf16.mxu0 0
    %1462 = vmatpush1.bf16.msra.mxu0 0
    %1463 = vmatprep.subr.bf16.mxu0 0
    %1464 = vmatpush1.bf16.msra.mxu0 0
    %1465 = vmatprep.subr.bf16.mxu0 0
    %1466 = vmatpush1.bf16.msra.mxu0 0
    %1467 = vmatprep.subr.bf16.mxu0 0
    %1468 = vmatpush1.bf16.msra.mxu0 0
    %1469 = vmatprep.subr.bf16.mxu0 0
    %1470 = vmatpush1.bf16.msra.mxu0 0
    %1471 = vmatprep.subr.bf16.mxu0 0
    %1472 = vmatpush1.bf16.msra.mxu0 0
    %1473 = vmatprep.subr.bf16.mxu0 0
    %1474 = vmatpush1.bf16.msra.mxu0 0
    %1475 = vmatprep.mubr.bf16.mxu0 0
    %1476 = vmatmul.mubr.bf16.gmra.mrb[0].mxu0 %v1438
    %v1477 = vpop.f32.mrb[0].mxu0
    %v1478 = vadd.f32 0.0, %v1477
    %v1479 = vpop.f32.mrb[0].mxu0
    %v1480 = vpop.f32.mrb[0].mxu0
    %v1481 = vadd.f32 0.0, %v1480
    %v1482 = vpop.f32.mrb[0].mxu0
    %1483 = vdwg.mxu0
    %v1484 = vadd.f32 %v1055, %v1478
    %v1485 = vadd.f32 %v1058, %v1481
    %v1490 = vunpack.c.l.b16 %v124
    %v1491 = vunpack.c.l.b16 %v125
    %v1492 = vunpack.c.l.b16 %v126
    %v1493 = vunpack.c.l.b16 %v127
    %v1494 = vpack.c.b16 %v1491, %v1490
    %v1495 = vpack.c.b16 %v1493, %v1492
    %1498 = vmatprep.subr.bf16.mxu0 0
    %1499 = vmatpush1.bf16.msra.mxu0 %v1494
    %1500 = vmatprep.subr.bf16.mxu0 0
    %1501 = vmatpush1.bf16.msra.mxu0 %v1495
    %1502 = vmatprep.subr.bf16.mxu0 0
    %1503 = vmatpush1.bf16.msra.mxu0 0
    %1504 = vmatprep.subr.bf16.mxu0 0
    %1505 = vmatpush1.bf16.msra.mxu0 0
    %1506 = vmatprep.subr.bf16.mxu0 0
    %1507 = vmatpush1.bf16.msra.mxu0 0
    %1508 = vmatprep.subr.bf16.mxu0 0
    %1509 = vmatpush1.bf16.msra.mxu0 0
    %1510 = vmatprep.subr.bf16.mxu0 0
    %1511 = vmatpush1.bf16.msra.mxu0 0
    %1512 = vmatprep.subr.bf16.mxu0 0
    %1513 = vmatpush1.bf16.msra.mxu0 0
    %1514 = vmatprep.subr.bf16.mxu0 0
    %1515 = vmatpush1.bf16.msra.mxu0 0
    %1516 = vmatprep.subr.bf16.mxu0 0
    %1517 = vmatpush1.bf16.msra.mxu0 0
    %1518 = vmatprep.subr.bf16.mxu0 0
    %1519 = vmatpush1.bf16.msra.mxu0 0
    %1520 = vmatprep.subr.bf16.mxu0 0
    %1521 = vmatpush1.bf16.msra.mxu0 0
    %1522 = vmatprep.subr.bf16.mxu0 0
    %1523 = vmatpush1.bf16.msra.mxu0 0
    %1524 = vmatprep.subr.bf16.mxu0 0
    %1525 = vmatpush1.bf16.msra.mxu0 0
    %1526 = vmatprep.subr.bf16.mxu0 0
    %1527 = vmatpush1.bf16.msra.mxu0 0
    %1528 = vmatprep.subr.bf16.mxu0 0
    %1529 = vmatpush1.bf16.msra.mxu0 0
    %1530 = vmatprep.mubr.bf16.mxu0 0
    %1531 = vmatmul.mubr.bf16.gmra.mrb[0].mxu0 %v224
    %v1532 = vpop.f32.mrb[0].mxu0
    %v1533 = vadd.f32 0.0, %v1532
    %v1534 = vpop.f32.mrb[0].mxu0
    %v1535 = vpop.f32.mrb[0].mxu0
    %v1536 = vadd.f32 0.0, %v1535
    %v1537 = vpop.f32.mrb[0].mxu0
    %1538 = vdwg.mxu0
    %v1543 = vunpack.c.l.b16 %v140
    %v1544 = vunpack.c.l.b16 %v141
    %v1545 = vunpack.c.l.b16 %v142
    %v1546 = vunpack.c.l.b16 %v143
    %v1547 = vpack.c.b16 %v1544, %v1543
    %v1548 = vpack.c.b16 %v1546, %v1545
    %1551 = vmatprep.subr.bf16.mxu0 0
    %1552 = vmatpush1.bf16.msra.mxu0 %v1547
    %1553 = vmatprep.subr.bf16.mxu0 0
    %1554 = vmatpush1.bf16.msra.mxu0 %v1548
    %1555 = vmatprep.subr.bf16.mxu0 0
    %1556 = vmatpush1.bf16.msra.mxu0 0
    %1557 = vmatprep.subr.bf16.mxu0 0
    %1558 = vmatpush1.bf16.msra.mxu0 0
    %1559 = vmatprep.subr.bf16.mxu0 0
    %1560 = vmatpush1.bf16.msra.mxu0 0
    %1561 = vmatprep.subr.bf16.mxu0 0
    %1562 = vmatpush1.bf16.msra.mxu0 0
    %1563 = vmatprep.subr.bf16.mxu0 0
    %1564 = vmatpush1.bf16.msra.mxu0 0
    %1565 = vmatprep.subr.bf16.mxu0 0
    %1566 = vmatpush1.bf16.msra.mxu0 0
    %1567 = vmatprep.subr.bf16.mxu0 0
    %1568 = vmatpush1.bf16.msra.mxu0 0
    %1569 = vmatprep.subr.bf16.mxu0 0
    %1570 = vmatpush1.bf16.msra.mxu0 0
    %1571 = vmatprep.subr.bf16.mxu0 0
    %1572 = vmatpush1.bf16.msra.mxu0 0
    %1573 = vmatprep.subr.bf16.mxu0 0
    %1574 = vmatpush1.bf16.msra.mxu0 0
    %1575 = vmatprep.subr.bf16.mxu0 0
    %1576 = vmatpush1.bf16.msra.mxu0 0
    %1577 = vmatprep.subr.bf16.mxu0 0
    %1578 = vmatpush1.bf16.msra.mxu0 0
    %1579 = vmatprep.subr.bf16.mxu0 0
    %1580 = vmatpush1.bf16.msra.mxu0 0
    %1581 = vmatprep.subr.bf16.mxu0 0
    %1582 = vmatpush1.bf16.msra.mxu0 0
    %1583 = vmatprep.mubr.bf16.mxu0 0
    %1584 = vmatmul.mubr.bf16.gmra.mrb[0].mxu0 %v224
    %v1585 = vpop.f32.mrb[0].mxu0
    %v1586 = vadd.f32 0.0, %v1585
    %v1587 = vpop.f32.mrb[0].mxu0
    %v1588 = vpop.f32.mrb[0].mxu0
    %v1589 = vadd.f32 0.0, %v1588
    %v1590 = vpop.f32.mrb[0].mxu0
    %1591 = vdwg.mxu0
    %v1596 = vunpack.c.l.b16 %v156
    %v1597 = vunpack.c.l.b16 %v157
    %v1598 = vunpack.c.l.b16 %v158
    %v1599 = vunpack.c.l.b16 %v159
    %v1600 = vpack.c.b16 %v1597, %v1596
    %v1601 = vpack.c.b16 %v1599, %v1598
    %1604 = vmatprep.subr.bf16.mxu0 0
    %1605 = vmatpush1.bf16.msra.mxu0 %v1600
    %1606 = vmatprep.subr.bf16.mxu0 0
    %1607 = vmatpush1.bf16.msra.mxu0 %v1601
    %1608 = vmatprep.subr.bf16.mxu0 0
    %1609 = vmatpush1.bf16.msra.mxu0 0
    %1610 = vmatprep.subr.bf16.mxu0 0
    %1611 = vmatpush1.bf16.msra.mxu0 0
    %1612 = vmatprep.subr.bf16.mxu0 0
    %1613 = vmatpush1.bf16.msra.mxu0 0
    %1614 = vmatprep.subr.bf16.mxu0 0
    %1615 = vmatpush1.bf16.msra.mxu0 0
    %1616 = vmatprep.subr.bf16.mxu0 0
    %1617 = vmatpush1.bf16.msra.mxu0 0
    %1618 = vmatprep.subr.bf16.mxu0 0
    %1619 = vmatpush1.bf16.msra.mxu0 0
    %1620 = vmatprep.subr.bf16.mxu0 0
    %1621 = vmatpush1.bf16.msra.mxu0 0
    %1622 = vmatprep.subr.bf16.mxu0 0
    %1623 = vmatpush1.bf16.msra.mxu0 0
    %1624 = vmatprep.subr.bf16.mxu0 0
    %1625 = vmatpush1.bf16.msra.mxu0 0
    %1626 = vmatprep.subr.bf16.mxu0 0
    %1627 = vmatpush1.bf16.msra.mxu0 0
    %1628 = vmatprep.subr.bf16.mxu0 0
    %1629 = vmatpush1.bf16.msra.mxu0 0
    %1630 = vmatprep.subr.bf16.mxu0 0
    %1631 = vmatpush1.bf16.msra.mxu0 0
    %1632 = vmatprep.subr.bf16.mxu0 0
    %1633 = vmatpush1.bf16.msra.mxu0 0
    %1634 = vmatprep.subr.bf16.mxu0 0
    %1635 = vmatpush1.bf16.msra.mxu0 0
    %1636 = vmatprep.mubr.bf16.mxu0 0
    %1637 = vmatmul.mubr.bf16.gmra.mrb[0].mxu0 %v224
    %v1638 = vpop.f32.mrb[0].mxu0
    %v1639 = vadd.f32 0.0, %v1638
    %v1640 = vpop.f32.mrb[0].mxu0
    %v1641 = vpop.f32.mrb[0].mxu0
    %v1642 = vadd.f32 0.0, %v1641
    %v1643 = vpop.f32.mrb[0].mxu0
    %1644 = vdwg.mxu0
    %v1645 = vpack.c.bf16 %v1533, %v1533
    %v1646 = vpack.c.bf16 %v1536, %v1536
    %v1647 = vpack.c.bf16 %v1586, %v1586
    %v1648 = vpack.c.bf16 %v1589, %v1589
    %v1649 = vpack.c.bf16 %v1639, %v1639
    %v1650 = vpack.c.bf16 %v1642, %v1642
    %v1652 = vsel %vm89, %v1645, 0
    %v1655 = vsel %vm89, %v1647, 0
    %1657 = vmatprep.subr.bf16.mxu0 0
    %1658 = vmatpush1.bf16.xpose.msra.mxu0 %v1655
    %1659 = vmatprep.subr.bf16.mxu0 0
    %1660 = vmatpush1.bf16.xpose.msra.mxu0 0
    %1661 = vmatprep.subr.bf16.mxu0 0
    %1662 = vmatpush1.bf16.xpose.msra.mxu0 0
    %1663 = vmatprep.subr.bf16.mxu0 0
    %1664 = vmatpush1.bf16.xpose.msra.mxu0 0
    %1665 = vmatprep.subr.bf16.mxu0 0
    %1666 = vmatpush1.bf16.xpose.msra.mxu0 0
    %1667 = vmatprep.subr.bf16.mxu0 0
    %1668 = vmatpush1.bf16.xpose.msra.mxu0 0
    %1669 = vmatprep.subr.bf16.mxu0 0
    %1670 = vmatpush1.bf16.xpose.msra.mxu0 0
    %1671 = vmatprep.subr.bf16.mxu0 0
    %1672 = vmatpush1.bf16.xpose.msra.mxu0 0
    %1673 = vmatprep.subr.bf16.mxu0 0
    %1674 = vmatpush1.bf16.xpose.msra.mxu0 0
    %1675 = vmatprep.subr.bf16.mxu0 0
    %1676 = vmatpush1.bf16.xpose.msra.mxu0 0
    %1677 = vmatprep.subr.bf16.mxu0 0
    %1678 = vmatpush1.bf16.xpose.msra.mxu0 0
    %1679 = vmatprep.subr.bf16.mxu0 0
    %1680 = vmatpush1.bf16.xpose.msra.mxu0 0
    %1681 = vmatprep.subr.bf16.mxu0 0
    %1682 = vmatpush1.bf16.xpose.msra.mxu0 0
    %1683 = vmatprep.subr.bf16.mxu0 0
    %1684 = vmatpush1.bf16.xpose.msra.mxu0 0
    %1685 = vmatprep.subr.bf16.mxu0 0
    %1686 = vmatpush1.bf16.xpose.msra.mxu0 0
    %1687 = vmatprep.subr.bf16.mxu0 0
    %1688 = vmatpush1.bf16.xpose.msra.mxu0 0
    %1689 = vmatprep.mubr.bf16.mxu0 0
    %1690 = vmatmul.mubr.bf16.gmra.mrb[0].mxu0 %v1652
    %v1691 = vpop.f32.mrb[0].mxu0
    %v1692 = vadd.f32 %v109, %v1691
    %v1693 = vpop.f32.mrb[0].mxu0
    %v1694 = vpop.f32.mrb[0].mxu0
    %v1695 = vpop.f32.mrb[0].mxu0
    %1696 = vdwg.mxu0
    %v1698 = vsel %vm89, %v1646, 0
    %v1701 = vsel %vm89, %v1648, 0
    %1703 = vmatprep.subr.bf16.mxu0 0
    %1704 = vmatpush1.bf16.xpose.msra.mxu0 %v1701
    %1705 = vmatprep.subr.bf16.mxu0 0
    %1706 = vmatpush1.bf16.xpose.msra.mxu0 0
    %1707 = vmatprep.subr.bf16.mxu0 0
    %1708 = vmatpush1.bf16.xpose.msra.mxu0 0
    %1709 = vmatprep.subr.bf16.mxu0 0
    %1710 = vmatpush1.bf16.xpose.msra.mxu0 0
    %1711 = vmatprep.subr.bf16.mxu0 0
    %1712 = vmatpush1.bf16.xpose.msra.mxu0 0
    %1713 = vmatprep.subr.bf16.mxu0 0
    %1714 = vmatpush1.bf16.xpose.msra.mxu0 0
    %1715 = vmatprep.subr.bf16.mxu0 0
    %1716 = vmatpush1.bf16.xpose.msra.mxu0 0
    %1717 = vmatprep.subr.bf16.mxu0 0
    %1718 = vmatpush1.bf16.xpose.msra.mxu0 0
    %1719 = vmatprep.subr.bf16.mxu0 0
    %1720 = vmatpush1.bf16.xpose.msra.mxu0 0
    %1721 = vmatprep.subr.bf16.mxu0 0
    %1722 = vmatpush1.bf16.xpose.msra.mxu0 0
    %1723 = vmatprep.subr.bf16.mxu0 0
    %1724 = vmatpush1.bf16.xpose.msra.mxu0 0
    %1725 = vmatprep.subr.bf16.mxu0 0
    %1726 = vmatpush1.bf16.xpose.msra.mxu0 0
    %1727 = vmatprep.subr.bf16.mxu0 0
    %1728 = vmatpush1.bf16.xpose.msra.mxu0 0
    %1729 = vmatprep.subr.bf16.mxu0 0
    %1730 = vmatpush1.bf16.xpose.msra.mxu0 0
    %1731 = vmatprep.subr.bf16.mxu0 0
    %1732 = vmatpush1.bf16.xpose.msra.mxu0 0
    %1733 = vmatprep.subr.bf16.mxu0 0
    %1734 = vmatpush1.bf16.xpose.msra.mxu0 0
    %1735 = vmatprep.mubr.bf16.mxu0 0
    %1736 = vmatmul.mubr.bf16.gmra.mrb[0].mxu0 %v1698
    %v1737 = vpop.f32.mrb[0].mxu0
    %v1738 = vadd.f32 %v111, %v1737
    %v1739 = vpop.f32.mrb[0].mxu0
    %v1740 = vpop.f32.mrb[0].mxu0
    %v1741 = vpop.f32.mrb[0].mxu0
    %1742 = vdwg.mxu0
    %v1743 = vsel %vm83, -1e+09, %v1692
    %v1744 = vsel %vm84, -1e+09, %v1738
    %v1745 = vsel %vm89, %v1743, -inf
    %1746 = vmax.xlane.f32.xlu0 %v1745
    %v1747 = vpop.xlane.xlu0 %1746
    %v1748 = vsel %vm89, %v1744, -inf
    %1749 = vmax.xlane.f32.xlu0 %v1748
    %v1750 = vpop.xlane.xlu0 %1749
    %v1751 = vsub.f32 %v1743, %v1747
    %v1752 = vsub.f32 %v1744, %v1750
    %v1753 = vmul.f32 %v1751, 1.442695
    %v1754 = vpow.pop %v1753
    %v1755 = vmul.f32 %v1752, 1.442695
    %v1756 = vpow.pop %v1755
    %v1757 = vsel %vm89, %v1754, 0.0
    %1758 = vadd.xlane.f32.xlu0 %v1757
    %v1759 = vpop.xlane.xlu0 %1758
    %v1760 = vsel %vm89, %v1756, 0.0
    %1761 = vadd.xlane.f32.xlu0 %v1760
    %v1762 = vpop.xlane.xlu0 %1761
    %v1763 = vrcp.pop %v1759
    %v1764 = vmul.f32 %v1754, %v1763
    %v1765 = vrcp.pop %v1762
    %v1766 = vmul.f32 %v1756, %v1765
    %v1767 = vpack.c.bf16 %v1764, %v1764
    %v1768 = vpack.c.bf16 %v1766, %v1766
    %v1770 = vsel %vm89, %v1767, 0
    %v1773 = vsel %vm500, %v1649, 0
    %1775 = vmatprep.subr.bf16.mxu0 0
    %1776 = vmatpush1.bf16.msra.mxu0 %v1773
    %1777 = vmatprep.subr.bf16.mxu0 0
    %1778 = vmatpush1.bf16.msra.mxu0 0
    %1779 = vmatprep.subr.bf16.mxu0 0
    %1780 = vmatpush1.bf16.msra.mxu0 0
    %1781 = vmatprep.subr.bf16.mxu0 0
    %1782 = vmatpush1.bf16.msra.mxu0 0
    %1783 = vmatprep.subr.bf16.mxu0 0
    %1784 = vmatpush1.bf16.msra.mxu0 0
    %1785 = vmatprep.subr.bf16.mxu0 0
    %1786 = vmatpush1.bf16.msra.mxu0 0
    %1787 = vmatprep.subr.bf16.mxu0 0
    %1788 = vmatpush1.bf16.msra.mxu0 0
    %1789 = vmatprep.subr.bf16.mxu0 0
    %1790 = vmatpush1.bf16.msra.mxu0 0
    %1791 = vmatprep.subr.bf16.mxu0 0
    %1792 = vmatpush1.bf16.msra.mxu0 0
    %1793 = vmatprep.subr.bf16.mxu0 0
    %1794 = vmatpush1.bf16.msra.mxu0 0
    %1795 = vmatprep.subr.bf16.mxu0 0
    %1796 = vmatpush1.bf16.msra.mxu0 0
    %1797 = vmatprep.subr.bf16.mxu0 0
    %1798 = vmatpush1.bf16.msra.mxu0 0
    %1799 = vmatprep.subr.bf16.mxu0 0
    %1800 = vmatpush1.bf16.msra.mxu0 0
    %1801 = vmatprep.subr.bf16.mxu0 0
    %1802 = vmatpush1.bf16.msra.mxu0 0
    %1803 = vmatprep.subr.bf16.mxu0 0
    %1804 = vmatpush1.bf16.msra.mxu0 0
    %1805 = vmatprep.subr.bf16.mxu0 0
    %1806 = vmatpush1.bf16.msra.mxu0 0
    %1807 = vmatprep.mubr.bf16.mxu0 0
    %1808 = vmatmul.mubr.bf16.gmra.mrb[0].mxu0 %v1770
    %v1809 = vpop.f32.mrb[0].mxu0
    %v1810 = vadd.f32 0.0, %v1809
    %v1811 = vpop.f32.mrb[0].mxu0
    %v1812 = vpop.f32.mrb[0].mxu0
    %v1813 = vpop.f32.mrb[0].mxu0
    %1814 = vdwg.mxu0
    %v1816 = vsel %vm89, %v1768, 0
    %v1819 = vsel %vm500, %v1650, 0
    %1821 = vmatprep.subr.bf16.mxu0 0
    %1822 = vmatpush1.bf16.msra.mxu0 %v1819
    %1823 = vmatprep.subr.bf16.mxu0 0
    %1824 = vmatpush1.bf16.msra.mxu0 0
    %1825 = vmatprep.subr.bf16.mxu0 0
    %1826 = vmatpush1.bf16.msra.mxu0 0
    %1827 = vmatprep.subr.bf16.mxu0 0
    %1828 = vmatpush1.bf16.msra.mxu0 0
    %1829 = vmatprep.subr.bf16.mxu0 0
    %1830 = vmatpush1.bf16.msra.mxu0 0
    %1831 = vmatprep.subr.bf16.mxu0 0
    %1832 = vmatpush1.bf16.msra.mxu0 0
    %1833 = vmatprep.subr.bf16.mxu0 0
    %1834 = vmatpush1.bf16.msra.mxu0 0
    %1835 = vmatprep.subr.bf16.mxu0 0
    %1836 = vmatpush1.bf16.msra.mxu0 0
    %1837 = vmatprep.subr.bf16.mxu0 0
    %1838 = vmatpush1.bf16.msra.mxu0 0
    %1839 = vmatprep.subr.bf16.mxu0 0
    %1840 = vmatpush1.bf16.msra.mxu0 0
    %1841 = vmatprep.subr.bf16.mxu0 0
    %1842 = vmatpush1.bf16.msra.mxu0 0
    %1843 = vmatprep.subr.bf16.mxu0 0
    %1844 = vmatpush1.bf16.msra.mxu0 0
    %1845 = vmatprep.subr.bf16.mxu0 0
    %1846 = vmatpush1.bf16.msra.mxu0 0
    %1847 = vmatprep.subr.bf16.mxu0 0
    %1848 = vmatpush1.bf16.msra.mxu0 0
    %1849 = vmatprep.subr.bf16.mxu0 0
    %1850 = vmatpush1.bf16.msra.mxu0 0
    %1851 = vmatprep.subr.bf16.mxu0 0
    %1852 = vmatpush1.bf16.msra.mxu0 0
    %1853 = vmatprep.mubr.bf16.mxu0 0
    %1854 = vmatmul.mubr.bf16.gmra.mrb[0].mxu0 %v1816
    %v1855 = vpop.f32.mrb[0].mxu0
    %v1856 = vadd.f32 0.0, %v1855
    %v1857 = vpop.f32.mrb[0].mxu0
    %v1858 = vpop.f32.mrb[0].mxu0
    %v1859 = vpop.f32.mrb[0].mxu0
    %1860 = vdwg.mxu0
    %v1861 = vpack.c.bf16 %v1856, %v1810
    %v1863 = vsel %vm89, %v1861, 0
    %v1866 = vsel %vm500, %v163, 0
    %1868 = vmatprep.subr.bf16.mxu0 0
    %1869 = vmatpush1.bf16.msra.mxu0 %v1866
    %1870 = vmatprep.subr.bf16.mxu0 0
    %1871 = vmatpush1.bf16.msra.mxu0 0
    %1872 = vmatprep.subr.bf16.mxu0 0
    %1873 = vmatpush1.bf16.msra.mxu0 0
    %1874 = vmatprep.subr.bf16.mxu0 0
    %1875 = vmatpush1.bf16.msra.mxu0 0
    %1876 = vmatprep.subr.bf16.mxu0 0
    %1877 = vmatpush1.bf16.msra.mxu0 0
    %1878 = vmatprep.subr.bf16.mxu0 0
    %1879 = vmatpush1.bf16.msra.mxu0 0
    %1880 = vmatprep.subr.bf16.mxu0 0
    %1881 = vmatpush1.bf16.msra.mxu0 0
    %1882 = vmatprep.subr.bf16.mxu0 0
    %1883 = vmatpush1.bf16.msra.mxu0 0
    %1884 = vmatprep.subr.bf16.mxu0 0
    %1885 = vmatpush1.bf16.msra.mxu0 0
    %1886 = vmatprep.subr.bf16.mxu0 0
    %1887 = vmatpush1.bf16.msra.mxu0 0
    %1888 = vmatprep.subr.bf16.mxu0 0
    %1889 = vmatpush1.bf16.msra.mxu0 0
    %1890 = vmatprep.subr.bf16.mxu0 0
    %1891 = vmatpush1.bf16.msra.mxu0 0
    %1892 = vmatprep.subr.bf16.mxu0 0
    %1893 = vmatpush1.bf16.msra.mxu0 0
    %1894 = vmatprep.subr.bf16.mxu0 0
    %1895 = vmatpush1.bf16.msra.mxu0 0
    %1896 = vmatprep.subr.bf16.mxu0 0
    %1897 = vmatpush1.bf16.msra.mxu0 0
    %1898 = vmatprep.subr.bf16.mxu0 0
    %1899 = vmatpush1.bf16.msra.mxu0 0
    %1900 = vmatprep.mubr.bf16.mxu0 0
    %1901 = vmatmul.mubr.bf16.gmra.mrb[0].mxu0 %v1863
    %v1902 = vpop.f32.mrb[0].mxu0
    %v1903 = vadd.f32 0.0, %v1902
    %v1904 = vpop.f32.mrb[0].mxu0
    %v1905 = vpop.f32.mrb[0].mxu0
    %v1906 = vadd.f32 0.0, %v1905
    %v1907 = vpop.f32.mrb[0].mxu0
    %1908 = vdwg.mxu0
    %v1909 = vadd.f32 %v1484, %v1903
    %v1910 = vadd.f32 %v1485, %v1906
    %v1911 = vadd.f32 %v58, %v1909
    %v1912 = vadd.f32 %v59, %v1910
    %v1913 = vld [vmem:[%s9] sm:$0x1]
    %v1914 = vld [vmem:[%s10] sm:$0x1]
    %v1915 = vsel %vm166, %v1911, 0.0
    %1916 = vadd.xlane.f32.xlu0 %v1915
    %v1917 = vpop.xlane.xlu0 %1916
    %v1918 = vsel %vm166, %v1912, 0.0
    %1919 = vadd.xlane.f32.xlu0 %v1918
    %v1920 = vpop.xlane.xlu0 %1919
    %v1921 = vmul.f32 %v1917, %v173
    %v1922 = vmul.f32 %v1920, %v173
    %v1923 = vsub.f32 %v1911, %v1921
    %v1924 = vsub.f32 %v1912, %v1922
    %v1925 = vmul.f32 %v1923, %v1923
    %v1926 = vmul.f32 %v1924, %v1924
    %v1927 = vsel %vm166, %v1925, 0.0
    %1928 = vadd.xlane.f32.xlu0 %v1927
    %v1929 = vpop.xlane.xlu0 %1928
    %v1930 = vsel %vm166, %v1926, 0.0
    %1931 = vadd.xlane.f32.xlu0 %v1930
    %v1932 = vpop.xlane.xlu0 %1931
    %v1933 = vmul.f32 %v1929, %v173
    %v1934 = vmul.f32 %v1932, %v173
    %v1935 = vadd.f32 %v1933, 1e-05
    %v1936 = vadd.f32 %v1934, 1e-05
    %v1937 = vrsqrt.pop %v1935
    %v1938 = vrsqrt.pop %v1936
    %v1939 = vmul.f32 %v1923, %v1937
    %v1940 = vmul.f32 %v1924, %v1938
    %v1942 = vlaneseq
    %v1943 = vshrl.u32 %v1942, 7
    %v1944 = vsub.s32 0, %v1943
    %v1945 = vrot.slane %v1913, %v1944
    %v1947 = vmul.f32 %v1939, %v1945
    %v1948 = vmul.f32 %v1940, %v1945
    %v1950 = vlaneseq
    %v1951 = vshrl.u32 %v1950, 7
    %v1952 = vsub.s32 0, %v1951
    %v1953 = vrot.slane %v1914, %v1952
    %v1955 = vadd.f32 %v1947, %v1953
    %v1956 = vadd.f32 %v1948, %v1953
    %v1957 = vpack.c.bf16 %v1956, %v1955
    %v1958 = vld [vmem:[%s11] sm:$0xf]
    %v1959 = vld [vmem:[%s11 + $0x4] sm:$0xf]
    %v1960 = vld [vmem:[%s11 + $0x8] sm:$0xf]
    %v1961 = vld [vmem:[%s11 + $0xc] sm:$0xf]
    %v1962 = vld [vmem:[%s12] sm:$0x1]
    %v1964 = vlaneseq
    %v1965 = vshrl.u32 %v1964, 7
    %v1966 = vsub.s32 0, %v1965
    %v1967 = vrot.slane %v1962, %v1966
    %v1973 = vunpack.c.l.b16 %v1958
    %v1974 = vunpack.c.l.b16 %v1959
    %v1975 = vunpack.c.l.b16 %v1960
    %v1976 = vunpack.c.l.b16 %v1961
    %v1977 = vpack.c.b16 %v1974, %v1973
    %v1978 = vpack.c.b16 %v1976, %v1975
    %v1982 = vsel %vm166, %v1957, 0
    %1984 = vmatprep.subr.bf16.mxu0 0
    %1985 = vmatpush1.bf16.msra.mxu0 %v1977
    %1986 = vmatprep.subr.bf16.mxu0 0
    %1987 = vmatpush1.bf16.msra.mxu0 %v1978
    %1988 = vmatprep.subr.bf16.mxu0 0
    %1989 = vmatpush1.bf16.msra.mxu0 0
    %1990 = vmatprep.subr.bf16.mxu0 0
    %1991 = vmatpush1.bf16.msra.mxu0 0
    %1992 = vmatprep.subr.bf16.mxu0 0
    %1993 = vmatpush1.bf16.msra.mxu0 0
    %1994 = vmatprep.subr.bf16.mxu0 0
    %1995 = vmatpush1.bf16.msra.mxu0 0
    %1996 = vmatprep.subr.bf16.mxu0 0
    %1997 = vmatpush1.bf16.msra.mxu0 0
    %1998 = vmatprep.subr.bf16.mxu0 0
    %1999 = vmatpush1.bf16.msra.mxu0 0
    %2000 = vmatprep.subr.bf16.mxu0 0
    %2001 = vmatpush1.bf16.msra.mxu0 0
    %2002 = vmatprep.subr.bf16.mxu0 0
    %2003 = vmatpush1.bf16.msra.mxu0 0
    %2004 = vmatprep.subr.bf16.mxu0 0
    %2005 = vmatpush1.bf16.msra.mxu0 0
    %2006 = vmatprep.subr.bf16.mxu0 0
    %2007 = vmatpush1.bf16.msra.mxu0 0
    %2008 = vmatprep.subr.bf16.mxu0 0
    %2009 = vmatpush1.bf16.msra.mxu0 0
    %2010 = vmatprep.subr.bf16.mxu0 0
    %2011 = vmatpush1.bf16.msra.mxu0 0
    %2012 = vmatprep.subr.bf16.mxu0 0
    %2013 = vmatpush1.bf16.msra.mxu0 0
    %2014 = vmatprep.subr.bf16.mxu0 0
    %2015 = vmatpush1.bf16.msra.mxu0 0
    %2016 = vmatprep.mubr.bf16.mxu0 0
    %2017 = vmatmul.mubr.bf16.gmra.mrb[0].mxu0 %v1982
    %v2018 = vpop.f32.mrb[0].mxu0
    %v2019 = vadd.f32 %v1967, %v2018
    %v2020 = vpop.f32.mrb[0].mxu0
    %v2021 = vpop.f32.mrb[0].mxu0
    %v2022 = vadd.f32 %v1967, %v2021
    %v2023 = vpop.f32.mrb[0].mxu0
    %2024 = vdwg.mxu0
    %v2025 = vmax.f32 %v2019, 0.0
    %v2026 = vmax.f32 %v2022, 0.0
    %v2027 = vpack.c.bf16 %v2026, %v2025
    %v2028 = vld [vmem:[%s13] sm:$0xf]
    %v2029 = vld [vmem:[%s13 + $0x4] sm:$0xf]
    %v2030 = vld [vmem:[%s13 + $0x8] sm:$0xf]
    %v2031 = vld [vmem:[%s13 + $0xc] sm:$0xf]
    %v2032 = vld [vmem:[%s13 + $0x10] sm:$0xf]
    %v2033 = vld [vmem:[%s13 + $0x14] sm:$0xf]
    %v2034 = vld [vmem:[%s13 + $0x18] sm:$0xf]
    %v2035 = vld [vmem:[%s13 + $0x1c] sm:$0xf]
    %v2036 = vld [vmem:[%s14] sm:$0x1]
    %v2038 = vlaneseq
    %v2039 = vshrl.u32 %v2038, 7
    %v2040 = vsub.s32 0, %v2039
    %v2041 = vrot.slane %v2036, %v2040
    %v2051 = vunpack.c.l.b16 %v2028
    %v2052 = vunpack.c.l.b16 %v2029
    %v2053 = vunpack.c.l.b16 %v2030
    %v2054 = vunpack.c.l.b16 %v2031
    %v2055 = vunpack.c.l.b16 %v2032
    %v2056 = vunpack.c.l.b16 %v2033
    %v2057 = vunpack.c.l.b16 %v2034
    %v2058 = vunpack.c.l.b16 %v2035
    %v2059 = vpack.c.b16 %v2052, %v2051
    %v2060 = vpack.c.b16 %v2054, %v2053
    %v2061 = vpack.c.b16 %v2056, %v2055
    %v2062 = vpack.c.b16 %v2058, %v2057
    %vm2067 = vcmask 523264
    %v2069 = vsel %vm2067, %v2027, 0
    %2071 = vmatprep.subr.bf16.mxu0 0
    %2072 = vmatpush1.bf16.msra.mxu0 %v2059
    %2073 = vmatprep.subr.bf16.mxu0 0
    %2074 = vmatpush1.bf16.msra.mxu0 %v2060
    %2075 = vmatprep.subr.bf16.mxu0 0
    %2076 = vmatpush1.bf16.msra.mxu0 %v2061
    %2077 = vmatprep.subr.bf16.mxu0 0
    %2078 = vmatpush1.bf16.msra.mxu0 %v2062
    %2079 = vmatprep.subr.bf16.mxu0 0
    %2080 = vmatpush1.bf16.msra.mxu0 0
    %2081 = vmatprep.subr.bf16.mxu0 0
    %2082 = vmatpush1.bf16.msra.mxu0 0
    %2083 = vmatprep.subr.bf16.mxu0 0
    %2084 = vmatpush1.bf16.msra.mxu0 0
    %2085 = vmatprep.subr.bf16.mxu0 0
    %2086 = vmatpush1.bf16.msra.mxu0 0
    %2087 = vmatprep.subr.bf16.mxu0 0
    %2088 = vmatpush1.bf16.msra.mxu0 0
    %2089 = vmatprep.subr.bf16.mxu0 0
    %2090 = vmatpush1.bf16.msra.mxu0 0
    %2091 = vmatprep.subr.bf16.mxu0 0
    %2092 = vmatpush1.bf16.msra.mxu0 0
    %2093 = vmatprep.subr.bf16.mxu0 0
    %2094 = vmatpush1.bf16.msra.mxu0 0
    %2095 = vmatprep.subr.bf16.mxu0 0
    %2096 = vmatpush1.bf16.msra.mxu0 0
    %2097 = vmatprep.subr.bf16.mxu0 0
    %2098 = vmatpush1.bf16.msra.mxu0 0
    %2099 = vmatprep.subr.bf16.mxu0 0
    %2100 = vmatpush1.bf16.msra.mxu0 0
    %2101 = vmatprep.subr.bf16.mxu0 0
    %2102 = vmatpush1.bf16.msra.mxu0 0
    %2103 = vmatprep.mubr.bf16.mxu0 0
    %2104 = vmatmul.mubr.bf16.gmra.mrb[0].mxu0 %v2069
    %v2105 = vpop.f32.mrb[0].mxu0
    %v2106 = vadd.f32 %v2041, %v2105
    %v2107 = vpop.f32.mrb[0].mxu0
    %v2108 = vpop.f32.mrb[0].mxu0
    %v2109 = vadd.f32 %v2041, %v2108
    %v2110 = vpop.f32.mrb[0].mxu0
    %2111 = vdwg.mxu0
    %v2112 = vadd.f32 %v1911, %v2106
    %v2113 = vadd.f32 %v1912, %v2109
    %s2114 = scalar_lea.vmem %s3, 64
    %v2115 = vld [vmem:[%s2114] sm:$0xf]
    %v2116 = vld [vmem:[%s2114 + $0x4] sm:$0xf]
    %v2117 = vld [vmem:[%s2114 + $0x8] sm:$0xf]
    %v2118 = vld [vmem:[%s2114 + $0xc] sm:$0xf]
    %v2119 = vld [vmem:[%s2114 + $0x10] sm:$0xf]
    %v2120 = vld [vmem:[%s2114 + $0x14] sm:$0xf]
    %v2121 = vld [vmem:[%s2114 + $0x18] sm:$0xf]
    %v2122 = vld [vmem:[%s2114 + $0x1c] sm:$0xf]
    %v2123 = vld [vmem:[%s2114 + $0x20] sm:$0xf]
    %v2124 = vld [vmem:[%s2114 + $0x24] sm:$0xf]
    %v2125 = vld [vmem:[%s2114 + $0x28] sm:$0xf]
    %v2126 = vld [vmem:[%s2114 + $0x2c] sm:$0xf]
    %v2127 = vld [vmem:[%s2114 + $0x30] sm:$0xf]
    %v2128 = vld [vmem:[%s2114 + $0x34] sm:$0xf]
    %v2129 = vld [vmem:[%s2114 + $0x38] sm:$0xf]
    %v2130 = vld [vmem:[%s2114 + $0x3c] sm:$0xf]
    %s2131 = scalar_lea.vmem %s4, 64
    %v2132 = vld [vmem:[%s2131] sm:$0xf]
    %v2133 = vld [vmem:[%s2131 + $0x4] sm:$0xf]
    %v2134 = vld [vmem:[%s2131 + $0x8] sm:$0xf]
    %v2135 = vld [vmem:[%s2131 + $0xc] sm:$0xf]
    %v2136 = vld [vmem:[%s2131 + $0x10] sm:$0xf]
    %v2137 = vld [vmem:[%s2131 + $0x14] sm:$0xf]
    %v2138 = vld [vmem:[%s2131 + $0x18] sm:$0xf]
    %v2139 = vld [vmem:[%s2131 + $0x1c] sm:$0xf]
    %v2140 = vld [vmem:[%s2131 + $0x20] sm:$0xf]
    %v2141 = vld [vmem:[%s2131 + $0x24] sm:$0xf]
    %v2142 = vld [vmem:[%s2131 + $0x28] sm:$0xf]
    %v2143 = vld [vmem:[%s2131 + $0x2c] sm:$0xf]
    %v2144 = vld [vmem:[%s2131 + $0x30] sm:$0xf]
    %v2145 = vld [vmem:[%s2131 + $0x34] sm:$0xf]
    %v2146 = vld [vmem:[%s2131 + $0x38] sm:$0xf]
    %v2147 = vld [vmem:[%s2131 + $0x3c] sm:$0xf]
    %s2148 = scalar_lea.vmem %s5, 64
    %v2149 = vld [vmem:[%s2148] sm:$0xf]
    %v2150 = vld [vmem:[%s2148 + $0x4] sm:$0xf]
    %v2151 = vld [vmem:[%s2148 + $0x8] sm:$0xf]
    %v2152 = vld [vmem:[%s2148 + $0xc] sm:$0xf]
    %v2153 = vld [vmem:[%s2148 + $0x10] sm:$0xf]
    %v2154 = vld [vmem:[%s2148 + $0x14] sm:$0xf]
    %v2155 = vld [vmem:[%s2148 + $0x18] sm:$0xf]
    %v2156 = vld [vmem:[%s2148 + $0x1c] sm:$0xf]
    %v2157 = vld [vmem:[%s2148 + $0x20] sm:$0xf]
    %v2158 = vld [vmem:[%s2148 + $0x24] sm:$0xf]
    %v2159 = vld [vmem:[%s2148 + $0x28] sm:$0xf]
    %v2160 = vld [vmem:[%s2148 + $0x2c] sm:$0xf]
    %v2161 = vld [vmem:[%s2148 + $0x30] sm:$0xf]
    %v2162 = vld [vmem:[%s2148 + $0x34] sm:$0xf]
    %v2163 = vld [vmem:[%s2148 + $0x38] sm:$0xf]
    %v2164 = vld [vmem:[%s2148 + $0x3c] sm:$0xf]
    %s2165 = scalar_lea.vmem %s6, 16
    %v2166 = vld [vmem:[%s2165] sm:$0xf]
    %v2167 = vld [vmem:[%s2165 + $0x4] sm:$0xf]
    %v2168 = vld [vmem:[%s2165 + $0x8] sm:$0xf]
    %v2169 = vld [vmem:[%s2165 + $0xc] sm:$0xf]
    %s2170 = scalar_lea.vmem %s7, 1
    %v2171 = vld [vmem:[%s2170] sm:$0x1]
    %s2172 = scalar_lea.vmem %s8, 1
    %v2173 = vld [vmem:[%s2172] sm:$0x1]
    %v2174 = vsel %vm166, %v2112, 0.0
    %2175 = vadd.xlane.f32.xlu0 %v2174
    %v2176 = vpop.xlane.xlu0 %2175
    %v2177 = vsel %vm166, %v2113, 0.0
    %2178 = vadd.xlane.f32.xlu0 %v2177
    %v2179 = vpop.xlane.xlu0 %2178
    %v2180 = vmul.f32 %v2176, %v173
    %v2181 = vmul.f32 %v2179, %v173
    %v2182 = vsub.f32 %v2112, %v2180
    %v2183 = vsub.f32 %v2113, %v2181
    %v2184 = vmul.f32 %v2182, %v2182
    %v2185 = vmul.f32 %v2183, %v2183
    %v2186 = vsel %vm166, %v2184, 0.0
    %2187 = vadd.xlane.f32.xlu0 %v2186
    %v2188 = vpop.xlane.xlu0 %2187
    %v2189 = vsel %vm166, %v2185, 0.0
    %2190 = vadd.xlane.f32.xlu0 %v2189
    %v2191 = vpop.xlane.xlu0 %2190
    %v2192 = vmul.f32 %v2188, %v173
    %v2193 = vmul.f32 %v2191, %v173
    %v2194 = vadd.f32 %v2192, 1e-05
    %v2195 = vadd.f32 %v2193, 1e-05
    %v2196 = vrsqrt.pop %v2194
    %v2197 = vrsqrt.pop %v2195
    %v2198 = vmul.f32 %v2182, %v2196
    %v2199 = vmul.f32 %v2183, %v2197
    %v2201 = vlaneseq
    %v2202 = vshrl.u32 %v2201, 7
    %v2203 = vsub.s32 0, %v2202
    %v2204 = vrot.slane %v2171, %v2203
    %v2206 = vmul.f32 %v2198, %v2204
    %v2207 = vmul.f32 %v2199, %v2204
    %v2209 = vlaneseq
    %v2210 = vshrl.u32 %v2209, 7
    %v2211 = vsub.s32 0, %v2210
    %v2212 = vrot.slane %v2173, %v2211
    %v2214 = vadd.f32 %v2206, %v2212
    %v2215 = vadd.f32 %v2207, %v2212
    %v2216 = vpack.c.bf16 %v2215, %v2214
    %v2221 = vunpack.c.l.b16 %v2115
    %v2222 = vunpack.c.l.b16 %v2116
    %v2223 = vunpack.c.l.b16 %v2117
    %v2224 = vunpack.c.l.b16 %v2118
    %v2225 = vpack.c.b16 %v2222, %v2221
    %v2226 = vpack.c.b16 %v2224, %v2223
    %v2230 = vsel %vm166, %v2216, 0
    %2232 = vmatprep.subr.bf16.mxu0 0
    %2233 = vmatpush1.bf16.msra.mxu0 %v2225
    %2234 = vmatprep.subr.bf16.mxu0 0
    %2235 = vmatpush1.bf16.msra.mxu0 %v2226
    %2236 = vmatprep.subr.bf16.mxu0 0
    %2237 = vmatpush1.bf16.msra.mxu0 0
    %2238 = vmatprep.subr.bf16.mxu0 0
    %2239 = vmatpush1.bf16.msra.mxu0 0
    %2240 = vmatprep.subr.bf16.mxu0 0
    %2241 = vmatpush1.bf16.msra.mxu0 0
    %2242 = vmatprep.subr.bf16.mxu0 0
    %2243 = vmatpush1.bf16.msra.mxu0 0
    %2244 = vmatprep.subr.bf16.mxu0 0
    %2245 = vmatpush1.bf16.msra.mxu0 0
    %2246 = vmatprep.subr.bf16.mxu0 0
    %2247 = vmatpush1.bf16.msra.mxu0 0
    %2248 = vmatprep.subr.bf16.mxu0 0
    %2249 = vmatpush1.bf16.msra.mxu0 0
    %2250 = vmatprep.subr.bf16.mxu0 0
    %2251 = vmatpush1.bf16.msra.mxu0 0
    %2252 = vmatprep.subr.bf16.mxu0 0
    %2253 = vmatpush1.bf16.msra.mxu0 0
    %2254 = vmatprep.subr.bf16.mxu0 0
    %2255 = vmatpush1.bf16.msra.mxu0 0
    %2256 = vmatprep.subr.bf16.mxu0 0
    %2257 = vmatpush1.bf16.msra.mxu0 0
    %2258 = vmatprep.subr.bf16.mxu0 0
    %2259 = vmatpush1.bf16.msra.mxu0 0
    %2260 = vmatprep.subr.bf16.mxu0 0
    %2261 = vmatpush1.bf16.msra.mxu0 0
    %2262 = vmatprep.subr.bf16.mxu0 0
    %2263 = vmatpush1.bf16.msra.mxu0 0
    %2264 = vmatprep.mubr.bf16.mxu0 0
    %2265 = vmatmul.mubr.bf16.gmra.mrb[0].mxu0 %v2230
    %v2266 = vpop.f32.mrb[0].mxu0
    %v2267 = vadd.f32 0.0, %v2266
    %v2268 = vpop.f32.mrb[0].mxu0
    %v2269 = vpop.f32.mrb[0].mxu0
    %v2270 = vadd.f32 0.0, %v2269
    %v2271 = vpop.f32.mrb[0].mxu0
    %2272 = vdwg.mxu0
    %v2277 = vunpack.c.l.b16 %v2132
    %v2278 = vunpack.c.l.b16 %v2133
    %v2279 = vunpack.c.l.b16 %v2134
    %v2280 = vunpack.c.l.b16 %v2135
    %v2281 = vpack.c.b16 %v2278, %v2277
    %v2282 = vpack.c.b16 %v2280, %v2279
    %2285 = vmatprep.subr.bf16.mxu0 0
    %2286 = vmatpush1.bf16.msra.mxu0 %v2281
    %2287 = vmatprep.subr.bf16.mxu0 0
    %2288 = vmatpush1.bf16.msra.mxu0 %v2282
    %2289 = vmatprep.subr.bf16.mxu0 0
    %2290 = vmatpush1.bf16.msra.mxu0 0
    %2291 = vmatprep.subr.bf16.mxu0 0
    %2292 = vmatpush1.bf16.msra.mxu0 0
    %2293 = vmatprep.subr.bf16.mxu0 0
    %2294 = vmatpush1.bf16.msra.mxu0 0
    %2295 = vmatprep.subr.bf16.mxu0 0
    %2296 = vmatpush1.bf16.msra.mxu0 0
    %2297 = vmatprep.subr.bf16.mxu0 0
    %2298 = vmatpush1.bf16.msra.mxu0 0
    %2299 = vmatprep.subr.bf16.mxu0 0
    %2300 = vmatpush1.bf16.msra.mxu0 0
    %2301 = vmatprep.subr.bf16.mxu0 0
    %2302 = vmatpush1.bf16.msra.mxu0 0
    %2303 = vmatprep.subr.bf16.mxu0 0
    %2304 = vmatpush1.bf16.msra.mxu0 0
    %2305 = vmatprep.subr.bf16.mxu0 0
    %2306 = vmatpush1.bf16.msra.mxu0 0
    %2307 = vmatprep.subr.bf16.mxu0 0
    %2308 = vmatpush1.bf16.msra.mxu0 0
    %2309 = vmatprep.subr.bf16.mxu0 0
    %2310 = vmatpush1.bf16.msra.mxu0 0
    %2311 = vmatprep.subr.bf16.mxu0 0
    %2312 = vmatpush1.bf16.msra.mxu0 0
    %2313 = vmatprep.subr.bf16.mxu0 0
    %2314 = vmatpush1.bf16.msra.mxu0 0
    %2315 = vmatprep.subr.bf16.mxu0 0
    %2316 = vmatpush1.bf16.msra.mxu0 0
    %2317 = vmatprep.mubr.bf16.mxu0 0
    %2318 = vmatmul.mubr.bf16.gmra.mrb[0].mxu0 %v2230
    %v2319 = vpop.f32.mrb[0].mxu0
    %v2320 = vadd.f32 0.0, %v2319
    %v2321 = vpop.f32.mrb[0].mxu0
    %v2322 = vpop.f32.mrb[0].mxu0
    %v2323 = vadd.f32 0.0, %v2322
    %v2324 = vpop.f32.mrb[0].mxu0
    %2325 = vdwg.mxu0
    %v2330 = vunpack.c.l.b16 %v2149
    %v2331 = vunpack.c.l.b16 %v2150
    %v2332 = vunpack.c.l.b16 %v2151
    %v2333 = vunpack.c.l.b16 %v2152
    %v2334 = vpack.c.b16 %v2331, %v2330
    %v2335 = vpack.c.b16 %v2333, %v2332
    %2338 = vmatprep.subr.bf16.mxu0 0
    %2339 = vmatpush1.bf16.msra.mxu0 %v2334
    %2340 = vmatprep.subr.bf16.mxu0 0
    %2341 = vmatpush1.bf16.msra.mxu0 %v2335
    %2342 = vmatprep.subr.bf16.mxu0 0
    %2343 = vmatpush1.bf16.msra.mxu0 0
    %2344 = vmatprep.subr.bf16.mxu0 0
    %2345 = vmatpush1.bf16.msra.mxu0 0
    %2346 = vmatprep.subr.bf16.mxu0 0
    %2347 = vmatpush1.bf16.msra.mxu0 0
    %2348 = vmatprep.subr.bf16.mxu0 0
    %2349 = vmatpush1.bf16.msra.mxu0 0
    %2350 = vmatprep.subr.bf16.mxu0 0
    %2351 = vmatpush1.bf16.msra.mxu0 0
    %2352 = vmatprep.subr.bf16.mxu0 0
    %2353 = vmatpush1.bf16.msra.mxu0 0
    %2354 = vmatprep.subr.bf16.mxu0 0
    %2355 = vmatpush1.bf16.msra.mxu0 0
    %2356 = vmatprep.subr.bf16.mxu0 0
    %2357 = vmatpush1.bf16.msra.mxu0 0
    %2358 = vmatprep.subr.bf16.mxu0 0
    %2359 = vmatpush1.bf16.msra.mxu0 0
    %2360 = vmatprep.subr.bf16.mxu0 0
    %2361 = vmatpush1.bf16.msra.mxu0 0
    %2362 = vmatprep.subr.bf16.mxu0 0
    %2363 = vmatpush1.bf16.msra.mxu0 0
    %2364 = vmatprep.subr.bf16.mxu0 0
    %2365 = vmatpush1.bf16.msra.mxu0 0
    %2366 = vmatprep.subr.bf16.mxu0 0
    %2367 = vmatpush1.bf16.msra.mxu0 0
    %2368 = vmatprep.subr.bf16.mxu0 0
    %2369 = vmatpush1.bf16.msra.mxu0 0
    %2370 = vmatprep.mubr.bf16.mxu0 0
    %2371 = vmatmul.mubr.bf16.gmra.mrb[0].mxu0 %v2230
    %v2372 = vpop.f32.mrb[0].mxu0
    %v2373 = vadd.f32 0.0, %v2372
    %v2374 = vpop.f32.mrb[0].mxu0
    %v2375 = vpop.f32.mrb[0].mxu0
    %v2376 = vadd.f32 0.0, %v2375
    %v2377 = vpop.f32.mrb[0].mxu0
    %2378 = vdwg.mxu0
    %v2379 = vpack.c.bf16 %v2267, %v2267
    %v2380 = vpack.c.bf16 %v2270, %v2270
    %v2381 = vpack.c.bf16 %v2320, %v2320
    %v2382 = vpack.c.bf16 %v2323, %v2323
    %v2383 = vpack.c.bf16 %v2373, %v2373
    %v2384 = vpack.c.bf16 %v2376, %v2376
    %v2386 = vsel %vm89, %v2379, 0
    %v2389 = vsel %vm89, %v2381, 0
    %2391 = vmatprep.subr.bf16.mxu0 0
    %2392 = vmatpush1.bf16.xpose.msra.mxu0 %v2389
    %2393 = vmatprep.subr.bf16.mxu0 0
    %2394 = vmatpush1.bf16.xpose.msra.mxu0 0
    %2395 = vmatprep.subr.bf16.mxu0 0
    %2396 = vmatpush1.bf16.xpose.msra.mxu0 0
    %2397 = vmatprep.subr.bf16.mxu0 0
    %2398 = vmatpush1.bf16.xpose.msra.mxu0 0
    %2399 = vmatprep.subr.bf16.mxu0 0
    %2400 = vmatpush1.bf16.xpose.msra.mxu0 0
    %2401 = vmatprep.subr.bf16.mxu0 0
    %2402 = vmatpush1.bf16.xpose.msra.mxu0 0
    %2403 = vmatprep.subr.bf16.mxu0 0
    %2404 = vmatpush1.bf16.xpose.msra.mxu0 0
    %2405 = vmatprep.subr.bf16.mxu0 0
    %2406 = vmatpush1.bf16.xpose.msra.mxu0 0
    %2407 = vmatprep.subr.bf16.mxu0 0
    %2408 = vmatpush1.bf16.xpose.msra.mxu0 0
    %2409 = vmatprep.subr.bf16.mxu0 0
    %2410 = vmatpush1.bf16.xpose.msra.mxu0 0
    %2411 = vmatprep.subr.bf16.mxu0 0
    %2412 = vmatpush1.bf16.xpose.msra.mxu0 0
    %2413 = vmatprep.subr.bf16.mxu0 0
    %2414 = vmatpush1.bf16.xpose.msra.mxu0 0
    %2415 = vmatprep.subr.bf16.mxu0 0
    %2416 = vmatpush1.bf16.xpose.msra.mxu0 0
    %2417 = vmatprep.subr.bf16.mxu0 0
    %2418 = vmatpush1.bf16.xpose.msra.mxu0 0
    %2419 = vmatprep.subr.bf16.mxu0 0
    %2420 = vmatpush1.bf16.xpose.msra.mxu0 0
    %2421 = vmatprep.subr.bf16.mxu0 0
    %2422 = vmatpush1.bf16.xpose.msra.mxu0 0
    %2423 = vmatprep.mubr.bf16.mxu0 0
    %2424 = vmatmul.mubr.bf16.gmra.mrb[0].mxu0 %v2386
    %v2425 = vpop.f32.mrb[0].mxu0
    %v2426 = vadd.f32 %v109, %v2425
    %v2427 = vpop.f32.mrb[0].mxu0
    %v2428 = vpop.f32.mrb[0].mxu0
    %v2429 = vpop.f32.mrb[0].mxu0
    %2430 = vdwg.mxu0
    %v2432 = vsel %vm89, %v2380, 0
    %v2435 = vsel %vm89, %v2382, 0
    %2437 = vmatprep.subr.bf16.mxu0 0
    %2438 = vmatpush1.bf16.xpose.msra.mxu0 %v2435
    %2439 = vmatprep.subr.bf16.mxu0 0
    %2440 = vmatpush1.bf16.xpose.msra.mxu0 0
    %2441 = vmatprep.subr.bf16.mxu0 0
    %2442 = vmatpush1.bf16.xpose.msra.mxu0 0
    %2443 = vmatprep.subr.bf16.mxu0 0
    %2444 = vmatpush1.bf16.xpose.msra.mxu0 0
    %2445 = vmatprep.subr.bf16.mxu0 0
    %2446 = vmatpush1.bf16.xpose.msra.mxu0 0
    %2447 = vmatprep.subr.bf16.mxu0 0
    %2448 = vmatpush1.bf16.xpose.msra.mxu0 0
    %2449 = vmatprep.subr.bf16.mxu0 0
    %2450 = vmatpush1.bf16.xpose.msra.mxu0 0
    %2451 = vmatprep.subr.bf16.mxu0 0
    %2452 = vmatpush1.bf16.xpose.msra.mxu0 0
    %2453 = vmatprep.subr.bf16.mxu0 0
    %2454 = vmatpush1.bf16.xpose.msra.mxu0 0
    %2455 = vmatprep.subr.bf16.mxu0 0
    %2456 = vmatpush1.bf16.xpose.msra.mxu0 0
    %2457 = vmatprep.subr.bf16.mxu0 0
    %2458 = vmatpush1.bf16.xpose.msra.mxu0 0
    %2459 = vmatprep.subr.bf16.mxu0 0
    %2460 = vmatpush1.bf16.xpose.msra.mxu0 0
    %2461 = vmatprep.subr.bf16.mxu0 0
    %2462 = vmatpush1.bf16.xpose.msra.mxu0 0
    %2463 = vmatprep.subr.bf16.mxu0 0
    %2464 = vmatpush1.bf16.xpose.msra.mxu0 0
    %2465 = vmatprep.subr.bf16.mxu0 0
    %2466 = vmatpush1.bf16.xpose.msra.mxu0 0
    %2467 = vmatprep.subr.bf16.mxu0 0
    %2468 = vmatpush1.bf16.xpose.msra.mxu0 0
    %2469 = vmatprep.mubr.bf16.mxu0 0
    %2470 = vmatmul.mubr.bf16.gmra.mrb[0].mxu0 %v2432
    %v2471 = vpop.f32.mrb[0].mxu0
    %v2472 = vadd.f32 %v111, %v2471
    %v2473 = vpop.f32.mrb[0].mxu0
    %v2474 = vpop.f32.mrb[0].mxu0
    %v2475 = vpop.f32.mrb[0].mxu0
    %2476 = vdwg.mxu0
    %v2477 = vsel %vm83, -1e+09, %v2426
    %v2478 = vsel %vm84, -1e+09, %v2472
    %v2479 = vsel %vm89, %v2477, -inf
    %2480 = vmax.xlane.f32.xlu0 %v2479
    %v2481 = vpop.xlane.xlu0 %2480
    %v2482 = vsel %vm89, %v2478, -inf
    %2483 = vmax.xlane.f32.xlu0 %v2482
    %v2484 = vpop.xlane.xlu0 %2483
    %v2485 = vsub.f32 %v2477, %v2481
    %v2486 = vsub.f32 %v2478, %v2484
    %v2487 = vmul.f32 %v2485, 1.442695
    %v2488 = vpow.pop %v2487
    %v2489 = vmul.f32 %v2486, 1.442695
    %v2490 = vpow.pop %v2489
    %v2491 = vsel %vm89, %v2488, 0.0
    %2492 = vadd.xlane.f32.xlu0 %v2491
    %v2493 = vpop.xlane.xlu0 %2492
    %v2494 = vsel %vm89, %v2490, 0.0
    %2495 = vadd.xlane.f32.xlu0 %v2494
    %v2496 = vpop.xlane.xlu0 %2495
    %v2497 = vrcp.pop %v2493
    %v2498 = vmul.f32 %v2488, %v2497
    %v2499 = vrcp.pop %v2496
    %v2500 = vmul.f32 %v2490, %v2499
    %v2501 = vpack.c.bf16 %v2498, %v2498
    %v2502 = vpack.c.bf16 %v2500, %v2500
    %v2504 = vsel %vm89, %v2501, 0
    %v2507 = vsel %vm500, %v2383, 0
    %2509 = vmatprep.subr.bf16.mxu0 0
    %2510 = vmatpush1.bf16.msra.mxu0 %v2507
    %2511 = vmatprep.subr.bf16.mxu0 0
    %2512 = vmatpush1.bf16.msra.mxu0 0
    %2513 = vmatprep.subr.bf16.mxu0 0
    %2514 = vmatpush1.bf16.msra.mxu0 0
    %2515 = vmatprep.subr.bf16.mxu0 0
    %2516 = vmatpush1.bf16.msra.mxu0 0
    %2517 = vmatprep.subr.bf16.mxu0 0
    %2518 = vmatpush1.bf16.msra.mxu0 0
    %2519 = vmatprep.subr.bf16.mxu0 0
    %2520 = vmatpush1.bf16.msra.mxu0 0
    %2521 = vmatprep.subr.bf16.mxu0 0
    %2522 = vmatpush1.bf16.msra.mxu0 0
    %2523 = vmatprep.subr.bf16.mxu0 0
    %2524 = vmatpush1.bf16.msra.mxu0 0
    %2525 = vmatprep.subr.bf16.mxu0 0
    %2526 = vmatpush1.bf16.msra.mxu0 0
    %2527 = vmatprep.subr.bf16.mxu0 0
    %2528 = vmatpush1.bf16.msra.mxu0 0
    %2529 = vmatprep.subr.bf16.mxu0 0
    %2530 = vmatpush1.bf16.msra.mxu0 0
    %2531 = vmatprep.subr.bf16.mxu0 0
    %2532 = vmatpush1.bf16.msra.mxu0 0
    %2533 = vmatprep.subr.bf16.mxu0 0
    %2534 = vmatpush1.bf16.msra.mxu0 0
    %2535 = vmatprep.subr.bf16.mxu0 0
    %2536 = vmatpush1.bf16.msra.mxu0 0
    %2537 = vmatprep.subr.bf16.mxu0 0
    %2538 = vmatpush1.bf16.msra.mxu0 0
    %2539 = vmatprep.subr.bf16.mxu0 0
    %2540 = vmatpush1.bf16.msra.mxu0 0
    %2541 = vmatprep.mubr.bf16.mxu0 0
    %2542 = vmatmul.mubr.bf16.gmra.mrb[0].mxu0 %v2504
    %v2543 = vpop.f32.mrb[0].mxu0
    %v2544 = vadd.f32 0.0, %v2543
    %v2545 = vpop.f32.mrb[0].mxu0
    %v2546 = vpop.f32.mrb[0].mxu0
    %v2547 = vpop.f32.mrb[0].mxu0
    %2548 = vdwg.mxu0
    %v2550 = vsel %vm89, %v2502, 0
    %v2553 = vsel %vm500, %v2384, 0
    %2555 = vmatprep.subr.bf16.mxu0 0
    %2556 = vmatpush1.bf16.msra.mxu0 %v2553
    %2557 = vmatprep.subr.bf16.mxu0 0
    %2558 = vmatpush1.bf16.msra.mxu0 0
    %2559 = vmatprep.subr.bf16.mxu0 0
    %2560 = vmatpush1.bf16.msra.mxu0 0
    %2561 = vmatprep.subr.bf16.mxu0 0
    %2562 = vmatpush1.bf16.msra.mxu0 0
    %2563 = vmatprep.subr.bf16.mxu0 0
    %2564 = vmatpush1.bf16.msra.mxu0 0
    %2565 = vmatprep.subr.bf16.mxu0 0
    %2566 = vmatpush1.bf16.msra.mxu0 0
    %2567 = vmatprep.subr.bf16.mxu0 0
    %2568 = vmatpush1.bf16.msra.mxu0 0
    %2569 = vmatprep.subr.bf16.mxu0 0
    %2570 = vmatpush1.bf16.msra.mxu0 0
    %2571 = vmatprep.subr.bf16.mxu0 0
    %2572 = vmatpush1.bf16.msra.mxu0 0
    %2573 = vmatprep.subr.bf16.mxu0 0
    %2574 = vmatpush1.bf16.msra.mxu0 0
    %2575 = vmatprep.subr.bf16.mxu0 0
    %2576 = vmatpush1.bf16.msra.mxu0 0
    %2577 = vmatprep.subr.bf16.mxu0 0
    %2578 = vmatpush1.bf16.msra.mxu0 0
    %2579 = vmatprep.subr.bf16.mxu0 0
    %2580 = vmatpush1.bf16.msra.mxu0 0
    %2581 = vmatprep.subr.bf16.mxu0 0
    %2582 = vmatpush1.bf16.msra.mxu0 0
    %2583 = vmatprep.subr.bf16.mxu0 0
    %2584 = vmatpush1.bf16.msra.mxu0 0
    %2585 = vmatprep.subr.bf16.mxu0 0
    %2586 = vmatpush1.bf16.msra.mxu0 0
    %2587 = vmatprep.mubr.bf16.mxu0 0
    %2588 = vmatmul.mubr.bf16.gmra.mrb[0].mxu0 %v2550
    %v2589 = vpop.f32.mrb[0].mxu0
    %v2590 = vadd.f32 0.0, %v2589
    %v2591 = vpop.f32.mrb[0].mxu0
    %v2592 = vpop.f32.mrb[0].mxu0
    %v2593 = vpop.f32.mrb[0].mxu0
    %2594 = vdwg.mxu0
    %v2595 = vpack.c.bf16 %v2590, %v2544
    %v2600 = vunpack.c.l.b16 %v2119
    %v2601 = vunpack.c.l.b16 %v2120
    %v2602 = vunpack.c.l.b16 %v2121
    %v2603 = vunpack.c.l.b16 %v2122
    %v2604 = vpack.c.b16 %v2601, %v2600
    %v2605 = vpack.c.b16 %v2603, %v2602
    %2608 = vmatprep.subr.bf16.mxu0 0
    %2609 = vmatpush1.bf16.msra.mxu0 %v2604
    %2610 = vmatprep.subr.bf16.mxu0 0
    %2611 = vmatpush1.bf16.msra.mxu0 %v2605
    %2612 = vmatprep.subr.bf16.mxu0 0
    %2613 = vmatpush1.bf16.msra.mxu0 0
    %2614 = vmatprep.subr.bf16.mxu0 0
    %2615 = vmatpush1.bf16.msra.mxu0 0
    %2616 = vmatprep.subr.bf16.mxu0 0
    %2617 = vmatpush1.bf16.msra.mxu0 0
    %2618 = vmatprep.subr.bf16.mxu0 0
    %2619 = vmatpush1.bf16.msra.mxu0 0
    %2620 = vmatprep.subr.bf16.mxu0 0
    %2621 = vmatpush1.bf16.msra.mxu0 0
    %2622 = vmatprep.subr.bf16.mxu0 0
    %2623 = vmatpush1.bf16.msra.mxu0 0
    %2624 = vmatprep.subr.bf16.mxu0 0
    %2625 = vmatpush1.bf16.msra.mxu0 0
    %2626 = vmatprep.subr.bf16.mxu0 0
    %2627 = vmatpush1.bf16.msra.mxu0 0
    %2628 = vmatprep.subr.bf16.mxu0 0
    %2629 = vmatpush1.bf16.msra.mxu0 0
    %2630 = vmatprep.subr.bf16.mxu0 0
    %2631 = vmatpush1.bf16.msra.mxu0 0
    %2632 = vmatprep.subr.bf16.mxu0 0
    %2633 = vmatpush1.bf16.msra.mxu0 0
    %2634 = vmatprep.subr.bf16.mxu0 0
    %2635 = vmatpush1.bf16.msra.mxu0 0
    %2636 = vmatprep.subr.bf16.mxu0 0
    %2637 = vmatpush1.bf16.msra.mxu0 0
    %2638 = vmatprep.subr.bf16.mxu0 0
    %2639 = vmatpush1.bf16.msra.mxu0 0
    %2640 = vmatprep.mubr.bf16.mxu0 0
    %2641 = vmatmul.mubr.bf16.gmra.mrb[0].mxu0 %v2230
    %v2642 = vpop.f32.mrb[0].mxu0
    %v2643 = vadd.f32 0.0, %v2642
    %v2644 = vpop.f32.mrb[0].mxu0
    %v2645 = vpop.f32.mrb[0].mxu0
    %v2646 = vadd.f32 0.0, %v2645
    %v2647 = vpop.f32.mrb[0].mxu0
    %2648 = vdwg.mxu0
    %v2653 = vunpack.c.l.b16 %v2136
    %v2654 = vunpack.c.l.b16 %v2137
    %v2655 = vunpack.c.l.b16 %v2138
    %v2656 = vunpack.c.l.b16 %v2139
    %v2657 = vpack.c.b16 %v2654, %v2653
    %v2658 = vpack.c.b16 %v2656, %v2655
    %2661 = vmatprep.subr.bf16.mxu0 0
    %2662 = vmatpush1.bf16.msra.mxu0 %v2657
    %2663 = vmatprep.subr.bf16.mxu0 0
    %2664 = vmatpush1.bf16.msra.mxu0 %v2658
    %2665 = vmatprep.subr.bf16.mxu0 0
    %2666 = vmatpush1.bf16.msra.mxu0 0
    %2667 = vmatprep.subr.bf16.mxu0 0
    %2668 = vmatpush1.bf16.msra.mxu0 0
    %2669 = vmatprep.subr.bf16.mxu0 0
    %2670 = vmatpush1.bf16.msra.mxu0 0
    %2671 = vmatprep.subr.bf16.mxu0 0
    %2672 = vmatpush1.bf16.msra.mxu0 0
    %2673 = vmatprep.subr.bf16.mxu0 0
    %2674 = vmatpush1.bf16.msra.mxu0 0
    %2675 = vmatprep.subr.bf16.mxu0 0
    %2676 = vmatpush1.bf16.msra.mxu0 0
    %2677 = vmatprep.subr.bf16.mxu0 0
    %2678 = vmatpush1.bf16.msra.mxu0 0
    %2679 = vmatprep.subr.bf16.mxu0 0
    %2680 = vmatpush1.bf16.msra.mxu0 0
    %2681 = vmatprep.subr.bf16.mxu0 0
    %2682 = vmatpush1.bf16.msra.mxu0 0
    %2683 = vmatprep.subr.bf16.mxu0 0
    %2684 = vmatpush1.bf16.msra.mxu0 0
    %2685 = vmatprep.subr.bf16.mxu0 0
    %2686 = vmatpush1.bf16.msra.mxu0 0
    %2687 = vmatprep.subr.bf16.mxu0 0
    %2688 = vmatpush1.bf16.msra.mxu0 0
    %2689 = vmatprep.subr.bf16.mxu0 0
    %2690 = vmatpush1.bf16.msra.mxu0 0
    %2691 = vmatprep.subr.bf16.mxu0 0
    %2692 = vmatpush1.bf16.msra.mxu0 0
    %2693 = vmatprep.mubr.bf16.mxu0 0
    %2694 = vmatmul.mubr.bf16.gmra.mrb[0].mxu0 %v2230
    %v2695 = vpop.f32.mrb[0].mxu0
    %v2696 = vadd.f32 0.0, %v2695
    %v2697 = vpop.f32.mrb[0].mxu0
    %v2698 = vpop.f32.mrb[0].mxu0
    %v2699 = vadd.f32 0.0, %v2698
    %v2700 = vpop.f32.mrb[0].mxu0
    %2701 = vdwg.mxu0
    %v2706 = vunpack.c.l.b16 %v2153
    %v2707 = vunpack.c.l.b16 %v2154
    %v2708 = vunpack.c.l.b16 %v2155
    %v2709 = vunpack.c.l.b16 %v2156
    %v2710 = vpack.c.b16 %v2707, %v2706
    %v2711 = vpack.c.b16 %v2709, %v2708
    %2714 = vmatprep.subr.bf16.mxu0 0
    %2715 = vmatpush1.bf16.msra.mxu0 %v2710
    %2716 = vmatprep.subr.bf16.mxu0 0
    %2717 = vmatpush1.bf16.msra.mxu0 %v2711
    %2718 = vmatprep.subr.bf16.mxu0 0
    %2719 = vmatpush1.bf16.msra.mxu0 0
    %2720 = vmatprep.subr.bf16.mxu0 0
    %2721 = vmatpush1.bf16.msra.mxu0 0
    %2722 = vmatprep.subr.bf16.mxu0 0
    %2723 = vmatpush1.bf16.msra.mxu0 0
    %2724 = vmatprep.subr.bf16.mxu0 0
    %2725 = vmatpush1.bf16.msra.mxu0 0
    %2726 = vmatprep.subr.bf16.mxu0 0
    %2727 = vmatpush1.bf16.msra.mxu0 0
    %2728 = vmatprep.subr.bf16.mxu0 0
    %2729 = vmatpush1.bf16.msra.mxu0 0
    %2730 = vmatprep.subr.bf16.mxu0 0
    %2731 = vmatpush1.bf16.msra.mxu0 0
    %2732 = vmatprep.subr.bf16.mxu0 0
    %2733 = vmatpush1.bf16.msra.mxu0 0
    %2734 = vmatprep.subr.bf16.mxu0 0
    %2735 = vmatpush1.bf16.msra.mxu0 0
    %2736 = vmatprep.subr.bf16.mxu0 0
    %2737 = vmatpush1.bf16.msra.mxu0 0
    %2738 = vmatprep.subr.bf16.mxu0 0
    %2739 = vmatpush1.bf16.msra.mxu0 0
    %2740 = vmatprep.subr.bf16.mxu0 0
    %2741 = vmatpush1.bf16.msra.mxu0 0
    %2742 = vmatprep.subr.bf16.mxu0 0
    %2743 = vmatpush1.bf16.msra.mxu0 0
    %2744 = vmatprep.subr.bf16.mxu0 0
    %2745 = vmatpush1.bf16.msra.mxu0 0
    %2746 = vmatprep.mubr.bf16.mxu0 0
    %2747 = vmatmul.mubr.bf16.gmra.mrb[0].mxu0 %v2230
    %v2748 = vpop.f32.mrb[0].mxu0
    %v2749 = vadd.f32 0.0, %v2748
    %v2750 = vpop.f32.mrb[0].mxu0
    %v2751 = vpop.f32.mrb[0].mxu0
    %v2752 = vadd.f32 0.0, %v2751
    %v2753 = vpop.f32.mrb[0].mxu0
    %2754 = vdwg.mxu0
    %v2755 = vpack.c.bf16 %v2643, %v2643
    %v2756 = vpack.c.bf16 %v2646, %v2646
    %v2757 = vpack.c.bf16 %v2696, %v2696
    %v2758 = vpack.c.bf16 %v2699, %v2699
    %v2759 = vpack.c.bf16 %v2749, %v2749
    %v2760 = vpack.c.bf16 %v2752, %v2752
    %v2762 = vsel %vm89, %v2755, 0
    %v2765 = vsel %vm89, %v2757, 0
    %2767 = vmatprep.subr.bf16.mxu0 0
    %2768 = vmatpush1.bf16.xpose.msra.mxu0 %v2765
    %2769 = vmatprep.subr.bf16.mxu0 0
    %2770 = vmatpush1.bf16.xpose.msra.mxu0 0
    %2771 = vmatprep.subr.bf16.mxu0 0
    %2772 = vmatpush1.bf16.xpose.msra.mxu0 0
    %2773 = vmatprep.subr.bf16.mxu0 0
    %2774 = vmatpush1.bf16.xpose.msra.mxu0 0
    %2775 = vmatprep.subr.bf16.mxu0 0
    %2776 = vmatpush1.bf16.xpose.msra.mxu0 0
    %2777 = vmatprep.subr.bf16.mxu0 0
    %2778 = vmatpush1.bf16.xpose.msra.mxu0 0
    %2779 = vmatprep.subr.bf16.mxu0 0
    %2780 = vmatpush1.bf16.xpose.msra.mxu0 0
    %2781 = vmatprep.subr.bf16.mxu0 0
    %2782 = vmatpush1.bf16.xpose.msra.mxu0 0
    %2783 = vmatprep.subr.bf16.mxu0 0
    %2784 = vmatpush1.bf16.xpose.msra.mxu0 0
    %2785 = vmatprep.subr.bf16.mxu0 0
    %2786 = vmatpush1.bf16.xpose.msra.mxu0 0
    %2787 = vmatprep.subr.bf16.mxu0 0
    %2788 = vmatpush1.bf16.xpose.msra.mxu0 0
    %2789 = vmatprep.subr.bf16.mxu0 0
    %2790 = vmatpush1.bf16.xpose.msra.mxu0 0
    %2791 = vmatprep.subr.bf16.mxu0 0
    %2792 = vmatpush1.bf16.xpose.msra.mxu0 0
    %2793 = vmatprep.subr.bf16.mxu0 0
    %2794 = vmatpush1.bf16.xpose.msra.mxu0 0
    %2795 = vmatprep.subr.bf16.mxu0 0
    %2796 = vmatpush1.bf16.xpose.msra.mxu0 0
    %2797 = vmatprep.subr.bf16.mxu0 0
    %2798 = vmatpush1.bf16.xpose.msra.mxu0 0
    %2799 = vmatprep.mubr.bf16.mxu0 0
    %2800 = vmatmul.mubr.bf16.gmra.mrb[0].mxu0 %v2762
    %v2801 = vpop.f32.mrb[0].mxu0
    %v2802 = vadd.f32 %v109, %v2801
    %v2803 = vpop.f32.mrb[0].mxu0
    %v2804 = vpop.f32.mrb[0].mxu0
    %v2805 = vpop.f32.mrb[0].mxu0
    %2806 = vdwg.mxu0
    %v2808 = vsel %vm89, %v2756, 0
    %v2811 = vsel %vm89, %v2758, 0
    %2813 = vmatprep.subr.bf16.mxu0 0
    %2814 = vmatpush1.bf16.xpose.msra.mxu0 %v2811
    %2815 = vmatprep.subr.bf16.mxu0 0
    %2816 = vmatpush1.bf16.xpose.msra.mxu0 0
    %2817 = vmatprep.subr.bf16.mxu0 0
    %2818 = vmatpush1.bf16.xpose.msra.mxu0 0
    %2819 = vmatprep.subr.bf16.mxu0 0
    %2820 = vmatpush1.bf16.xpose.msra.mxu0 0
    %2821 = vmatprep.subr.bf16.mxu0 0
    %2822 = vmatpush1.bf16.xpose.msra.mxu0 0
    %2823 = vmatprep.subr.bf16.mxu0 0
    %2824 = vmatpush1.bf16.xpose.msra.mxu0 0
    %2825 = vmatprep.subr.bf16.mxu0 0
    %2826 = vmatpush1.bf16.xpose.msra.mxu0 0
    %2827 = vmatprep.subr.bf16.mxu0 0
    %2828 = vmatpush1.bf16.xpose.msra.mxu0 0
    %2829 = vmatprep.subr.bf16.mxu0 0
    %2830 = vmatpush1.bf16.xpose.msra.mxu0 0
    %2831 = vmatprep.subr.bf16.mxu0 0
    %2832 = vmatpush1.bf16.xpose.msra.mxu0 0
    %2833 = vmatprep.subr.bf16.mxu0 0
    %2834 = vmatpush1.bf16.xpose.msra.mxu0 0
    %2835 = vmatprep.subr.bf16.mxu0 0
    %2836 = vmatpush1.bf16.xpose.msra.mxu0 0
    %2837 = vmatprep.subr.bf16.mxu0 0
    %2838 = vmatpush1.bf16.xpose.msra.mxu0 0
    %2839 = vmatprep.subr.bf16.mxu0 0
    %2840 = vmatpush1.bf16.xpose.msra.mxu0 0
    %2841 = vmatprep.subr.bf16.mxu0 0
    %2842 = vmatpush1.bf16.xpose.msra.mxu0 0
    %2843 = vmatprep.subr.bf16.mxu0 0
    %2844 = vmatpush1.bf16.xpose.msra.mxu0 0
    %2845 = vmatprep.mubr.bf16.mxu0 0
    %2846 = vmatmul.mubr.bf16.gmra.mrb[0].mxu0 %v2808
    %v2847 = vpop.f32.mrb[0].mxu0
    %v2848 = vadd.f32 %v111, %v2847
    %v2849 = vpop.f32.mrb[0].mxu0
    %v2850 = vpop.f32.mrb[0].mxu0
    %v2851 = vpop.f32.mrb[0].mxu0
    %2852 = vdwg.mxu0
    %v2853 = vsel %vm83, -1e+09, %v2802
    %v2854 = vsel %vm84, -1e+09, %v2848
    %v2855 = vsel %vm89, %v2853, -inf
    %2856 = vmax.xlane.f32.xlu0 %v2855
    %v2857 = vpop.xlane.xlu0 %2856
    %v2858 = vsel %vm89, %v2854, -inf
    %2859 = vmax.xlane.f32.xlu0 %v2858
    %v2860 = vpop.xlane.xlu0 %2859
    %v2861 = vsub.f32 %v2853, %v2857
    %v2862 = vsub.f32 %v2854, %v2860
    %v2863 = vmul.f32 %v2861, 1.442695
    %v2864 = vpow.pop %v2863
    %v2865 = vmul.f32 %v2862, 1.442695
    %v2866 = vpow.pop %v2865
    %v2867 = vsel %vm89, %v2864, 0.0
    %2868 = vadd.xlane.f32.xlu0 %v2867
    %v2869 = vpop.xlane.xlu0 %2868
    %v2870 = vsel %vm89, %v2866, 0.0
    %2871 = vadd.xlane.f32.xlu0 %v2870
    %v2872 = vpop.xlane.xlu0 %2871
    %v2873 = vrcp.pop %v2869
    %v2874 = vmul.f32 %v2864, %v2873
    %v2875 = vrcp.pop %v2872
    %v2876 = vmul.f32 %v2866, %v2875
    %v2877 = vpack.c.bf16 %v2874, %v2874
    %v2878 = vpack.c.bf16 %v2876, %v2876
    %v2880 = vsel %vm89, %v2877, 0
    %v2883 = vsel %vm500, %v2759, 0
    %2885 = vmatprep.subr.bf16.mxu0 0
    %2886 = vmatpush1.bf16.msra.mxu0 %v2883
    %2887 = vmatprep.subr.bf16.mxu0 0
    %2888 = vmatpush1.bf16.msra.mxu0 0
    %2889 = vmatprep.subr.bf16.mxu0 0
    %2890 = vmatpush1.bf16.msra.mxu0 0
    %2891 = vmatprep.subr.bf16.mxu0 0
    %2892 = vmatpush1.bf16.msra.mxu0 0
    %2893 = vmatprep.subr.bf16.mxu0 0
    %2894 = vmatpush1.bf16.msra.mxu0 0
    %2895 = vmatprep.subr.bf16.mxu0 0
    %2896 = vmatpush1.bf16.msra.mxu0 0
    %2897 = vmatprep.subr.bf16.mxu0 0
    %2898 = vmatpush1.bf16.msra.mxu0 0
    %2899 = vmatprep.subr.bf16.mxu0 0
    %2900 = vmatpush1.bf16.msra.mxu0 0
    %2901 = vmatprep.subr.bf16.mxu0 0
    %2902 = vmatpush1.bf16.msra.mxu0 0
    %2903 = vmatprep.subr.bf16.mxu0 0
    %2904 = vmatpush1.bf16.msra.mxu0 0
    %2905 = vmatprep.subr.bf16.mxu0 0
    %2906 = vmatpush1.bf16.msra.mxu0 0
    %2907 = vmatprep.subr.bf16.mxu0 0
    %2908 = vmatpush1.bf16.msra.mxu0 0
    %2909 = vmatprep.subr.bf16.mxu0 0
    %2910 = vmatpush1.bf16.msra.mxu0 0
    %2911 = vmatprep.subr.bf16.mxu0 0
    %2912 = vmatpush1.bf16.msra.mxu0 0
    %2913 = vmatprep.subr.bf16.mxu0 0
    %2914 = vmatpush1.bf16.msra.mxu0 0
    %2915 = vmatprep.subr.bf16.mxu0 0
    %2916 = vmatpush1.bf16.msra.mxu0 0
    %2917 = vmatprep.mubr.bf16.mxu0 0
    %2918 = vmatmul.mubr.bf16.gmra.mrb[0].mxu0 %v2880
    %v2919 = vpop.f32.mrb[0].mxu0
    %v2920 = vadd.f32 0.0, %v2919
    %v2921 = vpop.f32.mrb[0].mxu0
    %v2922 = vpop.f32.mrb[0].mxu0
    %v2923 = vpop.f32.mrb[0].mxu0
    %2924 = vdwg.mxu0
    %v2926 = vsel %vm89, %v2878, 0
    %v2929 = vsel %vm500, %v2760, 0
    %2931 = vmatprep.subr.bf16.mxu0 0
    %2932 = vmatpush1.bf16.msra.mxu0 %v2929
    %2933 = vmatprep.subr.bf16.mxu0 0
    %2934 = vmatpush1.bf16.msra.mxu0 0
    %2935 = vmatprep.subr.bf16.mxu0 0
    %2936 = vmatpush1.bf16.msra.mxu0 0
    %2937 = vmatprep.subr.bf16.mxu0 0
    %2938 = vmatpush1.bf16.msra.mxu0 0
    %2939 = vmatprep.subr.bf16.mxu0 0
    %2940 = vmatpush1.bf16.msra.mxu0 0
    %2941 = vmatprep.subr.bf16.mxu0 0
    %2942 = vmatpush1.bf16.msra.mxu0 0
    %2943 = vmatprep.subr.bf16.mxu0 0
    %2944 = vmatpush1.bf16.msra.mxu0 0
    %2945 = vmatprep.subr.bf16.mxu0 0
    %2946 = vmatpush1.bf16.msra.mxu0 0
    %2947 = vmatprep.subr.bf16.mxu0 0
    %2948 = vmatpush1.bf16.msra.mxu0 0
    %2949 = vmatprep.subr.bf16.mxu0 0
    %2950 = vmatpush1.bf16.msra.mxu0 0
    %2951 = vmatprep.subr.bf16.mxu0 0
    %2952 = vmatpush1.bf16.msra.mxu0 0
    %2953 = vmatprep.subr.bf16.mxu0 0
    %2954 = vmatpush1.bf16.msra.mxu0 0
    %2955 = vmatprep.subr.bf16.mxu0 0
    %2956 = vmatpush1.bf16.msra.mxu0 0
    %2957 = vmatprep.subr.bf16.mxu0 0
    %2958 = vmatpush1.bf16.msra.mxu0 0
    %2959 = vmatprep.subr.bf16.mxu0 0
    %2960 = vmatpush1.bf16.msra.mxu0 0
    %2961 = vmatprep.subr.bf16.mxu0 0
    %2962 = vmatpush1.bf16.msra.mxu0 0
    %2963 = vmatprep.mubr.bf16.mxu0 0
    %2964 = vmatmul.mubr.bf16.gmra.mrb[0].mxu0 %v2926
    %v2965 = vpop.f32.mrb[0].mxu0
    %v2966 = vadd.f32 0.0, %v2965
    %v2967 = vpop.f32.mrb[0].mxu0
    %v2968 = vpop.f32.mrb[0].mxu0
    %v2969 = vpop.f32.mrb[0].mxu0
    %2970 = vdwg.mxu0
    %v2971 = vpack.c.bf16 %v2966, %v2920
    %v2973 = vsel %vm89, %v2971, 0
    %v2976 = vsel %vm500, %v2167, 0
    %2978 = vmatprep.subr.bf16.mxu0 0
    %2979 = vmatpush1.bf16.msra.mxu0 %v2976
    %2980 = vmatprep.subr.bf16.mxu0 0
    %2981 = vmatpush1.bf16.msra.mxu0 0
    %2982 = vmatprep.subr.bf16.mxu0 0
    %2983 = vmatpush1.bf16.msra.mxu0 0
    %2984 = vmatprep.subr.bf16.mxu0 0
    %2985 = vmatpush1.bf16.msra.mxu0 0
    %2986 = vmatprep.subr.bf16.mxu0 0
    %2987 = vmatpush1.bf16.msra.mxu0 0
    %2988 = vmatprep.subr.bf16.mxu0 0
    %2989 = vmatpush1.bf16.msra.mxu0 0
    %2990 = vmatprep.subr.bf16.mxu0 0
    %2991 = vmatpush1.bf16.msra.mxu0 0
    %2992 = vmatprep.subr.bf16.mxu0 0
    %2993 = vmatpush1.bf16.msra.mxu0 0
    %2994 = vmatprep.subr.bf16.mxu0 0
    %2995 = vmatpush1.bf16.msra.mxu0 0
    %2996 = vmatprep.subr.bf16.mxu0 0
    %2997 = vmatpush1.bf16.msra.mxu0 0
    %2998 = vmatprep.subr.bf16.mxu0 0
    %2999 = vmatpush1.bf16.msra.mxu0 0
    %3000 = vmatprep.subr.bf16.mxu0 0
    %3001 = vmatpush1.bf16.msra.mxu0 0
    %3002 = vmatprep.subr.bf16.mxu0 0
    %3003 = vmatpush1.bf16.msra.mxu0 0
    %3004 = vmatprep.subr.bf16.mxu0 0
    %3005 = vmatpush1.bf16.msra.mxu0 0
    %3006 = vmatprep.subr.bf16.mxu0 0
    %3007 = vmatpush1.bf16.msra.mxu0 0
    %3008 = vmatprep.subr.bf16.mxu0 0
    %3009 = vmatpush1.bf16.msra.mxu0 0
    %3010 = vmatprep.mubr.bf16.mxu0 0
    %3011 = vmatmul.mubr.bf16.gmra.mrb[0].mxu0 %v2973
    %v3012 = vpop.f32.mrb[0].mxu0
    %v3013 = vadd.f32 0.0, %v3012
    %v3014 = vpop.f32.mrb[0].mxu0
    %v3015 = vpop.f32.mrb[0].mxu0
    %v3016 = vadd.f32 0.0, %v3015
    %v3017 = vpop.f32.mrb[0].mxu0
    %3018 = vdwg.mxu0
    %v3020 = vsel %vm89, %v2595, 0
    %v3023 = vsel %vm500, %v2166, 0
    %3025 = vmatprep.subr.bf16.mxu0 0
    %3026 = vmatpush1.bf16.msra.mxu0 %v3023
    %3027 = vmatprep.subr.bf16.mxu0 0
    %3028 = vmatpush1.bf16.msra.mxu0 0
    %3029 = vmatprep.subr.bf16.mxu0 0
    %3030 = vmatpush1.bf16.msra.mxu0 0
    %3031 = vmatprep.subr.bf16.mxu0 0
    %3032 = vmatpush1.bf16.msra.mxu0 0
    %3033 = vmatprep.subr.bf16.mxu0 0
    %3034 = vmatpush1.bf16.msra.mxu0 0
    %3035 = vmatprep.subr.bf16.mxu0 0
    %3036 = vmatpush1.bf16.msra.mxu0 0
    %3037 = vmatprep.subr.bf16.mxu0 0
    %3038 = vmatpush1.bf16.msra.mxu0 0
    %3039 = vmatprep.subr.bf16.mxu0 0
    %3040 = vmatpush1.bf16.msra.mxu0 0
    %3041 = vmatprep.subr.bf16.mxu0 0
    %3042 = vmatpush1.bf16.msra.mxu0 0
    %3043 = vmatprep.subr.bf16.mxu0 0
    %3044 = vmatpush1.bf16.msra.mxu0 0
    %3045 = vmatprep.subr.bf16.mxu0 0
    %3046 = vmatpush1.bf16.msra.mxu0 0
    %3047 = vmatprep.subr.bf16.mxu0 0
    %3048 = vmatpush1.bf16.msra.mxu0 0
    %3049 = vmatprep.subr.bf16.mxu0 0
    %3050 = vmatpush1.bf16.msra.mxu0 0
    %3051 = vmatprep.subr.bf16.mxu0 0
    %3052 = vmatpush1.bf16.msra.mxu0 0
    %3053 = vmatprep.subr.bf16.mxu0 0
    %3054 = vmatpush1.bf16.msra.mxu0 0
    %3055 = vmatprep.subr.bf16.mxu0 0
    %3056 = vmatpush1.bf16.msra.mxu0 0
    %3057 = vmatprep.mubr.bf16.mxu0 0
    %3058 = vmatmul.mubr.bf16.gmra.mrb[0].mxu0 %v3020
    %v3059 = vpop.f32.mrb[0].mxu0
    %v3060 = vadd.f32 %v3013, %v3059
    %v3061 = vpop.f32.mrb[0].mxu0
    %v3062 = vpop.f32.mrb[0].mxu0
    %v3063 = vadd.f32 %v3016, %v3062
    %v3064 = vpop.f32.mrb[0].mxu0
    %3065 = vdwg.mxu0
    %v3070 = vunpack.c.l.b16 %v2123
    %v3071 = vunpack.c.l.b16 %v2124
    %v3072 = vunpack.c.l.b16 %v2125
    %v3073 = vunpack.c.l.b16 %v2126
    %v3074 = vpack.c.b16 %v3071, %v3070
    %v3075 = vpack.c.b16 %v3073, %v3072
    %3078 = vmatprep.subr.bf16.mxu0 0
    %3079 = vmatpush1.bf16.msra.mxu0 %v3074
    %3080 = vmatprep.subr.bf16.mxu0 0
    %3081 = vmatpush1.bf16.msra.mxu0 %v3075
    %3082 = vmatprep.subr.bf16.mxu0 0
    %3083 = vmatpush1.bf16.msra.mxu0 0
    %3084 = vmatprep.subr.bf16.mxu0 0
    %3085 = vmatpush1.bf16.msra.mxu0 0
    %3086 = vmatprep.subr.bf16.mxu0 0
    %3087 = vmatpush1.bf16.msra.mxu0 0
    %3088 = vmatprep.subr.bf16.mxu0 0
    %3089 = vmatpush1.bf16.msra.mxu0 0
    %3090 = vmatprep.subr.bf16.mxu0 0
    %3091 = vmatpush1.bf16.msra.mxu0 0
    %3092 = vmatprep.subr.bf16.mxu0 0
    %3093 = vmatpush1.bf16.msra.mxu0 0
    %3094 = vmatprep.subr.bf16.mxu0 0
    %3095 = vmatpush1.bf16.msra.mxu0 0
    %3096 = vmatprep.subr.bf16.mxu0 0
    %3097 = vmatpush1.bf16.msra.mxu0 0
    %3098 = vmatprep.subr.bf16.mxu0 0
    %3099 = vmatpush1.bf16.msra.mxu0 0
    %3100 = vmatprep.subr.bf16.mxu0 0
    %3101 = vmatpush1.bf16.msra.mxu0 0
    %3102 = vmatprep.subr.bf16.mxu0 0
    %3103 = vmatpush1.bf16.msra.mxu0 0
    %3104 = vmatprep.subr.bf16.mxu0 0
    %3105 = vmatpush1.bf16.msra.mxu0 0
    %3106 = vmatprep.subr.bf16.mxu0 0
    %3107 = vmatpush1.bf16.msra.mxu0 0
    %3108 = vmatprep.subr.bf16.mxu0 0
    %3109 = vmatpush1.bf16.msra.mxu0 0
    %3110 = vmatprep.mubr.bf16.mxu0 0
    %3111 = vmatmul.mubr.bf16.gmra.mrb[0].mxu0 %v2230
    %v3112 = vpop.f32.mrb[0].mxu0
    %v3113 = vadd.f32 0.0, %v3112
    %v3114 = vpop.f32.mrb[0].mxu0
    %v3115 = vpop.f32.mrb[0].mxu0
    %v3116 = vadd.f32 0.0, %v3115
    %v3117 = vpop.f32.mrb[0].mxu0
    %3118 = vdwg.mxu0
    %v3123 = vunpack.c.l.b16 %v2140
    %v3124 = vunpack.c.l.b16 %v2141
    %v3125 = vunpack.c.l.b16 %v2142
    %v3126 = vunpack.c.l.b16 %v2143
    %v3127 = vpack.c.b16 %v3124, %v3123
    %v3128 = vpack.c.b16 %v3126, %v3125
    %3131 = vmatprep.subr.bf16.mxu0 0
    %3132 = vmatpush1.bf16.msra.mxu0 %v3127
    %3133 = vmatprep.subr.bf16.mxu0 0
    %3134 = vmatpush1.bf16.msra.mxu0 %v3128
    %3135 = vmatprep.subr.bf16.mxu0 0
    %3136 = vmatpush1.bf16.msra.mxu0 0
    %3137 = vmatprep.subr.bf16.mxu0 0
    %3138 = vmatpush1.bf16.msra.mxu0 0
    %3139 = vmatprep.subr.bf16.mxu0 0
    %3140 = vmatpush1.bf16.msra.mxu0 0
    %3141 = vmatprep.subr.bf16.mxu0 0
    %3142 = vmatpush1.bf16.msra.mxu0 0
    %3143 = vmatprep.subr.bf16.mxu0 0
    %3144 = vmatpush1.bf16.msra.mxu0 0
    %3145 = vmatprep.subr.bf16.mxu0 0
    %3146 = vmatpush1.bf16.msra.mxu0 0
    %3147 = vmatprep.subr.bf16.mxu0 0
    %3148 = vmatpush1.bf16.msra.mxu0 0
    %3149 = vmatprep.subr.bf16.mxu0 0
    %3150 = vmatpush1.bf16.msra.mxu0 0
    %3151 = vmatprep.subr.bf16.mxu0 0
    %3152 = vmatpush1.bf16.msra.mxu0 0
    %3153 = vmatprep.subr.bf16.mxu0 0
    %3154 = vmatpush1.bf16.msra.mxu0 0
    %3155 = vmatprep.subr.bf16.mxu0 0
    %3156 = vmatpush1.bf16.msra.mxu0 0
    %3157 = vmatprep.subr.bf16.mxu0 0
    %3158 = vmatpush1.bf16.msra.mxu0 0
    %3159 = vmatprep.subr.bf16.mxu0 0
    %3160 = vmatpush1.bf16.msra.mxu0 0
    %3161 = vmatprep.subr.bf16.mxu0 0
    %3162 = vmatpush1.bf16.msra.mxu0 0
    %3163 = vmatprep.mubr.bf16.mxu0 0
    %3164 = vmatmul.mubr.bf16.gmra.mrb[0].mxu0 %v2230
    %v3165 = vpop.f32.mrb[0].mxu0
    %v3166 = vadd.f32 0.0, %v3165
    %v3167 = vpop.f32.mrb[0].mxu0
    %v3168 = vpop.f32.mrb[0].mxu0
    %v3169 = vadd.f32 0.0, %v3168
    %v3170 = vpop.f32.mrb[0].mxu0
    %3171 = vdwg.mxu0
    %v3176 = vunpack.c.l.b16 %v2157
    %v3177 = vunpack.c.l.b16 %v2158
    %v3178 = vunpack.c.l.b16 %v2159
    %v3179 = vunpack.c.l.b16 %v2160
    %v3180 = vpack.c.b16 %v3177, %v3176
    %v3181 = vpack.c.b16 %v3179, %v3178
    %3184 = vmatprep.subr.bf16.mxu0 0
    %3185 = vmatpush1.bf16.msra.mxu0 %v3180
    %3186 = vmatprep.subr.bf16.mxu0 0
    %3187 = vmatpush1.bf16.msra.mxu0 %v3181
    %3188 = vmatprep.subr.bf16.mxu0 0
    %3189 = vmatpush1.bf16.msra.mxu0 0
    %3190 = vmatprep.subr.bf16.mxu0 0
    %3191 = vmatpush1.bf16.msra.mxu0 0
    %3192 = vmatprep.subr.bf16.mxu0 0
    %3193 = vmatpush1.bf16.msra.mxu0 0
    %3194 = vmatprep.subr.bf16.mxu0 0
    %3195 = vmatpush1.bf16.msra.mxu0 0
    %3196 = vmatprep.subr.bf16.mxu0 0
    %3197 = vmatpush1.bf16.msra.mxu0 0
    %3198 = vmatprep.subr.bf16.mxu0 0
    %3199 = vmatpush1.bf16.msra.mxu0 0
    %3200 = vmatprep.subr.bf16.mxu0 0
    %3201 = vmatpush1.bf16.msra.mxu0 0
    %3202 = vmatprep.subr.bf16.mxu0 0
    %3203 = vmatpush1.bf16.msra.mxu0 0
    %3204 = vmatprep.subr.bf16.mxu0 0
    %3205 = vmatpush1.bf16.msra.mxu0 0
    %3206 = vmatprep.subr.bf16.mxu0 0
    %3207 = vmatpush1.bf16.msra.mxu0 0
    %3208 = vmatprep.subr.bf16.mxu0 0
    %3209 = vmatpush1.bf16.msra.mxu0 0
    %3210 = vmatprep.subr.bf16.mxu0 0
    %3211 = vmatpush1.bf16.msra.mxu0 0
    %3212 = vmatprep.subr.bf16.mxu0 0
    %3213 = vmatpush1.bf16.msra.mxu0 0
    %3214 = vmatprep.subr.bf16.mxu0 0
    %3215 = vmatpush1.bf16.msra.mxu0 0
    %3216 = vmatprep.mubr.bf16.mxu0 0
    %3217 = vmatmul.mubr.bf16.gmra.mrb[0].mxu0 %v2230
    %v3218 = vpop.f32.mrb[0].mxu0
    %v3219 = vadd.f32 0.0, %v3218
    %v3220 = vpop.f32.mrb[0].mxu0
    %v3221 = vpop.f32.mrb[0].mxu0
    %v3222 = vadd.f32 0.0, %v3221
    %v3223 = vpop.f32.mrb[0].mxu0
    %3224 = vdwg.mxu0
    %v3225 = vpack.c.bf16 %v3113, %v3113
    %v3226 = vpack.c.bf16 %v3116, %v3116
    %v3227 = vpack.c.bf16 %v3166, %v3166
    %v3228 = vpack.c.bf16 %v3169, %v3169
    %v3229 = vpack.c.bf16 %v3219, %v3219
    %v3230 = vpack.c.bf16 %v3222, %v3222
    %v3232 = vsel %vm89, %v3225, 0
    %v3235 = vsel %vm89, %v3227, 0
    %3237 = vmatprep.subr.bf16.mxu0 0
    %3238 = vmatpush1.bf16.xpose.msra.mxu0 %v3235
    %3239 = vmatprep.subr.bf16.mxu0 0
    %3240 = vmatpush1.bf16.xpose.msra.mxu0 0
    %3241 = vmatprep.subr.bf16.mxu0 0
    %3242 = vmatpush1.bf16.xpose.msra.mxu0 0
    %3243 = vmatprep.subr.bf16.mxu0 0
    %3244 = vmatpush1.bf16.xpose.msra.mxu0 0
    %3245 = vmatprep.subr.bf16.mxu0 0
    %3246 = vmatpush1.bf16.xpose.msra.mxu0 0
    %3247 = vmatprep.subr.bf16.mxu0 0
    %3248 = vmatpush1.bf16.xpose.msra.mxu0 0
    %3249 = vmatprep.subr.bf16.mxu0 0
    %3250 = vmatpush1.bf16.xpose.msra.mxu0 0
    %3251 = vmatprep.subr.bf16.mxu0 0
    %3252 = vmatpush1.bf16.xpose.msra.mxu0 0
    %3253 = vmatprep.subr.bf16.mxu0 0
    %3254 = vmatpush1.bf16.xpose.msra.mxu0 0
    %3255 = vmatprep.subr.bf16.mxu0 0
    %3256 = vmatpush1.bf16.xpose.msra.mxu0 0
    %3257 = vmatprep.subr.bf16.mxu0 0
    %3258 = vmatpush1.bf16.xpose.msra.mxu0 0
    %3259 = vmatprep.subr.bf16.mxu0 0
    %3260 = vmatpush1.bf16.xpose.msra.mxu0 0
    %3261 = vmatprep.subr.bf16.mxu0 0
    %3262 = vmatpush1.bf16.xpose.msra.mxu0 0
    %3263 = vmatprep.subr.bf16.mxu0 0
    %3264 = vmatpush1.bf16.xpose.msra.mxu0 0
    %3265 = vmatprep.subr.bf16.mxu0 0
    %3266 = vmatpush1.bf16.xpose.msra.mxu0 0
    %3267 = vmatprep.subr.bf16.mxu0 0
    %3268 = vmatpush1.bf16.xpose.msra.mxu0 0
    %3269 = vmatprep.mubr.bf16.mxu0 0
    %3270 = vmatmul.mubr.bf16.gmra.mrb[0].mxu0 %v3232
    %v3271 = vpop.f32.mrb[0].mxu0
    %v3272 = vadd.f32 %v109, %v3271
    %v3273 = vpop.f32.mrb[0].mxu0
    %v3274 = vpop.f32.mrb[0].mxu0
    %v3275 = vpop.f32.mrb[0].mxu0
    %3276 = vdwg.mxu0
    %v3278 = vsel %vm89, %v3226, 0
    %v3281 = vsel %vm89, %v3228, 0
    %3283 = vmatprep.subr.bf16.mxu0 0
    %3284 = vmatpush1.bf16.xpose.msra.mxu0 %v3281
    %3285 = vmatprep.subr.bf16.mxu0 0
    %3286 = vmatpush1.bf16.xpose.msra.mxu0 0
    %3287 = vmatprep.subr.bf16.mxu0 0
    %3288 = vmatpush1.bf16.xpose.msra.mxu0 0
    %3289 = vmatprep.subr.bf16.mxu0 0
    %3290 = vmatpush1.bf16.xpose.msra.mxu0 0
    %3291 = vmatprep.subr.bf16.mxu0 0
    %3292 = vmatpush1.bf16.xpose.msra.mxu0 0
    %3293 = vmatprep.subr.bf16.mxu0 0
    %3294 = vmatpush1.bf16.xpose.msra.mxu0 0
    %3295 = vmatprep.subr.bf16.mxu0 0
    %3296 = vmatpush1.bf16.xpose.msra.mxu0 0
    %3297 = vmatprep.subr.bf16.mxu0 0
    %3298 = vmatpush1.bf16.xpose.msra.mxu0 0
    %3299 = vmatprep.subr.bf16.mxu0 0
    %3300 = vmatpush1.bf16.xpose.msra.mxu0 0
    %3301 = vmatprep.subr.bf16.mxu0 0
    %3302 = vmatpush1.bf16.xpose.msra.mxu0 0
    %3303 = vmatprep.subr.bf16.mxu0 0
    %3304 = vmatpush1.bf16.xpose.msra.mxu0 0
    %3305 = vmatprep.subr.bf16.mxu0 0
    %3306 = vmatpush1.bf16.xpose.msra.mxu0 0
    %3307 = vmatprep.subr.bf16.mxu0 0
    %3308 = vmatpush1.bf16.xpose.msra.mxu0 0
    %3309 = vmatprep.subr.bf16.mxu0 0
    %3310 = vmatpush1.bf16.xpose.msra.mxu0 0
    %3311 = vmatprep.subr.bf16.mxu0 0
    %3312 = vmatpush1.bf16.xpose.msra.mxu0 0
    %3313 = vmatprep.subr.bf16.mxu0 0
    %3314 = vmatpush1.bf16.xpose.msra.mxu0 0
    %3315 = vmatprep.mubr.bf16.mxu0 0
    %3316 = vmatmul.mubr.bf16.gmra.mrb[0].mxu0 %v3278
    %v3317 = vpop.f32.mrb[0].mxu0
    %v3318 = vadd.f32 %v111, %v3317
    %v3319 = vpop.f32.mrb[0].mxu0
    %v3320 = vpop.f32.mrb[0].mxu0
    %v3321 = vpop.f32.mrb[0].mxu0
    %3322 = vdwg.mxu0
    %v3323 = vsel %vm83, -1e+09, %v3272
    %v3324 = vsel %vm84, -1e+09, %v3318
    %v3325 = vsel %vm89, %v3323, -inf
    %3326 = vmax.xlane.f32.xlu0 %v3325
    %v3327 = vpop.xlane.xlu0 %3326
    %v3328 = vsel %vm89, %v3324, -inf
    %3329 = vmax.xlane.f32.xlu0 %v3328
    %v3330 = vpop.xlane.xlu0 %3329
    %v3331 = vsub.f32 %v3323, %v3327
    %v3332 = vsub.f32 %v3324, %v3330
    %v3333 = vmul.f32 %v3331, 1.442695
    %v3334 = vpow.pop %v3333
    %v3335 = vmul.f32 %v3332, 1.442695
    %v3336 = vpow.pop %v3335
    %v3337 = vsel %vm89, %v3334, 0.0
    %3338 = vadd.xlane.f32.xlu0 %v3337
    %v3339 = vpop.xlane.xlu0 %3338
    %v3340 = vsel %vm89, %v3336, 0.0
    %3341 = vadd.xlane.f32.xlu0 %v3340
    %v3342 = vpop.xlane.xlu0 %3341
    %v3343 = vrcp.pop %v3339
    %v3344 = vmul.f32 %v3334, %v3343
    %v3345 = vrcp.pop %v3342
    %v3346 = vmul.f32 %v3336, %v3345
    %v3347 = vpack.c.bf16 %v3344, %v3344
    %v3348 = vpack.c.bf16 %v3346, %v3346
    %v3350 = vsel %vm89, %v3347, 0
    %v3353 = vsel %vm500, %v3229, 0
    %3355 = vmatprep.subr.bf16.mxu0 0
    %3356 = vmatpush1.bf16.msra.mxu0 %v3353
    %3357 = vmatprep.subr.bf16.mxu0 0
    %3358 = vmatpush1.bf16.msra.mxu0 0
    %3359 = vmatprep.subr.bf16.mxu0 0
    %3360 = vmatpush1.bf16.msra.mxu0 0
    %3361 = vmatprep.subr.bf16.mxu0 0
    %3362 = vmatpush1.bf16.msra.mxu0 0
    %3363 = vmatprep.subr.bf16.mxu0 0
    %3364 = vmatpush1.bf16.msra.mxu0 0
    %3365 = vmatprep.subr.bf16.mxu0 0
    %3366 = vmatpush1.bf16.msra.mxu0 0
    %3367 = vmatprep.subr.bf16.mxu0 0
    %3368 = vmatpush1.bf16.msra.mxu0 0
    %3369 = vmatprep.subr.bf16.mxu0 0
    %3370 = vmatpush1.bf16.msra.mxu0 0
    %3371 = vmatprep.subr.bf16.mxu0 0
    %3372 = vmatpush1.bf16.msra.mxu0 0
    %3373 = vmatprep.subr.bf16.mxu0 0
    %3374 = vmatpush1.bf16.msra.mxu0 0
    %3375 = vmatprep.subr.bf16.mxu0 0
    %3376 = vmatpush1.bf16.msra.mxu0 0
    %3377 = vmatprep.subr.bf16.mxu0 0
    %3378 = vmatpush1.bf16.msra.mxu0 0
    %3379 = vmatprep.subr.bf16.mxu0 0
    %3380 = vmatpush1.bf16.msra.mxu0 0
    %3381 = vmatprep.subr.bf16.mxu0 0
    %3382 = vmatpush1.bf16.msra.mxu0 0
    %3383 = vmatprep.subr.bf16.mxu0 0
    %3384 = vmatpush1.bf16.msra.mxu0 0
    %3385 = vmatprep.subr.bf16.mxu0 0
    %3386 = vmatpush1.bf16.msra.mxu0 0
    %3387 = vmatprep.mubr.bf16.mxu0 0
    %3388 = vmatmul.mubr.bf16.gmra.mrb[0].mxu0 %v3350
    %v3389 = vpop.f32.mrb[0].mxu0
    %v3390 = vadd.f32 0.0, %v3389
    %v3391 = vpop.f32.mrb[0].mxu0
    %v3392 = vpop.f32.mrb[0].mxu0
    %v3393 = vpop.f32.mrb[0].mxu0
    %3394 = vdwg.mxu0
    %v3396 = vsel %vm89, %v3348, 0
    %v3399 = vsel %vm500, %v3230, 0
    %3401 = vmatprep.subr.bf16.mxu0 0
    %3402 = vmatpush1.bf16.msra.mxu0 %v3399
    %3403 = vmatprep.subr.bf16.mxu0 0
    %3404 = vmatpush1.bf16.msra.mxu0 0
    %3405 = vmatprep.subr.bf16.mxu0 0
    %3406 = vmatpush1.bf16.msra.mxu0 0
    %3407 = vmatprep.subr.bf16.mxu0 0
    %3408 = vmatpush1.bf16.msra.mxu0 0
    %3409 = vmatprep.subr.bf16.mxu0 0
    %3410 = vmatpush1.bf16.msra.mxu0 0
    %3411 = vmatprep.subr.bf16.mxu0 0
    %3412 = vmatpush1.bf16.msra.mxu0 0
    %3413 = vmatprep.subr.bf16.mxu0 0
    %3414 = vmatpush1.bf16.msra.mxu0 0
    %3415 = vmatprep.subr.bf16.mxu0 0
    %3416 = vmatpush1.bf16.msra.mxu0 0
    %3417 = vmatprep.subr.bf16.mxu0 0
    %3418 = vmatpush1.bf16.msra.mxu0 0
    %3419 = vmatprep.subr.bf16.mxu0 0
    %3420 = vmatpush1.bf16.msra.mxu0 0
    %3421 = vmatprep.subr.bf16.mxu0 0
    %3422 = vmatpush1.bf16.msra.mxu0 0
    %3423 = vmatprep.subr.bf16.mxu0 0
    %3424 = vmatpush1.bf16.msra.mxu0 0
    %3425 = vmatprep.subr.bf16.mxu0 0
    %3426 = vmatpush1.bf16.msra.mxu0 0
    %3427 = vmatprep.subr.bf16.mxu0 0
    %3428 = vmatpush1.bf16.msra.mxu0 0
    %3429 = vmatprep.subr.bf16.mxu0 0
    %3430 = vmatpush1.bf16.msra.mxu0 0
    %3431 = vmatprep.subr.bf16.mxu0 0
    %3432 = vmatpush1.bf16.msra.mxu0 0
    %3433 = vmatprep.mubr.bf16.mxu0 0
    %3434 = vmatmul.mubr.bf16.gmra.mrb[0].mxu0 %v3396
    %v3435 = vpop.f32.mrb[0].mxu0
    %v3436 = vadd.f32 0.0, %v3435
    %v3437 = vpop.f32.mrb[0].mxu0
    %v3438 = vpop.f32.mrb[0].mxu0
    %v3439 = vpop.f32.mrb[0].mxu0
    %3440 = vdwg.mxu0
    %v3441 = vpack.c.bf16 %v3436, %v3390
    %v3443 = vsel %vm89, %v3441, 0
    %v3446 = vsel %vm500, %v2168, 0
    %3448 = vmatprep.subr.bf16.mxu0 0
    %3449 = vmatpush1.bf16.msra.mxu0 %v3446
    %3450 = vmatprep.subr.bf16.mxu0 0
    %3451 = vmatpush1.bf16.msra.mxu0 0
    %3452 = vmatprep.subr.bf16.mxu0 0
    %3453 = vmatpush1.bf16.msra.mxu0 0
    %3454 = vmatprep.subr.bf16.mxu0 0
    %3455 = vmatpush1.bf16.msra.mxu0 0
    %3456 = vmatprep.subr.bf16.mxu0 0
    %3457 = vmatpush1.bf16.msra.mxu0 0
    %3458 = vmatprep.subr.bf16.mxu0 0
    %3459 = vmatpush1.bf16.msra.mxu0 0
    %3460 = vmatprep.subr.bf16.mxu0 0
    %3461 = vmatpush1.bf16.msra.mxu0 0
    %3462 = vmatprep.subr.bf16.mxu0 0
    %3463 = vmatpush1.bf16.msra.mxu0 0
    %3464 = vmatprep.subr.bf16.mxu0 0
    %3465 = vmatpush1.bf16.msra.mxu0 0
    %3466 = vmatprep.subr.bf16.mxu0 0
    %3467 = vmatpush1.bf16.msra.mxu0 0
    %3468 = vmatprep.subr.bf16.mxu0 0
    %3469 = vmatpush1.bf16.msra.mxu0 0
    %3470 = vmatprep.subr.bf16.mxu0 0
    %3471 = vmatpush1.bf16.msra.mxu0 0
    %3472 = vmatprep.subr.bf16.mxu0 0
    %3473 = vmatpush1.bf16.msra.mxu0 0
    %3474 = vmatprep.subr.bf16.mxu0 0
    %3475 = vmatpush1.bf16.msra.mxu0 0
    %3476 = vmatprep.subr.bf16.mxu0 0
    %3477 = vmatpush1.bf16.msra.mxu0 0
    %3478 = vmatprep.subr.bf16.mxu0 0
    %3479 = vmatpush1.bf16.msra.mxu0 0
    %3480 = vmatprep.mubr.bf16.mxu0 0
    %3481 = vmatmul.mubr.bf16.gmra.mrb[0].mxu0 %v3443
    %v3482 = vpop.f32.mrb[0].mxu0
    %v3483 = vadd.f32 0.0, %v3482
    %v3484 = vpop.f32.mrb[0].mxu0
    %v3485 = vpop.f32.mrb[0].mxu0
    %v3486 = vadd.f32 0.0, %v3485
    %v3487 = vpop.f32.mrb[0].mxu0
    %3488 = vdwg.mxu0
    %v3489 = vadd.f32 %v3060, %v3483
    %v3490 = vadd.f32 %v3063, %v3486
    %v3495 = vunpack.c.l.b16 %v2127
    %v3496 = vunpack.c.l.b16 %v2128
    %v3497 = vunpack.c.l.b16 %v2129
    %v3498 = vunpack.c.l.b16 %v2130
    %v3499 = vpack.c.b16 %v3496, %v3495
    %v3500 = vpack.c.b16 %v3498, %v3497
    %3503 = vmatprep.subr.bf16.mxu0 0
    %3504 = vmatpush1.bf16.msra.mxu0 %v3499
    %3505 = vmatprep.subr.bf16.mxu0 0
    %3506 = vmatpush1.bf16.msra.mxu0 %v3500
    %3507 = vmatprep.subr.bf16.mxu0 0
    %3508 = vmatpush1.bf16.msra.mxu0 0
    %3509 = vmatprep.subr.bf16.mxu0 0
    %3510 = vmatpush1.bf16.msra.mxu0 0
    %3511 = vmatprep.subr.bf16.mxu0 0
    %3512 = vmatpush1.bf16.msra.mxu0 0
    %3513 = vmatprep.subr.bf16.mxu0 0
    %3514 = vmatpush1.bf16.msra.mxu0 0
    %3515 = vmatprep.subr.bf16.mxu0 0
    %3516 = vmatpush1.bf16.msra.mxu0 0
    %3517 = vmatprep.subr.bf16.mxu0 0
    %3518 = vmatpush1.bf16.msra.mxu0 0
    %3519 = vmatprep.subr.bf16.mxu0 0
    %3520 = vmatpush1.bf16.msra.mxu0 0
    %3521 = vmatprep.subr.bf16.mxu0 0
    %3522 = vmatpush1.bf16.msra.mxu0 0
    %3523 = vmatprep.subr.bf16.mxu0 0
    %3524 = vmatpush1.bf16.msra.mxu0 0
    %3525 = vmatprep.subr.bf16.mxu0 0
    %3526 = vmatpush1.bf16.msra.mxu0 0
    %3527 = vmatprep.subr.bf16.mxu0 0
    %3528 = vmatpush1.bf16.msra.mxu0 0
    %3529 = vmatprep.subr.bf16.mxu0 0
    %3530 = vmatpush1.bf16.msra.mxu0 0
    %3531 = vmatprep.subr.bf16.mxu0 0
    %3532 = vmatpush1.bf16.msra.mxu0 0
    %3533 = vmatprep.subr.bf16.mxu0 0
    %3534 = vmatpush1.bf16.msra.mxu0 0
    %3535 = vmatprep.mubr.bf16.mxu0 0
    %3536 = vmatmul.mubr.bf16.gmra.mrb[0].mxu0 %v2230
    %v3537 = vpop.f32.mrb[0].mxu0
    %v3538 = vadd.f32 0.0, %v3537
    %v3539 = vpop.f32.mrb[0].mxu0
    %v3540 = vpop.f32.mrb[0].mxu0
    %v3541 = vadd.f32 0.0, %v3540
    %v3542 = vpop.f32.mrb[0].mxu0
    %3543 = vdwg.mxu0
    %v3548 = vunpack.c.l.b16 %v2144
    %v3549 = vunpack.c.l.b16 %v2145
    %v3550 = vunpack.c.l.b16 %v2146
    %v3551 = vunpack.c.l.b16 %v2147
    %v3552 = vpack.c.b16 %v3549, %v3548
    %v3553 = vpack.c.b16 %v3551, %v3550
    %3556 = vmatprep.subr.bf16.mxu0 0
    %3557 = vmatpush1.bf16.msra.mxu0 %v3552
    %3558 = vmatprep.subr.bf16.mxu0 0
    %3559 = vmatpush1.bf16.msra.mxu0 %v3553
    %3560 = vmatprep.subr.bf16.mxu0 0
    %3561 = vmatpush1.bf16.msra.mxu0 0
    %3562 = vmatprep.subr.bf16.mxu0 0
    %3563 = vmatpush1.bf16.msra.mxu0 0
    %3564 = vmatprep.subr.bf16.mxu0 0
    %3565 = vmatpush1.bf16.msra.mxu0 0
    %3566 = vmatprep.subr.bf16.mxu0 0
    %3567 = vmatpush1.bf16.msra.mxu0 0
    %3568 = vmatprep.subr.bf16.mxu0 0
    %3569 = vmatpush1.bf16.msra.mxu0 0
    %3570 = vmatprep.subr.bf16.mxu0 0
    %3571 = vmatpush1.bf16.msra.mxu0 0
    %3572 = vmatprep.subr.bf16.mxu0 0
    %3573 = vmatpush1.bf16.msra.mxu0 0
    %3574 = vmatprep.subr.bf16.mxu0 0
    %3575 = vmatpush1.bf16.msra.mxu0 0
    %3576 = vmatprep.subr.bf16.mxu0 0
    %3577 = vmatpush1.bf16.msra.mxu0 0
    %3578 = vmatprep.subr.bf16.mxu0 0
    %3579 = vmatpush1.bf16.msra.mxu0 0
    %3580 = vmatprep.subr.bf16.mxu0 0
    %3581 = vmatpush1.bf16.msra.mxu0 0
    %3582 = vmatprep.subr.bf16.mxu0 0
    %3583 = vmatpush1.bf16.msra.mxu0 0
    %3584 = vmatprep.subr.bf16.mxu0 0
    %3585 = vmatpush1.bf16.msra.mxu0 0
    %3586 = vmatprep.subr.bf16.mxu0 0
    %3587 = vmatpush1.bf16.msra.mxu0 0
    %3588 = vmatprep.mubr.bf16.mxu0 0
    %3589 = vmatmul.mubr.bf16.gmra.mrb[0].mxu0 %v2230
    %v3590 = vpop.f32.mrb[0].mxu0
    %v3591 = vadd.f32 0.0, %v3590
    %v3592 = vpop.f32.mrb[0].mxu0
    %v3593 = vpop.f32.mrb[0].mxu0
    %v3594 = vadd.f32 0.0, %v3593
    %v3595 = vpop.f32.mrb[0].mxu0
    %3596 = vdwg.mxu0
    %v3601 = vunpack.c.l.b16 %v2161
    %v3602 = vunpack.c.l.b16 %v2162
    %v3603 = vunpack.c.l.b16 %v2163
    %v3604 = vunpack.c.l.b16 %v2164
    %v3605 = vpack.c.b16 %v3602, %v3601
    %v3606 = vpack.c.b16 %v3604, %v3603
    %3609 = vmatprep.subr.bf16.mxu0 0
    %3610 = vmatpush1.bf16.msra.mxu0 %v3605
    %3611 = vmatprep.subr.bf16.mxu0 0
    %3612 = vmatpush1.bf16.msra.mxu0 %v3606
    %3613 = vmatprep.subr.bf16.mxu0 0
    %3614 = vmatpush1.bf16.msra.mxu0 0
    %3615 = vmatprep.subr.bf16.mxu0 0
    %3616 = vmatpush1.bf16.msra.mxu0 0
    %3617 = vmatprep.subr.bf16.mxu0 0
    %3618 = vmatpush1.bf16.msra.mxu0 0
    %3619 = vmatprep.subr.bf16.mxu0 0
    %3620 = vmatpush1.bf16.msra.mxu0 0
    %3621 = vmatprep.subr.bf16.mxu0 0
    %3622 = vmatpush1.bf16.msra.mxu0 0
    %3623 = vmatprep.subr.bf16.mxu0 0
    %3624 = vmatpush1.bf16.msra.mxu0 0
    %3625 = vmatprep.subr.bf16.mxu0 0
    %3626 = vmatpush1.bf16.msra.mxu0 0
    %3627 = vmatprep.subr.bf16.mxu0 0
    %3628 = vmatpush1.bf16.msra.mxu0 0
    %3629 = vmatprep.subr.bf16.mxu0 0
    %3630 = vmatpush1.bf16.msra.mxu0 0
    %3631 = vmatprep.subr.bf16.mxu0 0
    %3632 = vmatpush1.bf16.msra.mxu0 0
    %3633 = vmatprep.subr.bf16.mxu0 0
    %3634 = vmatpush1.bf16.msra.mxu0 0
    %3635 = vmatprep.subr.bf16.mxu0 0
    %3636 = vmatpush1.bf16.msra.mxu0 0
    %3637 = vmatprep.subr.bf16.mxu0 0
    %3638 = vmatpush1.bf16.msra.mxu0 0
    %3639 = vmatprep.subr.bf16.mxu0 0
    %3640 = vmatpush1.bf16.msra.mxu0 0
    %3641 = vmatprep.mubr.bf16.mxu0 0
    %3642 = vmatmul.mubr.bf16.gmra.mrb[0].mxu0 %v2230
    %v3643 = vpop.f32.mrb[0].mxu0
    %v3644 = vadd.f32 0.0, %v3643
    %v3645 = vpop.f32.mrb[0].mxu0
    %v3646 = vpop.f32.mrb[0].mxu0
    %v3647 = vadd.f32 0.0, %v3646
    %v3648 = vpop.f32.mrb[0].mxu0
    %3649 = vdwg.mxu0
    %v3650 = vpack.c.bf16 %v3538, %v3538
    %v3651 = vpack.c.bf16 %v3541, %v3541
    %v3652 = vpack.c.bf16 %v3591, %v3591
    %v3653 = vpack.c.bf16 %v3594, %v3594
    %v3654 = vpack.c.bf16 %v3644, %v3644
    %v3655 = vpack.c.bf16 %v3647, %v3647
    %v3657 = vsel %vm89, %v3650, 0
    %v3660 = vsel %vm89, %v3652, 0
    %3662 = vmatprep.subr.bf16.mxu0 0
    %3663 = vmatpush1.bf16.xpose.msra.mxu0 %v3660
    %3664 = vmatprep.subr.bf16.mxu0 0
    %3665 = vmatpush1.bf16.xpose.msra.mxu0 0
    %3666 = vmatprep.subr.bf16.mxu0 0
    %3667 = vmatpush1.bf16.xpose.msra.mxu0 0
    %3668 = vmatprep.subr.bf16.mxu0 0
    %3669 = vmatpush1.bf16.xpose.msra.mxu0 0
    %3670 = vmatprep.subr.bf16.mxu0 0
    %3671 = vmatpush1.bf16.xpose.msra.mxu0 0
    %3672 = vmatprep.subr.bf16.mxu0 0
    %3673 = vmatpush1.bf16.xpose.msra.mxu0 0
    %3674 = vmatprep.subr.bf16.mxu0 0
    %3675 = vmatpush1.bf16.xpose.msra.mxu0 0
    %3676 = vmatprep.subr.bf16.mxu0 0
    %3677 = vmatpush1.bf16.xpose.msra.mxu0 0
    %3678 = vmatprep.subr.bf16.mxu0 0
    %3679 = vmatpush1.bf16.xpose.msra.mxu0 0
    %3680 = vmatprep.subr.bf16.mxu0 0
    %3681 = vmatpush1.bf16.xpose.msra.mxu0 0
    %3682 = vmatprep.subr.bf16.mxu0 0
    %3683 = vmatpush1.bf16.xpose.msra.mxu0 0
    %3684 = vmatprep.subr.bf16.mxu0 0
    %3685 = vmatpush1.bf16.xpose.msra.mxu0 0
    %3686 = vmatprep.subr.bf16.mxu0 0
    %3687 = vmatpush1.bf16.xpose.msra.mxu0 0
    %3688 = vmatprep.subr.bf16.mxu0 0
    %3689 = vmatpush1.bf16.xpose.msra.mxu0 0
    %3690 = vmatprep.subr.bf16.mxu0 0
    %3691 = vmatpush1.bf16.xpose.msra.mxu0 0
    %3692 = vmatprep.subr.bf16.mxu0 0
    %3693 = vmatpush1.bf16.xpose.msra.mxu0 0
    %3694 = vmatprep.mubr.bf16.mxu0 0
    %3695 = vmatmul.mubr.bf16.gmra.mrb[0].mxu0 %v3657
    %v3696 = vpop.f32.mrb[0].mxu0
    %v3697 = vadd.f32 %v109, %v3696
    %v3698 = vpop.f32.mrb[0].mxu0
    %v3699 = vpop.f32.mrb[0].mxu0
    %v3700 = vpop.f32.mrb[0].mxu0
    %3701 = vdwg.mxu0
    %v3703 = vsel %vm89, %v3651, 0
    %v3706 = vsel %vm89, %v3653, 0
    %3708 = vmatprep.subr.bf16.mxu0 0
    %3709 = vmatpush1.bf16.xpose.msra.mxu0 %v3706
    %3710 = vmatprep.subr.bf16.mxu0 0
    %3711 = vmatpush1.bf16.xpose.msra.mxu0 0
    %3712 = vmatprep.subr.bf16.mxu0 0
    %3713 = vmatpush1.bf16.xpose.msra.mxu0 0
    %3714 = vmatprep.subr.bf16.mxu0 0
    %3715 = vmatpush1.bf16.xpose.msra.mxu0 0
    %3716 = vmatprep.subr.bf16.mxu0 0
    %3717 = vmatpush1.bf16.xpose.msra.mxu0 0
    %3718 = vmatprep.subr.bf16.mxu0 0
    %3719 = vmatpush1.bf16.xpose.msra.mxu0 0
    %3720 = vmatprep.subr.bf16.mxu0 0
    %3721 = vmatpush1.bf16.xpose.msra.mxu0 0
    %3722 = vmatprep.subr.bf16.mxu0 0
    %3723 = vmatpush1.bf16.xpose.msra.mxu0 0
    %3724 = vmatprep.subr.bf16.mxu0 0
    %3725 = vmatpush1.bf16.xpose.msra.mxu0 0
    %3726 = vmatprep.subr.bf16.mxu0 0
    %3727 = vmatpush1.bf16.xpose.msra.mxu0 0
    %3728 = vmatprep.subr.bf16.mxu0 0
    %3729 = vmatpush1.bf16.xpose.msra.mxu0 0
    %3730 = vmatprep.subr.bf16.mxu0 0
    %3731 = vmatpush1.bf16.xpose.msra.mxu0 0
    %3732 = vmatprep.subr.bf16.mxu0 0
    %3733 = vmatpush1.bf16.xpose.msra.mxu0 0
    %3734 = vmatprep.subr.bf16.mxu0 0
    %3735 = vmatpush1.bf16.xpose.msra.mxu0 0
    %3736 = vmatprep.subr.bf16.mxu0 0
    %3737 = vmatpush1.bf16.xpose.msra.mxu0 0
    %3738 = vmatprep.subr.bf16.mxu0 0
    %3739 = vmatpush1.bf16.xpose.msra.mxu0 0
    %3740 = vmatprep.mubr.bf16.mxu0 0
    %3741 = vmatmul.mubr.bf16.gmra.mrb[0].mxu0 %v3703
    %v3742 = vpop.f32.mrb[0].mxu0
    %v3743 = vadd.f32 %v111, %v3742
    %v3744 = vpop.f32.mrb[0].mxu0
    %v3745 = vpop.f32.mrb[0].mxu0
    %v3746 = vpop.f32.mrb[0].mxu0
    %3747 = vdwg.mxu0
    %v3748 = vsel %vm83, -1e+09, %v3697
    %v3749 = vsel %vm84, -1e+09, %v3743
    %v3750 = vsel %vm89, %v3748, -inf
    %3751 = vmax.xlane.f32.xlu0 %v3750
    %v3752 = vpop.xlane.xlu0 %3751
    %v3753 = vsel %vm89, %v3749, -inf
    %3754 = vmax.xlane.f32.xlu0 %v3753
    %v3755 = vpop.xlane.xlu0 %3754
    %v3756 = vsub.f32 %v3748, %v3752
    %v3757 = vsub.f32 %v3749, %v3755
    %v3758 = vmul.f32 %v3756, 1.442695
    %v3759 = vpow.pop %v3758
    %v3760 = vmul.f32 %v3757, 1.442695
    %v3761 = vpow.pop %v3760
    %v3762 = vsel %vm89, %v3759, 0.0
    %3763 = vadd.xlane.f32.xlu0 %v3762
    %v3764 = vpop.xlane.xlu0 %3763
    %v3765 = vsel %vm89, %v3761, 0.0
    %3766 = vadd.xlane.f32.xlu0 %v3765
    %v3767 = vpop.xlane.xlu0 %3766
    %v3768 = vrcp.pop %v3764
    %v3769 = vmul.f32 %v3759, %v3768
    %v3770 = vrcp.pop %v3767
    %v3771 = vmul.f32 %v3761, %v3770
    %v3772 = vpack.c.bf16 %v3769, %v3769
    %v3773 = vpack.c.bf16 %v3771, %v3771
    %v3775 = vsel %vm89, %v3772, 0
    %v3778 = vsel %vm500, %v3654, 0
    %3780 = vmatprep.subr.bf16.mxu0 0
    %3781 = vmatpush1.bf16.msra.mxu0 %v3778
    %3782 = vmatprep.subr.bf16.mxu0 0
    %3783 = vmatpush1.bf16.msra.mxu0 0
    %3784 = vmatprep.subr.bf16.mxu0 0
    %3785 = vmatpush1.bf16.msra.mxu0 0
    %3786 = vmatprep.subr.bf16.mxu0 0
    %3787 = vmatpush1.bf16.msra.mxu0 0
    %3788 = vmatprep.subr.bf16.mxu0 0
    %3789 = vmatpush1.bf16.msra.mxu0 0
    %3790 = vmatprep.subr.bf16.mxu0 0
    %3791 = vmatpush1.bf16.msra.mxu0 0
    %3792 = vmatprep.subr.bf16.mxu0 0
    %3793 = vmatpush1.bf16.msra.mxu0 0
    %3794 = vmatprep.subr.bf16.mxu0 0
    %3795 = vmatpush1.bf16.msra.mxu0 0
    %3796 = vmatprep.subr.bf16.mxu0 0
    %3797 = vmatpush1.bf16.msra.mxu0 0
    %3798 = vmatprep.subr.bf16.mxu0 0
    %3799 = vmatpush1.bf16.msra.mxu0 0
    %3800 = vmatprep.subr.bf16.mxu0 0
    %3801 = vmatpush1.bf16.msra.mxu0 0
    %3802 = vmatprep.subr.bf16.mxu0 0
    %3803 = vmatpush1.bf16.msra.mxu0 0
    %3804 = vmatprep.subr.bf16.mxu0 0
    %3805 = vmatpush1.bf16.msra.mxu0 0
    %3806 = vmatprep.subr.bf16.mxu0 0
    %3807 = vmatpush1.bf16.msra.mxu0 0
    %3808 = vmatprep.subr.bf16.mxu0 0
    %3809 = vmatpush1.bf16.msra.mxu0 0
    %3810 = vmatprep.subr.bf16.mxu0 0
    %3811 = vmatpush1.bf16.msra.mxu0 0
    %3812 = vmatprep.mubr.bf16.mxu0 0
    %3813 = vmatmul.mubr.bf16.gmra.mrb[0].mxu0 %v3775
    %v3814 = vpop.f32.mrb[0].mxu0
    %v3815 = vadd.f32 0.0, %v3814
    %v3816 = vpop.f32.mrb[0].mxu0
    %v3817 = vpop.f32.mrb[0].mxu0
    %v3818 = vpop.f32.mrb[0].mxu0
    %3819 = vdwg.mxu0
    %v3821 = vsel %vm89, %v3773, 0
    %v3824 = vsel %vm500, %v3655, 0
    %3826 = vmatprep.subr.bf16.mxu0 0
    %3827 = vmatpush1.bf16.msra.mxu0 %v3824
    %3828 = vmatprep.subr.bf16.mxu0 0
    %3829 = vmatpush1.bf16.msra.mxu0 0
    %3830 = vmatprep.subr.bf16.mxu0 0
    %3831 = vmatpush1.bf16.msra.mxu0 0
    %3832 = vmatprep.subr.bf16.mxu0 0
    %3833 = vmatpush1.bf16.msra.mxu0 0
    %3834 = vmatprep.subr.bf16.mxu0 0
    %3835 = vmatpush1.bf16.msra.mxu0 0
    %3836 = vmatprep.subr.bf16.mxu0 0
    %3837 = vmatpush1.bf16.msra.mxu0 0
    %3838 = vmatprep.subr.bf16.mxu0 0
    %3839 = vmatpush1.bf16.msra.mxu0 0
    %3840 = vmatprep.subr.bf16.mxu0 0
    %3841 = vmatpush1.bf16.msra.mxu0 0
    %3842 = vmatprep.subr.bf16.mxu0 0
    %3843 = vmatpush1.bf16.msra.mxu0 0
    %3844 = vmatprep.subr.bf16.mxu0 0
    %3845 = vmatpush1.bf16.msra.mxu0 0
    %3846 = vmatprep.subr.bf16.mxu0 0
    %3847 = vmatpush1.bf16.msra.mxu0 0
    %3848 = vmatprep.subr.bf16.mxu0 0
    %3849 = vmatpush1.bf16.msra.mxu0 0
    %3850 = vmatprep.subr.bf16.mxu0 0
    %3851 = vmatpush1.bf16.msra.mxu0 0
    %3852 = vmatprep.subr.bf16.mxu0 0
    %3853 = vmatpush1.bf16.msra.mxu0 0
    %3854 = vmatprep.subr.bf16.mxu0 0
    %3855 = vmatpush1.bf16.msra.mxu0 0
    %3856 = vmatprep.subr.bf16.mxu0 0
    %3857 = vmatpush1.bf16.msra.mxu0 0
    %3858 = vmatprep.mubr.bf16.mxu0 0
    %3859 = vmatmul.mubr.bf16.gmra.mrb[0].mxu0 %v3821
    %v3860 = vpop.f32.mrb[0].mxu0
    %v3861 = vadd.f32 0.0, %v3860
    %v3862 = vpop.f32.mrb[0].mxu0
    %v3863 = vpop.f32.mrb[0].mxu0
    %v3864 = vpop.f32.mrb[0].mxu0
    %3865 = vdwg.mxu0
    %v3866 = vpack.c.bf16 %v3861, %v3815
    %v3868 = vsel %vm89, %v3866, 0
    %v3871 = vsel %vm500, %v2169, 0
    %3873 = vmatprep.subr.bf16.mxu0 0
    %3874 = vmatpush1.bf16.msra.mxu0 %v3871
    %3875 = vmatprep.subr.bf16.mxu0 0
    %3876 = vmatpush1.bf16.msra.mxu0 0
    %3877 = vmatprep.subr.bf16.mxu0 0
    %3878 = vmatpush1.bf16.msra.mxu0 0
    %3879 = vmatprep.subr.bf16.mxu0 0
    %3880 = vmatpush1.bf16.msra.mxu0 0
    %3881 = vmatprep.subr.bf16.mxu0 0
    %3882 = vmatpush1.bf16.msra.mxu0 0
    %3883 = vmatprep.subr.bf16.mxu0 0
    %3884 = vmatpush1.bf16.msra.mxu0 0
    %3885 = vmatprep.subr.bf16.mxu0 0
    %3886 = vmatpush1.bf16.msra.mxu0 0
    %3887 = vmatprep.subr.bf16.mxu0 0
    %3888 = vmatpush1.bf16.msra.mxu0 0
    %3889 = vmatprep.subr.bf16.mxu0 0
    %3890 = vmatpush1.bf16.msra.mxu0 0
    %3891 = vmatprep.subr.bf16.mxu0 0
    %3892 = vmatpush1.bf16.msra.mxu0 0
    %3893 = vmatprep.subr.bf16.mxu0 0
    %3894 = vmatpush1.bf16.msra.mxu0 0
    %3895 = vmatprep.subr.bf16.mxu0 0
    %3896 = vmatpush1.bf16.msra.mxu0 0
    %3897 = vmatprep.subr.bf16.mxu0 0
    %3898 = vmatpush1.bf16.msra.mxu0 0
    %3899 = vmatprep.subr.bf16.mxu0 0
    %3900 = vmatpush1.bf16.msra.mxu0 0
    %3901 = vmatprep.subr.bf16.mxu0 0
    %3902 = vmatpush1.bf16.msra.mxu0 0
    %3903 = vmatprep.subr.bf16.mxu0 0
    %3904 = vmatpush1.bf16.msra.mxu0 0
    %3905 = vmatprep.mubr.bf16.mxu0 0
    %3906 = vmatmul.mubr.bf16.gmra.mrb[0].mxu0 %v3868
    %v3907 = vpop.f32.mrb[0].mxu0
    %v3908 = vadd.f32 0.0, %v3907
    %v3909 = vpop.f32.mrb[0].mxu0
    %v3910 = vpop.f32.mrb[0].mxu0
    %v3911 = vadd.f32 0.0, %v3910
    %v3912 = vpop.f32.mrb[0].mxu0
    %3913 = vdwg.mxu0
    %v3914 = vadd.f32 %v3489, %v3908
    %v3915 = vadd.f32 %v3490, %v3911
    %v3916 = vadd.f32 %v2112, %v3914
    %v3917 = vadd.f32 %v2113, %v3915
    %s3918 = scalar_lea.vmem %s9, 1
    %v3919 = vld [vmem:[%s3918] sm:$0x1]
    %s3920 = scalar_lea.vmem %s10, 1
    %v3921 = vld [vmem:[%s3920] sm:$0x1]
    %v3922 = vsel %vm166, %v3916, 0.0
    %3923 = vadd.xlane.f32.xlu0 %v3922
    %v3924 = vpop.xlane.xlu0 %3923
    %v3925 = vsel %vm166, %v3917, 0.0
    %3926 = vadd.xlane.f32.xlu0 %v3925
    %v3927 = vpop.xlane.xlu0 %3926
    %v3928 = vmul.f32 %v3924, %v173
    %v3929 = vmul.f32 %v3927, %v173
    %v3930 = vsub.f32 %v3916, %v3928
    %v3931 = vsub.f32 %v3917, %v3929
    %v3932 = vmul.f32 %v3930, %v3930
    %v3933 = vmul.f32 %v3931, %v3931
    %v3934 = vsel %vm166, %v3932, 0.0
    %3935 = vadd.xlane.f32.xlu0 %v3934
    %v3936 = vpop.xlane.xlu0 %3935
    %v3937 = vsel %vm166, %v3933, 0.0
    %3938 = vadd.xlane.f32.xlu0 %v3937
    %v3939 = vpop.xlane.xlu0 %3938
    %v3940 = vmul.f32 %v3936, %v173
    %v3941 = vmul.f32 %v3939, %v173
    %v3942 = vadd.f32 %v3940, 1e-05
    %v3943 = vadd.f32 %v3941, 1e-05
    %v3944 = vrsqrt.pop %v3942
    %v3945 = vrsqrt.pop %v3943
    %v3946 = vmul.f32 %v3930, %v3944
    %v3947 = vmul.f32 %v3931, %v3945
    %v3949 = vlaneseq
    %v3950 = vshrl.u32 %v3949, 7
    %v3951 = vsub.s32 0, %v3950
    %v3952 = vrot.slane %v3919, %v3951
    %v3954 = vmul.f32 %v3946, %v3952
    %v3955 = vmul.f32 %v3947, %v3952
    %v3957 = vlaneseq
    %v3958 = vshrl.u32 %v3957, 7
    %v3959 = vsub.s32 0, %v3958
    %v3960 = vrot.slane %v3921, %v3959
    %v3962 = vadd.f32 %v3954, %v3960
    %v3963 = vadd.f32 %v3955, %v3960
    %v3964 = vpack.c.bf16 %v3963, %v3962
    %s3965 = scalar_lea.vmem %s11, 16
    %v3966 = vld [vmem:[%s3965] sm:$0xf]
    %v3967 = vld [vmem:[%s3965 + $0x4] sm:$0xf]
    %v3968 = vld [vmem:[%s3965 + $0x8] sm:$0xf]
    %v3969 = vld [vmem:[%s3965 + $0xc] sm:$0xf]
    %s3970 = scalar_lea.vmem %s12, 1
    %v3971 = vld [vmem:[%s3970] sm:$0x1]
    %v3973 = vlaneseq
    %v3974 = vshrl.u32 %v3973, 7
    %v3975 = vsub.s32 0, %v3974
    %v3976 = vrot.slane %v3971, %v3975
    %v3982 = vunpack.c.l.b16 %v3966
    %v3983 = vunpack.c.l.b16 %v3967
    %v3984 = vunpack.c.l.b16 %v3968
    %v3985 = vunpack.c.l.b16 %v3969
    %v3986 = vpack.c.b16 %v3983, %v3982
    %v3987 = vpack.c.b16 %v3985, %v3984
    %v3991 = vsel %vm166, %v3964, 0
    %3993 = vmatprep.subr.bf16.mxu0 0
    %3994 = vmatpush1.bf16.msra.mxu0 %v3986
    %3995 = vmatprep.subr.bf16.mxu0 0
    %3996 = vmatpush1.bf16.msra.mxu0 %v3987
    %3997 = vmatprep.subr.bf16.mxu0 0
    %3998 = vmatpush1.bf16.msra.mxu0 0
    %3999 = vmatprep.subr.bf16.mxu0 0
    %4000 = vmatpush1.bf16.msra.mxu0 0
    %4001 = vmatprep.subr.bf16.mxu0 0
    %4002 = vmatpush1.bf16.msra.mxu0 0
    %4003 = vmatprep.subr.bf16.mxu0 0
    %4004 = vmatpush1.bf16.msra.mxu0 0
    %4005 = vmatprep.subr.bf16.mxu0 0
    %4006 = vmatpush1.bf16.msra.mxu0 0
    %4007 = vmatprep.subr.bf16.mxu0 0
    %4008 = vmatpush1.bf16.msra.mxu0 0
    %4009 = vmatprep.subr.bf16.mxu0 0
    %4010 = vmatpush1.bf16.msra.mxu0 0
    %4011 = vmatprep.subr.bf16.mxu0 0
    %4012 = vmatpush1.bf16.msra.mxu0 0
    %4013 = vmatprep.subr.bf16.mxu0 0
    %4014 = vmatpush1.bf16.msra.mxu0 0
    %4015 = vmatprep.subr.bf16.mxu0 0
    %4016 = vmatpush1.bf16.msra.mxu0 0
    %4017 = vmatprep.subr.bf16.mxu0 0
    %4018 = vmatpush1.bf16.msra.mxu0 0
    %4019 = vmatprep.subr.bf16.mxu0 0
    %4020 = vmatpush1.bf16.msra.mxu0 0
    %4021 = vmatprep.subr.bf16.mxu0 0
    %4022 = vmatpush1.bf16.msra.mxu0 0
    %4023 = vmatprep.subr.bf16.mxu0 0
    %4024 = vmatpush1.bf16.msra.mxu0 0
    %4025 = vmatprep.mubr.bf16.mxu0 0
    %4026 = vmatmul.mubr.bf16.gmra.mrb[0].mxu0 %v3991
    %v4027 = vpop.f32.mrb[0].mxu0
    %v4028 = vadd.f32 %v3976, %v4027
    %v4029 = vpop.f32.mrb[0].mxu0
    %v4030 = vpop.f32.mrb[0].mxu0
    %v4031 = vadd.f32 %v3976, %v4030
    %v4032 = vpop.f32.mrb[0].mxu0
    %4033 = vdwg.mxu0
    %v4034 = vmax.f32 %v4028, 0.0
    %v4035 = vmax.f32 %v4031, 0.0
    %v4036 = vpack.c.bf16 %v4035, %v4034
    %s4037 = scalar_lea.vmem %s13, 32
    %v4038 = vld [vmem:[%s4037] sm:$0xf]
    %v4039 = vld [vmem:[%s4037 + $0x4] sm:$0xf]
    %v4040 = vld [vmem:[%s4037 + $0x8] sm:$0xf]
    %v4041 = vld [vmem:[%s4037 + $0xc] sm:$0xf]
    %v4042 = vld [vmem:[%s4037 + $0x10] sm:$0xf]
    %v4043 = vld [vmem:[%s4037 + $0x14] sm:$0xf]
    %v4044 = vld [vmem:[%s4037 + $0x18] sm:$0xf]
    %v4045 = vld [vmem:[%s4037 + $0x1c] sm:$0xf]
    %s4046 = scalar_lea.vmem %s14, 1
    %v4047 = vld [vmem:[%s4046] sm:$0x1]
    %v4049 = vlaneseq
    %v4050 = vshrl.u32 %v4049, 7
    %v4051 = vsub.s32 0, %v4050
    %v4052 = vrot.slane %v4047, %v4051
    %v4062 = vunpack.c.l.b16 %v4038
    %v4063 = vunpack.c.l.b16 %v4039
    %v4064 = vunpack.c.l.b16 %v4040
    %v4065 = vunpack.c.l.b16 %v4041
    %v4066 = vunpack.c.l.b16 %v4042
    %v4067 = vunpack.c.l.b16 %v4043
    %v4068 = vunpack.c.l.b16 %v4044
    %v4069 = vunpack.c.l.b16 %v4045
    %v4070 = vpack.c.b16 %v4063, %v4062
    %v4071 = vpack.c.b16 %v4065, %v4064
    %v4072 = vpack.c.b16 %v4067, %v4066
    %v4073 = vpack.c.b16 %v4069, %v4068
    %v4079 = vsel %vm2067, %v4036, 0
    %4081 = vmatprep.subr.bf16.mxu0 0
    %4082 = vmatpush1.bf16.msra.mxu0 %v4070
    %4083 = vmatprep.subr.bf16.mxu0 0
    %4084 = vmatpush1.bf16.msra.mxu0 %v4071
    %4085 = vmatprep.subr.bf16.mxu0 0
    %4086 = vmatpush1.bf16.msra.mxu0 %v4072
    %4087 = vmatprep.subr.bf16.mxu0 0
    %4088 = vmatpush1.bf16.msra.mxu0 %v4073
    %4089 = vmatprep.subr.bf16.mxu0 0
    %4090 = vmatpush1.bf16.msra.mxu0 0
    %4091 = vmatprep.subr.bf16.mxu0 0
    %4092 = vmatpush1.bf16.msra.mxu0 0
    %4093 = vmatprep.subr.bf16.mxu0 0
    %4094 = vmatpush1.bf16.msra.mxu0 0
    %4095 = vmatprep.subr.bf16.mxu0 0
    %4096 = vmatpush1.bf16.msra.mxu0 0
    %4097 = vmatprep.subr.bf16.mxu0 0
    %4098 = vmatpush1.bf16.msra.mxu0 0
    %4099 = vmatprep.subr.bf16.mxu0 0
    %4100 = vmatpush1.bf16.msra.mxu0 0
    %4101 = vmatprep.subr.bf16.mxu0 0
    %4102 = vmatpush1.bf16.msra.mxu0 0
    %4103 = vmatprep.subr.bf16.mxu0 0
    %4104 = vmatpush1.bf16.msra.mxu0 0
    %4105 = vmatprep.subr.bf16.mxu0 0
    %4106 = vmatpush1.bf16.msra.mxu0 0
    %4107 = vmatprep.subr.bf16.mxu0 0
    %4108 = vmatpush1.bf16.msra.mxu0 0
    %4109 = vmatprep.subr.bf16.mxu0 0
    %4110 = vmatpush1.bf16.msra.mxu0 0
    %4111 = vmatprep.subr.bf16.mxu0 0
    %4112 = vmatpush1.bf16.msra.mxu0 0
    %4113 = vmatprep.mubr.bf16.mxu0 0
    %4114 = vmatmul.mubr.bf16.gmra.mrb[0].mxu0 %v4079
    %v4115 = vpop.f32.mrb[0].mxu0
    %v4116 = vadd.f32 %v4052, %v4115
    %v4117 = vpop.f32.mrb[0].mxu0
    %v4118 = vpop.f32.mrb[0].mxu0
    %v4119 = vadd.f32 %v4052, %v4118
    %v4120 = vpop.f32.mrb[0].mxu0
    %4121 = vdwg.mxu0
    %v4122 = vadd.f32 %v3916, %v4116
    %v4123 = vadd.f32 %v3917, %v4119
    %v4124 = vsel %vm166, %v4122, 0.0
    %v4125 = vrot.slane %v4124, 4
    %v4126 = vadd.f32 %v4124, %v4125
    %v4127 = vrot.slane %v4126, 2
    %v4128 = vadd.f32 %v4126, %v4127
    %v4129 = vrot.slane %v4128, 1
    %v4130 = vadd.f32 %v4128, %v4129
    %v4131 = vsel %vm166, %v4123, 0.0
    %v4132 = vrot.slane %v4131, 4
    %v4133 = vadd.f32 %v4131, %v4132
    %v4134 = vrot.slane %v4133, 2
    %v4135 = vadd.f32 %v4133, %v4134
    %v4136 = vrot.slane %v4135, 1
    %v4137 = vadd.f32 %v4135, %v4136
    %v4138 = vrcp.pop 8.0
    %v4139 = vmul.f32 %v4130, %v4138
    %v4140 = vmul.f32 %v4137, %v4138
    %v4141 = vld [vmem:[%s15] sm:$0x1]
    %v4142 = vld [vmem:[%s16] sm:$0x1]
    %vm4145 = vcmask 1041409
    %v4146 = vsel %vm4145, %v4140, %v4139
    %vm4148 = vcmask 254976
    %v4149 = vsel %vm4148, %v4146, 0.0
    %4150 = vadd.xlane.f32.xlu0 %v4149
    %v4151 = vpop.xlane.xlu0 %4150
    %v4152 = vmul.f32 %v4151, %v173
    %v4154 = vrot.slane %v4152, 1
    %v4157 = vsub.f32 %v4139, %v4152
    %v4158 = vsub.f32 %v4140, %v4154
    %v4159 = vmul.f32 %v4157, %v4157
    %v4160 = vmul.f32 %v4158, %v4158
    %v4163 = vrot.slane %v4160, 7
    %v4164 = vsel %vm4145, %v4163, %v4159
    %v4166 = vsel %vm4148, %v4164, 0.0
    %4167 = vadd.xlane.f32.xlu0 %v4166
    %v4168 = vpop.xlane.xlu0 %4167
    %v4169 = vmul.f32 %v4168, %v173
    %v4170 = vadd.f32 %v4169, 1e-05
    %v4171 = vrsqrt.pop %v4170
    %v4173 = vrot.slane %v4171, 1
    %v4176 = vmul.f32 %v4157, %v4171
    %v4177 = vmul.f32 %v4158, %v4173
    %v4179 = vlaneseq
    %v4180 = vshrl.u32 %v4179, 7
    %v4181 = vsub.s32 0, %v4180
    %v4182 = vrot.slane %v4141, %v4181
    %v4184 = vmul.f32 %v4176, %v4182
    %v4185 = vmul.f32 %v4177, %v4182
    %v4187 = vlaneseq
    %v4188 = vshrl.u32 %v4187, 7
    %v4189 = vsub.s32 0, %v4188
    %v4190 = vrot.slane %v4142, %v4189
    %v4192 = vadd.f32 %v4184, %v4190
    %v4193 = vadd.f32 %v4185, %v4190
    %vm4194 = vcmask 253952
    %4195 = vst.msk [vmem:[#allocation2] sm:$0x1] %vm4194, %v4192
    %4196 = vst.msk [vmem:[#allocation2 + $0x1] sm:$0x1] %vm4194, %v4193
    // Predicated region
    $region70: #{tpu_custom_call.1} parent=1 // pred_check
      _
    $region71: #{tpu_custom_call.1} parent=1 // pred_check_branch
      %4198 = sbr.rel (0) target = $region73
    $region72: #{tpu_custom_call.1} parent=1 // pred_region
      %s4200 = ssub.s32 32, 32
      %4201 = vsyncadd [#allocation3], %s4200
      %s4202 = sshll.u32 [#allocation2], 4
      %s4203 = int_to_ptr.vmem [resolvable:$true] %s4202
      %4208 = dma.vmem_to_hbm [thread:$0]  %s4203, 32, %s17, [#allocation3], 16, 16, 1
    $region73: #{tpu_custom_call.1} parent=1 // pred_fallthru
      _
    // Predicated region
    $region74: #{tpu_custom_call.1} parent=1 // pred_check
      _
    $region75: #{tpu_custom_call.1} parent=1 // pred_check_branch
      %4210 = sbr.rel (0) target = $region77
    $region76: #{tpu_custom_call.1} parent=1 // pred_region
      %4211 = dma.done [#allocation3], 32
    $region77: #{tpu_custom_call.1} parent=1 // pred_fallthru
      _
    %4212 = vsyncpa [#allocation3], 1

</llo_original>
